<compile_context>
chip_gen: v7x
topology: tpu7x:2x2x1
jax: 0.10.0
libtpu: 0.0.40
codegen_flags: <defaults>
</compile_context>

<pallas_src>
import functools

import jax
import jax.numpy as jnp
from jax.experimental import pallas as pl
from jax.experimental.pallas import tpu as pltpu


def _simple_rnn_kernel(x_ref,
                       wih0_ref, whh0_ref, b0_ref, bn0_ref,
                       a1_ref, b1m_ref, whh1_ref, b1_ref, bn1_ref,
                       fcw_ref, fcb_ref,
                       out_ref,
                       seq_ref,
                       *, T, BP, H):
    f32 = jnp.float32
    H2, H4, H6 = 2 * H, 4 * H, 6 * H

    def cell(gx_t, h, whh, bn):
        # gx_t: hoisted input projection for this step, both directions, gate-major.
        # h:    [hf | hb] combined state (BP, 2H).
        gh = jnp.dot(h, whh, preferred_element_type=f32)            # (BP, 6H), 1 matmul
        rz = jax.nn.sigmoid(gx_t[:, 0:H4] + gh[:, 0:H4])            # fused r|z, both dirs
        r = rz[:, 0:H2]
        z = rz[:, H2:H4]
        n = jnp.tanh(gx_t[:, H4:H6] + r * (gh[:, H4:H6] + bn))
        return (1.0 - z) * n + z * h

    # ---------------- layer 0: hoisted input projection ----------------
    # x_ref rows are [x(t) | x(T-1-t)] so one matmul yields fwd AND (time-reversed)
    # bwd gate inputs; b_ih + b_hh[r,z] are folded into b0.
    gx0 = (jnp.dot(x_ref[...], wih0_ref[...], preferred_element_type=f32)
           + b0_ref[...]).reshape(T, BP, H6)
    whh0 = whh0_ref[...]
    bn0 = jnp.broadcast_to(bn0_ref[...], (BP, H2))      # hoisted broadcast

    h = jnp.zeros((BP, H2), f32)
    for t in range(T):                                   # fully unrolled (T static)
        h = cell(gx0[t], h, whh0, bn0)
        seq_ref[t] = h                                   # [hf(t) | hb(T-1-t)], 1 aligned store

    # ---------------- layer 1: hoisted input projections ----------------
    # gx1(t) = seq[t] @ A + seq[T-1-t] @ B (+ bias); A/B rows were permuted at
    # pack time so no concat / lane shuffle is needed in-kernel.
    s = seq_ref[...].reshape(T * BP, H2)
    p = (jnp.dot(s, a1_ref[...], preferred_element_type=f32)
         + b1_ref[...]).reshape(T, BP, H6)
    q = jnp.dot(s, b1m_ref[...], preferred_element_type=f32).reshape(T, BP, H6)
    whh1 = whh1_ref[...]
    bn1 = jnp.broadcast_to(bn1_ref[...], (BP, H2))

    h = jnp.zeros((BP, H2), f32)
    for t in range(T):
        h = cell(p[t] + q[T - 1 - t], h, whh1, bn1)

    # ---------------- fc head ----------------
    # Final state is already [hf_final | hb_final] == torch.cat((forward, backward)).
    out_ref[...] = (jnp.dot(h, fcw_ref[...], preferred_element_type=f32)
                    + fcb_ref[...])


# --------------------------- weight packing ---------------------------
# Combined column layout (gate-major, interleaved directions), each block H wide:
#   [ r_f | r_b | z_f | z_b | n_f | n_b ]
# Combined row layout for recurrent weights / states: rows 0:H = fwd, H:2H = bwd.

def _gate_slices(g, H):
    cf = slice(2 * g * H, 2 * g * H + H)          # fwd gate g columns
    cb = slice(2 * g * H + H, 2 * (g + 1) * H)    # bwd gate g columns
    return cf, cb


def _pack_layer0(params, H):
    D = params["wih0f"].shape[1]
    wih = jnp.zeros((2 * D, 6 * H), jnp.float32)
    whh = jnp.zeros((2 * H, 6 * H), jnp.float32)
    b = jnp.zeros((1, 6 * H), jnp.float32)
    for g in range(3):
        cf, cb = _gate_slices(g, H)
        wih = wih.at[0:D, cf].set(params["wih0f"][g])        # fwd gates read x(t)
        wih = wih.at[D:2 * D, cb].set(params["wih0b"][g])    # bwd gates read x(T-1-t)
        whh = whh.at[0:H, cf].set(params["whh0f"][g])
        whh = whh.at[H:2 * H, cb].set(params["whh0b"][g])
        bf = params["bih0f"][g] + (params["bhh0f"][g] if g < 2 else 0.0)
        bb = params["bih0b"][g] + (params["bhh0b"][g] if g < 2 else 0.0)
        b = b.at[:, cf].set(bf)
        b = b.at[:, cb].set(bb)
    bn = jnp.concatenate([params["bhh0f"][2], params["bhh0b"][2]], axis=-1)  # (1, 2H)
    return wih, whh, b, bn


def _pack_layer1(params, H):
    # seq[t] = [hf0(t) | hb0(T-1-t)].  Layer-1 fwd step t needs s(t)=[hf0(t)|hb0(t)],
    # bwd step t needs s(T-1-t).  A multiplies seq[t], B multiplies seq[T-1-t];
    # the permutation is absorbed into which rows of A/B carry which weight half.
    A = jnp.zeros((2 * H, 6 * H), jnp.float32)
    Bm = jnp.zeros((2 * H, 6 * H), jnp.float32)
    whh = jnp.zeros((2 * H, 6 * H), jnp.float32)
    b = jnp.zeros((1, 6 * H), jnp.float32)
    wf, wb = params["wih1f"], params["wih1b"]     # (3, 2H, H)
    for g in range(3):
        cf, cb = _gate_slices(g, H)
        A = A.at[0:H, cf].set(wf[g][0:H, :])            # hf0(t)      -> fwd gate
        Bm = Bm.at[H:2 * H, cf].set(wf[g][H:2 * H, :])  # hb0(t)      -> fwd gate
        Bm = Bm.at[0:H, cb].set(wb[g][0:H, :])          # hf0(T-1-t)  -> bwd gate
        A = A.at[H:2 * H, cb].set(wb[g][H:2 * H, :])    # hb0(T-1-t)  -> bwd gate
        whh = whh.at[0:H, cf].set(params["whh1f"][g])
        whh = whh.at[H:2 * H, cb].set(params["whh1b"][g])
        bf = params["bih1f"][g] + (params["bhh1f"][g] if g < 2 else 0.0)
        bb = params["bih1b"][g] + (params["bhh1b"][g] if g < 2 else 0.0)
        b = b.at[:, cf].set(bf)
        b = b.at[:, cb].set(bb)
    bn = jnp.concatenate([params["bhh1f"][2], params["bhh1b"][2]], axis=-1)
    return A, Bm, whh, b, bn


def simple_rnn_forward(x, params):
    """x: (B, input_dim, T) float32, exactly like the PyTorch module's input."""
    B, D, T = x.shape
    H = params["wih0f"].shape[2]
    BP = ((B + 7) // 8) * 8                      # pad batch to the 8-sublane tile

    xt = jnp.transpose(x, (2, 0, 1)).astype(jnp.float32)          # (T, B, D)
    if BP != B:
        xt = jnp.pad(xt, ((0, 0), (0, BP - B), (0, 0)))
    # Row t carries [x(t) | x(T-1-t)] so the bwd direction's reversal is free.
    x_comb = jnp.concatenate([xt, xt[::-1]], axis=-1).reshape(T * BP, 2 * D)

    wih0, whh0, b0, bn0 = _pack_layer0(params, H)
    a1, b1m, whh1, b1, bn1 = _pack_layer1(params, H)
    fcw = params["fcw"].astype(jnp.float32)
    fcb = params["fcb"].astype(jnp.float32)

    args = [x_comb, wih0, whh0, b0, bn0, a1, b1m, whh1, b1, bn1, fcw, fcb]

    flops = int(2 * T * BP * (2 * D) * (6 * H)              # layer-0 hoisted proj
                + 2 * 2 * T * BP * (2 * H) * (6 * H)        # layer-1 hoisted proj (A, B)
                + 2 * 2 * T * BP * (2 * H) * (6 * H)        # recurrent matmuls, 2 layers
                + 2 * BP * (2 * H) * 2)                     # fc head
    transcendentals = int(2 * T * BP * 6 * H)
    bytes_accessed = int(sum(a.size * a.dtype.itemsize for a in args) + BP * 2 * 4)

    kernel = functools.partial(_simple_rnn_kernel, T=T, BP=BP, H=H)
    out = pl.pallas_call(
        kernel,
        out_shape=jax.ShapeDtypeStruct((BP, 2), jnp.float32),
        in_specs=[pl.BlockSpec(memory_space=pltpu.MemorySpace.VMEM)] * len(args),
        out_specs=pl.BlockSpec(memory_space=pltpu.MemorySpace.VMEM),
        scratch_shapes=[pltpu.VMEM((T, BP, 2 * H), jnp.float32)],   # layer-0 outputs
        compiler_params=pltpu.CompilerParams(vmem_limit_bytes=32 * 1024 * 1024),
        cost_estimate=pl.CostEstimate(flops=flops,
                                      transcendentals=transcendentals,
                                      bytes_accessed=bytes_accessed),
    )(*args)
    return out[:B]


# --------------------------- reference & test ---------------------------

def _gru_cell_ref(x_t, h, wih, whh, bih, bhh):
    """One PyTorch-semantics GRU cell step (gate order r, z, n)."""
    r = jax.nn.sigmoid(
        jnp.dot(x_t, wih[0]) + bih[0] + jnp.dot(h, whh[0]) + bhh[0])
    z = jax.nn.sigmoid(
        jnp.dot(x_t, wih[1]) + bih[1] + jnp.dot(h, whh[1]) + bhh[1])
    n = jnp.tanh(
        jnp.dot(x_t, wih[2]) + bih[2] + r * (jnp.dot(h, whh[2]) + bhh[2]))
    return (1.0 - z) * n + z * h


def init_params(key, input_dim, hidden_dim):
    """Deterministic synthetic params, matching nn.GRU/nn.Linear shapes."""
    H = hidden_dim
    bound = 1.0 / (H ** 0.5)   # PyTorch GRU default init range
    keys = iter(jax.random.split(key, 20))

    def u(shape):
        return jax.random.uniform(next(keys), shape, jnp.float32, -bound, bound)

    p = {}
    # layer 0 input size = input_dim; layer 1 input size = 2*H (bidirectional)
    for layer, in_dim in ((0, input_dim), (1, 2 * H)):
        for d in ("f", "b"):
            p[f"wih{layer}{d}"] = u((3, in_dim, H))
            p[f"whh{layer}{d}"] = u((3, H, H))
            p[f"bih{layer}{d}"] = u((3, 1, H))
            p[f"bhh{layer}{d}"] = u((3, 1, H))
    p["fcw"] = u((2 * H, 2))   # fc.weight^T
    p["fcb"] = u((1, 2))       # fc.bias
    return p


def reference_forward(x, params):
    """Pure-JAX reference with identical semantics, for verification."""
    B, D, T = x.shape
    H = params["wih0f"].shape[2]
    xs = jnp.transpose(x, (0, 2, 1)).astype(jnp.float32)  # (B, T, D)

    def run(seq, wih, whh, bih, bhh, reverse):
        h = jnp.zeros((B, H), jnp.float32)
        outs = [None] * T
        order = range(T - 1, -1, -1) if reverse else range(T)
        for t in order:
            h = _gru_cell_ref(seq[:, t, :], h, wih, whh, bih, bhh)
            outs[t] = h
        return h, jnp.stack(outs, axis=1)  # final h, (B, T, H)

    _, sf0 = run(xs, params["wih0f"], params["whh0f"], params["bih0f"], params["bhh0f"], False)
    _, sb0 = run(xs, params["wih0b"], params["whh0b"], params["bih0b"], params["bhh0b"], True)
    seq1 = jnp.concatenate([sf0, sb0], axis=-1)
    hf1, _ = run(seq1, params["wih1f"], params["whh1f"], params["bih1f"], params["bhh1f"], False)
    hb1, _ = run(seq1, params["wih1b"], params["whh1b"], params["bih1b"], params["bhh1b"], True)
    hidden = jnp.concatenate([hf1, hb1], axis=-1)
    return hidden @ params["fcw"] + params["fcb"]


if __name__ == "__main__":
    B, D, T, H = 2, 4, 8, 64   # hidden_dim=64 is the module default; 2H = 128 lanes
    key = jax.random.PRNGKey(0)
    kx, kp = jax.random.split(key)
    x = jax.random.normal(kx, (B, D, T), jnp.float32)   # PyTorch-style (N, C, T)
    params = init_params(kp, D, H)

    out = jax.block_until_ready(simple_rnn_forward(x, params))
    assert out.shape == (B, 2), out.shape

    ref = reference_forward(x, params)
    if not jnp.allclose(out, ref, atol=1e-4, rtol=1e-4):
        raise AssertionError(f"kernel/reference mismatch:\n{out}\n{ref}")

    print("KERNEL_OK")
</pallas_src>

<mosaic_0001>
module attributes {stable_mosaic.version = 11 : i64} {
  func.func @_simple_rnn_kernel(%arg0: memref<64x8xf32, #tpu.memory_space<vmem>>, %arg1: memref<8x384xf32, #tpu.memory_space<vmem>>, %arg2: memref<128x384xf32, #tpu.memory_space<vmem>>, %arg3: memref<1x384xf32, #tpu.memory_space<vmem>>, %arg4: memref<1x128xf32, #tpu.memory_space<vmem>>, %arg5: memref<128x384xf32, #tpu.memory_space<vmem>>, %arg6: memref<128x384xf32, #tpu.memory_space<vmem>>, %arg7: memref<128x384xf32, #tpu.memory_space<vmem>>, %arg8: memref<1x384xf32, #tpu.memory_space<vmem>>, %arg9: memref<1x128xf32, #tpu.memory_space<vmem>>, %arg10: memref<128x2xf32, #tpu.memory_space<vmem>>, %arg11: memref<1x2xf32, #tpu.memory_space<vmem>>, %arg12: memref<8x2xf32, #tpu.memory_space<vmem>>, %arg13: memref<8x8x128xf32, #tpu.memory_space<vmem>>) attributes {dimension_semantics = [], scalar_prefetch = 0 : i64, scratch_operands = 1 : i64, tpu.core_type = #tpu.core_type<tc>} {
    %c0 = arith.constant 0 : index
    %c0_0 = arith.constant 0 : index
    %0 = vector.load %arg0[%c0, %c0_0] : memref<64x8xf32, #tpu.memory_space<vmem>>, vector<64x8xf32>
    %c0_1 = arith.constant 0 : index
    %c0_2 = arith.constant 0 : index
    %1 = vector.load %arg1[%c0_1, %c0_2] : memref<8x384xf32, #tpu.memory_space<vmem>>, vector<8x384xf32>
    %cst = arith.constant dense<0.000000e+00> : vector<64x384xf32>
    %2 = tpu.matmul %0, %1, %cst {dimension_numbers = #tpu.dot_dimension_numbers<[1], [0], [0], [1], [0, 0, 1, 1], [], []>} : vector<64x8xf32>, vector<8x384xf32>, vector<64x384xf32> -> vector<64x384xf32>
    %c0_3 = arith.constant 0 : index
    %c0_4 = arith.constant 0 : index
    %3 = vector.load %arg3[%c0_3, %c0_4] : memref<1x384xf32, #tpu.memory_space<vmem>>, vector<1x384xf32>
    %4 = vector.broadcast %3 : vector<1x384xf32> to vector<64x384xf32>
    %5 = arith.addf %2, %4 : vector<64x384xf32>
    %6 = vector.shape_cast %5 : vector<64x384xf32> to vector<8x8x384xf32>
    %c0_5 = arith.constant 0 : index
    %c0_6 = arith.constant 0 : index
    %7 = vector.load %arg2[%c0_5, %c0_6] : memref<128x384xf32, #tpu.memory_space<vmem>>, vector<128x384xf32>
    %c0_7 = arith.constant 0 : index
    %c0_8 = arith.constant 0 : index
    %8 = vector.load %arg4[%c0_7, %c0_8] : memref<1x128xf32, #tpu.memory_space<vmem>>, vector<1x128xf32>
    %9 = vector.shape_cast %8 : vector<1x128xf32> to vector<1x128xf32>
    %10 = vector.broadcast %9 : vector<1x128xf32> to vector<8x128xf32>
    %cst_9 = arith.constant 0.000000e+00 : f32
    %11 = vector.broadcast %cst_9 : f32 to vector<8x128xf32>
    %12 = vector.extract_strided_slice %6 {offsets = [0, 0, 0], sizes = [1, 8, 384], strides = [1, 1, 1]} : vector<8x8x384xf32> to vector<1x8x384xf32>
    %13 = vector.shape_cast %12 : vector<1x8x384xf32> to vector<8x384xf32>
    %cst_10 = arith.constant dense<0.000000e+00> : vector<8x384xf32>
    %14 = tpu.matmul %11, %7, %cst_10 {dimension_numbers = #tpu.dot_dimension_numbers<[1], [0], [0], [1], [0, 0, 1, 1], [], []>} : vector<8x128xf32>, vector<128x384xf32>, vector<8x384xf32> -> vector<8x384xf32>
    %15 = vector.extract_strided_slice %13 {offsets = [0, 0], sizes = [8, 256], strides = [1, 1]} : vector<8x384xf32> to vector<8x256xf32>
    %16 = vector.extract_strided_slice %14 {offsets = [0, 0], sizes = [8, 256], strides = [1, 1]} : vector<8x384xf32> to vector<8x256xf32>
    %17 = arith.addf %15, %16 : vector<8x256xf32>
    %18 = arith.negf %17 : vector<8x256xf32>
    %19 = math.exp %18 : vector<8x256xf32>
    %cst_11 = arith.constant 1.000000e+00 : f32
    %20 = vector.broadcast %cst_11 : f32 to vector<8x256xf32>
    %21 = arith.addf %20, %19 : vector<8x256xf32>
    %22 = arith.divf %20, %21 : vector<8x256xf32>
    %23 = vector.extract_strided_slice %22 {offsets = [0, 0], sizes = [8, 128], strides = [1, 1]} : vector<8x256xf32> to vector<8x128xf32>
    %24 = vector.extract_strided_slice %22 {offsets = [0, 128], sizes = [8, 128], strides = [1, 1]} : vector<8x256xf32> to vector<8x128xf32>
    %25 = vector.extract_strided_slice %13 {offsets = [0, 256], sizes = [8, 128], strides = [1, 1]} : vector<8x384xf32> to vector<8x128xf32>
    %26 = vector.extract_strided_slice %14 {offsets = [0, 256], sizes = [8, 128], strides = [1, 1]} : vector<8x384xf32> to vector<8x128xf32>
    %27 = arith.addf %26, %10 : vector<8x128xf32>
    %28 = arith.mulf %23, %27 : vector<8x128xf32>
    %29 = arith.addf %25, %28 : vector<8x128xf32>
    %30 = math.tanh %29 : vector<8x128xf32>
    %cst_12 = arith.constant 1.000000e+00 : f32
    %31 = vector.broadcast %cst_12 : f32 to vector<8x128xf32>
    %32 = arith.subf %31, %24 : vector<8x128xf32>
    %33 = arith.mulf %32, %30 : vector<8x128xf32>
    %34 = arith.mulf %24, %11 : vector<8x128xf32>
    %35 = arith.addf %33, %34 : vector<8x128xf32>
    %c0_13 = arith.constant 0 : index
    %c0_14 = arith.constant 0 : index
    %c0_15 = arith.constant 0 : index
    %36 = vector.load %arg13[%c0_13, %c0_14, %c0_15] : memref<8x8x128xf32, #tpu.memory_space<vmem>>, vector<1x8x128xf32>
    %37 = vector.shape_cast %36 : vector<1x8x128xf32> to vector<8x128xf32>
    %38 = vector.shape_cast %35 : vector<8x128xf32> to vector<1x8x128xf32>
    tpu.vector_store %arg13[%c0_13, %c0_14, %c0_15], %38 {strides = array<i32>} : memref<8x8x128xf32, #tpu.memory_space<vmem>>, vector<1x8x128xf32>,
    %39 = vector.extract_strided_slice %6 {offsets = [1, 0, 0], sizes = [1, 8, 384], strides = [1, 1, 1]} : vector<8x8x384xf32> to vector<1x8x384xf32>
    %40 = vector.shape_cast %39 : vector<1x8x384xf32> to vector<8x384xf32>
    %cst_16 = arith.constant dense<0.000000e+00> : vector<8x384xf32>
    %41 = tpu.matmul %35, %7, %cst_16 {dimension_numbers = #tpu.dot_dimension_numbers<[1], [0], [0], [1], [0, 0, 1, 1], [], []>} : vector<8x128xf32>, vector<128x384xf32>, vector<8x384xf32> -> vector<8x384xf32>
    %42 = vector.extract_strided_slice %40 {offsets = [0, 0], sizes = [8, 256], strides = [1, 1]} : vector<8x384xf32> to vector<8x256xf32>
    %43 = vector.extract_strided_slice %41 {offsets = [0, 0], sizes = [8, 256], strides = [1, 1]} : vector<8x384xf32> to vector<8x256xf32>
    %44 = arith.addf %42, %43 : vector<8x256xf32>
    %45 = arith.negf %44 : vector<8x256xf32>
    %46 = math.exp %45 : vector<8x256xf32>
    %cst_17 = arith.constant 1.000000e+00 : f32
    %47 = vector.broadcast %cst_17 : f32 to vector<8x256xf32>
    %48 = arith.addf %47, %46 : vector<8x256xf32>
    %49 = arith.divf %47, %48 : vector<8x256xf32>
    %50 = vector.extract_strided_slice %49 {offsets = [0, 0], sizes = [8, 128], strides = [1, 1]} : vector<8x256xf32> to vector<8x128xf32>
    %51 = vector.extract_strided_slice %49 {offsets = [0, 128], sizes = [8, 128], strides = [1, 1]} : vector<8x256xf32> to vector<8x128xf32>
    %52 = vector.extract_strided_slice %40 {offsets = [0, 256], sizes = [8, 128], strides = [1, 1]} : vector<8x384xf32> to vector<8x128xf32>
    %53 = vector.extract_strided_slice %41 {offsets = [0, 256], sizes = [8, 128], strides = [1, 1]} : vector<8x384xf32> to vector<8x128xf32>
    %54 = arith.addf %53, %10 : vector<8x128xf32>
    %55 = arith.mulf %50, %54 : vector<8x128xf32>
    %56 = arith.addf %52, %55 : vector<8x128xf32>
    %57 = math.tanh %56 : vector<8x128xf32>
    %cst_18 = arith.constant 1.000000e+00 : f32
    %58 = vector.broadcast %cst_18 : f32 to vector<8x128xf32>
    %59 = arith.subf %58, %51 : vector<8x128xf32>
    %60 = arith.mulf %59, %57 : vector<8x128xf32>
    %61 = arith.mulf %51, %35 : vector<8x128xf32>
    %62 = arith.addf %60, %61 : vector<8x128xf32>
    %c1 = arith.constant 1 : index
    %c0_19 = arith.constant 0 : index
    %c0_20 = arith.constant 0 : index
    %63 = vector.load %arg13[%c1, %c0_19, %c0_20] : memref<8x8x128xf32, #tpu.memory_space<vmem>>, vector<1x8x128xf32>
    %64 = vector.shape_cast %63 : vector<1x8x128xf32> to vector<8x128xf32>
    %65 = vector.shape_cast %62 : vector<8x128xf32> to vector<1x8x128xf32>
    tpu.vector_store %arg13[%c1, %c0_19, %c0_20], %65 {strides = array<i32>} : memref<8x8x128xf32, #tpu.memory_space<vmem>>, vector<1x8x128xf32>,
    %66 = vector.extract_strided_slice %6 {offsets = [2, 0, 0], sizes = [1, 8, 384], strides = [1, 1, 1]} : vector<8x8x384xf32> to vector<1x8x384xf32>
    %67 = vector.shape_cast %66 : vector<1x8x384xf32> to vector<8x384xf32>
    %cst_21 = arith.constant dense<0.000000e+00> : vector<8x384xf32>
    %68 = tpu.matmul %62, %7, %cst_21 {dimension_numbers = #tpu.dot_dimension_numbers<[1], [0], [0], [1], [0, 0, 1, 1], [], []>} : vector<8x128xf32>, vector<128x384xf32>, vector<8x384xf32> -> vector<8x384xf32>
    %69 = vector.extract_strided_slice %67 {offsets = [0, 0], sizes = [8, 256], strides = [1, 1]} : vector<8x384xf32> to vector<8x256xf32>
    %70 = vector.extract_strided_slice %68 {offsets = [0, 0], sizes = [8, 256], strides = [1, 1]} : vector<8x384xf32> to vector<8x256xf32>
    %71 = arith.addf %69, %70 : vector<8x256xf32>
    %72 = arith.negf %71 : vector<8x256xf32>
    %73 = math.exp %72 : vector<8x256xf32>
    %cst_22 = arith.constant 1.000000e+00 : f32
    %74 = vector.broadcast %cst_22 : f32 to vector<8x256xf32>
    %75 = arith.addf %74, %73 : vector<8x256xf32>
    %76 = arith.divf %74, %75 : vector<8x256xf32>
    %77 = vector.extract_strided_slice %76 {offsets = [0, 0], sizes = [8, 128], strides = [1, 1]} : vector<8x256xf32> to vector<8x128xf32>
    %78 = vector.extract_strided_slice %76 {offsets = [0, 128], sizes = [8, 128], strides = [1, 1]} : vector<8x256xf32> to vector<8x128xf32>
    %79 = vector.extract_strided_slice %67 {offsets = [0, 256], sizes = [8, 128], strides = [1, 1]} : vector<8x384xf32> to vector<8x128xf32>
    %80 = vector.extract_strided_slice %68 {offsets = [0, 256], sizes = [8, 128], strides = [1, 1]} : vector<8x384xf32> to vector<8x128xf32>
    %81 = arith.addf %80, %10 : vector<8x128xf32>
    %82 = arith.mulf %77, %81 : vector<8x128xf32>
    %83 = arith.addf %79, %82 : vector<8x128xf32>
    %84 = math.tanh %83 : vector<8x128xf32>
    %cst_23 = arith.constant 1.000000e+00 : f32
    %85 = vector.broadcast %cst_23 : f32 to vector<8x128xf32>
    %86 = arith.subf %85, %78 : vector<8x128xf32>
    %87 = arith.mulf %86, %84 : vector<8x128xf32>
    %88 = arith.mulf %78, %62 : vector<8x128xf32>
    %89 = arith.addf %87, %88 : vector<8x128xf32>
    %c2 = arith.constant 2 : index
    %c0_24 = arith.constant 0 : index
    %c0_25 = arith.constant 0 : index
    %90 = vector.load %arg13[%c2, %c0_24, %c0_25] : memref<8x8x128xf32, #tpu.memory_space<vmem>>, vector<1x8x128xf32>
    %91 = vector.shape_cast %90 : vector<1x8x128xf32> to vector<8x128xf32>
    %92 = vector.shape_cast %89 : vector<8x128xf32> to vector<1x8x128xf32>
    tpu.vector_store %arg13[%c2, %c0_24, %c0_25], %92 {strides = array<i32>} : memref<8x8x128xf32, #tpu.memory_space<vmem>>, vector<1x8x128xf32>,
    %93 = vector.extract_strided_slice %6 {offsets = [3, 0, 0], sizes = [1, 8, 384], strides = [1, 1, 1]} : vector<8x8x384xf32> to vector<1x8x384xf32>
    %94 = vector.shape_cast %93 : vector<1x8x384xf32> to vector<8x384xf32>
    %cst_26 = arith.constant dense<0.000000e+00> : vector<8x384xf32>
    %95 = tpu.matmul %89, %7, %cst_26 {dimension_numbers = #tpu.dot_dimension_numbers<[1], [0], [0], [1], [0, 0, 1, 1], [], []>} : vector<8x128xf32>, vector<128x384xf32>, vector<8x384xf32> -> vector<8x384xf32>
    %96 = vector.extract_strided_slice %94 {offsets = [0, 0], sizes = [8, 256], strides = [1, 1]} : vector<8x384xf32> to vector<8x256xf32>
    %97 = vector.extract_strided_slice %95 {offsets = [0, 0], sizes = [8, 256], strides = [1, 1]} : vector<8x384xf32> to vector<8x256xf32>
    %98 = arith.addf %96, %97 : vector<8x256xf32>
    %99 = arith.negf %98 : vector<8x256xf32>
    %100 = math.exp %99 : vector<8x256xf32>
    %cst_27 = arith.constant 1.000000e+00 : f32
    %101 = vector.broadcast %cst_27 : f32 to vector<8x256xf32>
    %102 = arith.addf %101, %100 : vector<8x256xf32>
    %103 = arith.divf %101, %102 : vector<8x256xf32>
    %104 = vector.extract_strided_slice %103 {offsets = [0, 0], sizes = [8, 128], strides = [1, 1]} : vector<8x256xf32> to vector<8x128xf32>
    %105 = vector.extract_strided_slice %103 {offsets = [0, 128], sizes = [8, 128], strides = [1, 1]} : vector<8x256xf32> to vector<8x128xf32>
    %106 = vector.extract_strided_slice %94 {offsets = [0, 256], sizes = [8, 128], strides = [1, 1]} : vector<8x384xf32> to vector<8x128xf32>
    %107 = vector.extract_strided_slice %95 {offsets = [0, 256], sizes = [8, 128], strides = [1, 1]} : vector<8x384xf32> to vector<8x128xf32>
    %108 = arith.addf %107, %10 : vector<8x128xf32>
    %109 = arith.mulf %104, %108 : vector<8x128xf32>
    %110 = arith.addf %106, %109 : vector<8x128xf32>
    %111 = math.tanh %110 : vector<8x128xf32>
    %cst_28 = arith.constant 1.000000e+00 : f32
    %112 = vector.broadcast %cst_28 : f32 to vector<8x128xf32>
    %113 = arith.subf %112, %105 : vector<8x128xf32>
    %114 = arith.mulf %113, %111 : vector<8x128xf32>
    %115 = arith.mulf %105, %89 : vector<8x128xf32>
    %116 = arith.addf %114, %115 : vector<8x128xf32>
    %c3 = arith.constant 3 : index
    %c0_29 = arith.constant 0 : index
    %c0_30 = arith.constant 0 : index
    %117 = vector.load %arg13[%c3, %c0_29, %c0_30] : memref<8x8x128xf32, #tpu.memory_space<vmem>>, vector<1x8x128xf32>
    %118 = vector.shape_cast %117 : vector<1x8x128xf32> to vector<8x128xf32>
    %119 = vector.shape_cast %116 : vector<8x128xf32> to vector<1x8x128xf32>
    tpu.vector_store %arg13[%c3, %c0_29, %c0_30], %119 {strides = array<i32>} : memref<8x8x128xf32, #tpu.memory_space<vmem>>, vector<1x8x128xf32>,
    %120 = vector.extract_strided_slice %6 {offsets = [4, 0, 0], sizes = [1, 8, 384], strides = [1, 1, 1]} : vector<8x8x384xf32> to vector<1x8x384xf32>
    %121 = vector.shape_cast %120 : vector<1x8x384xf32> to vector<8x384xf32>
    %cst_31 = arith.constant dense<0.000000e+00> : vector<8x384xf32>
    %122 = tpu.matmul %116, %7, %cst_31 {dimension_numbers = #tpu.dot_dimension_numbers<[1], [0], [0], [1], [0, 0, 1, 1], [], []>} : vector<8x128xf32>, vector<128x384xf32>, vector<8x384xf32> -> vector<8x384xf32>
    %123 = vector.extract_strided_slice %121 {offsets = [0, 0], sizes = [8, 256], strides = [1, 1]} : vector<8x384xf32> to vector<8x256xf32>
    %124 = vector.extract_strided_slice %122 {offsets = [0, 0], sizes = [8, 256], strides = [1, 1]} : vector<8x384xf32> to vector<8x256xf32>
    %125 = arith.addf %123, %124 : vector<8x256xf32>
    %126 = arith.negf %125 : vector<8x256xf32>
    %127 = math.exp %126 : vector<8x256xf32>
    %cst_32 = arith.constant 1.000000e+00 : f32
    %128 = vector.broadcast %cst_32 : f32 to vector<8x256xf32>
    %129 = arith.addf %128, %127 : vector<8x256xf32>
    %130 = arith.divf %128, %129 : vector<8x256xf32>
    %131 = vector.extract_strided_slice %130 {offsets = [0, 0], sizes = [8, 128], strides = [1, 1]} : vector<8x256xf32> to vector<8x128xf32>
    %132 = vector.extract_strided_slice %130 {offsets = [0, 128], sizes = [8, 128], strides = [1, 1]} : vector<8x256xf32> to vector<8x128xf32>
    %133 = vector.extract_strided_slice %121 {offsets = [0, 256], sizes = [8, 128], strides = [1, 1]} : vector<8x384xf32> to vector<8x128xf32>
    %134 = vector.extract_strided_slice %122 {offsets = [0, 256], sizes = [8, 128], strides = [1, 1]} : vector<8x384xf32> to vector<8x128xf32>
    %135 = arith.addf %134, %10 : vector<8x128xf32>
    %136 = arith.mulf %131, %135 : vector<8x128xf32>
    %137 = arith.addf %133, %136 : vector<8x128xf32>
    %138 = math.tanh %137 : vector<8x128xf32>
    %cst_33 = arith.constant 1.000000e+00 : f32
    %139 = vector.broadcast %cst_33 : f32 to vector<8x128xf32>
    %140 = arith.subf %139, %132 : vector<8x128xf32>
    %141 = arith.mulf %140, %138 : vector<8x128xf32>
    %142 = arith.mulf %132, %116 : vector<8x128xf32>
    %143 = arith.addf %141, %142 : vector<8x128xf32>
    %c4 = arith.constant 4 : index
    %c0_34 = arith.constant 0 : index
    %c0_35 = arith.constant 0 : index
    %144 = vector.load %arg13[%c4, %c0_34, %c0_35] : memref<8x8x128xf32, #tpu.memory_space<vmem>>, vector<1x8x128xf32>
    %145 = vector.shape_cast %144 : vector<1x8x128xf32> to vector<8x128xf32>
    %146 = vector.shape_cast %143 : vector<8x128xf32> to vector<1x8x128xf32>
    tpu.vector_store %arg13[%c4, %c0_34, %c0_35], %146 {strides = array<i32>} : memref<8x8x128xf32, #tpu.memory_space<vmem>>, vector<1x8x128xf32>,
    %147 = vector.extract_strided_slice %6 {offsets = [5, 0, 0], sizes = [1, 8, 384], strides = [1, 1, 1]} : vector<8x8x384xf32> to vector<1x8x384xf32>
    %148 = vector.shape_cast %147 : vector<1x8x384xf32> to vector<8x384xf32>
    %cst_36 = arith.constant dense<0.000000e+00> : vector<8x384xf32>
    %149 = tpu.matmul %143, %7, %cst_36 {dimension_numbers = #tpu.dot_dimension_numbers<[1], [0], [0], [1], [0, 0, 1, 1], [], []>} : vector<8x128xf32>, vector<128x384xf32>, vector<8x384xf32> -> vector<8x384xf32>
    %150 = vector.extract_strided_slice %148 {offsets = [0, 0], sizes = [8, 256], strides = [1, 1]} : vector<8x384xf32> to vector<8x256xf32>
    %151 = vector.extract_strided_slice %149 {offsets = [0, 0], sizes = [8, 256], strides = [1, 1]} : vector<8x384xf32> to vector<8x256xf32>
    %152 = arith.addf %150, %151 : vector<8x256xf32>
    %153 = arith.negf %152 : vector<8x256xf32>
    %154 = math.exp %153 : vector<8x256xf32>
    %cst_37 = arith.constant 1.000000e+00 : f32
    %155 = vector.broadcast %cst_37 : f32 to vector<8x256xf32>
    %156 = arith.addf %155, %154 : vector<8x256xf32>
    %157 = arith.divf %155, %156 : vector<8x256xf32>
    %158 = vector.extract_strided_slice %157 {offsets = [0, 0], sizes = [8, 128], strides = [1, 1]} : vector<8x256xf32> to vector<8x128xf32>
    %159 = vector.extract_strided_slice %157 {offsets = [0, 128], sizes = [8, 128], strides = [1, 1]} : vector<8x256xf32> to vector<8x128xf32>
    %160 = vector.extract_strided_slice %148 {offsets = [0, 256], sizes = [8, 128], strides = [1, 1]} : vector<8x384xf32> to vector<8x128xf32>
    %161 = vector.extract_strided_slice %149 {offsets = [0, 256], sizes = [8, 128], strides = [1, 1]} : vector<8x384xf32> to vector<8x128xf32>
    %162 = arith.addf %161, %10 : vector<8x128xf32>
    %163 = arith.mulf %158, %162 : vector<8x128xf32>
    %164 = arith.addf %160, %163 : vector<8x128xf32>
    %165 = math.tanh %164 : vector<8x128xf32>
    %cst_38 = arith.constant 1.000000e+00 : f32
    %166 = vector.broadcast %cst_38 : f32 to vector<8x128xf32>
    %167 = arith.subf %166, %159 : vector<8x128xf32>
    %168 = arith.mulf %167, %165 : vector<8x128xf32>
    %169 = arith.mulf %159, %143 : vector<8x128xf32>
    %170 = arith.addf %168, %169 : vector<8x128xf32>
    %c5 = arith.constant 5 : index
    %c0_39 = arith.constant 0 : index
    %c0_40 = arith.constant 0 : index
    %171 = vector.load %arg13[%c5, %c0_39, %c0_40] : memref<8x8x128xf32, #tpu.memory_space<vmem>>, vector<1x8x128xf32>
    %172 = vector.shape_cast %171 : vector<1x8x128xf32> to vector<8x128xf32>
    %173 = vector.shape_cast %170 : vector<8x128xf32> to vector<1x8x128xf32>
    tpu.vector_store %arg13[%c5, %c0_39, %c0_40], %173 {strides = array<i32>} : memref<8x8x128xf32, #tpu.memory_space<vmem>>, vector<1x8x128xf32>,
    %174 = vector.extract_strided_slice %6 {offsets = [6, 0, 0], sizes = [1, 8, 384], strides = [1, 1, 1]} : vector<8x8x384xf32> to vector<1x8x384xf32>
    %175 = vector.shape_cast %174 : vector<1x8x384xf32> to vector<8x384xf32>
    %cst_41 = arith.constant dense<0.000000e+00> : vector<8x384xf32>
    %176 = tpu.matmul %170, %7, %cst_41 {dimension_numbers = #tpu.dot_dimension_numbers<[1], [0], [0], [1], [0, 0, 1, 1], [], []>} : vector<8x128xf32>, vector<128x384xf32>, vector<8x384xf32> -> vector<8x384xf32>
    %177 = vector.extract_strided_slice %175 {offsets = [0, 0], sizes = [8, 256], strides = [1, 1]} : vector<8x384xf32> to vector<8x256xf32>
    %178 = vector.extract_strided_slice %176 {offsets = [0, 0], sizes = [8, 256], strides = [1, 1]} : vector<8x384xf32> to vector<8x256xf32>
    %179 = arith.addf %177, %178 : vector<8x256xf32>
    %180 = arith.negf %179 : vector<8x256xf32>
    %181 = math.exp %180 : vector<8x256xf32>
    %cst_42 = arith.constant 1.000000e+00 : f32
    %182 = vector.broadcast %cst_42 : f32 to vector<8x256xf32>
    %183 = arith.addf %182, %181 : vector<8x256xf32>
    %184 = arith.divf %182, %183 : vector<8x256xf32>
    %185 = vector.extract_strided_slice %184 {offsets = [0, 0], sizes = [8, 128], strides = [1, 1]} : vector<8x256xf32> to vector<8x128xf32>
    %186 = vector.extract_strided_slice %184 {offsets = [0, 128], sizes = [8, 128], strides = [1, 1]} : vector<8x256xf32> to vector<8x128xf32>
    %187 = vector.extract_strided_slice %175 {offsets = [0, 256], sizes = [8, 128], strides = [1, 1]} : vector<8x384xf32> to vector<8x128xf32>
    %188 = vector.extract_strided_slice %176 {offsets = [0, 256], sizes = [8, 128], strides = [1, 1]} : vector<8x384xf32> to vector<8x128xf32>
    %189 = arith.addf %188, %10 : vector<8x128xf32>
    %190 = arith.mulf %185, %189 : vector<8x128xf32>
    %191 = arith.addf %187, %190 : vector<8x128xf32>
    %192 = math.tanh %191 : vector<8x128xf32>
    %cst_43 = arith.constant 1.000000e+00 : f32
    %193 = vector.broadcast %cst_43 : f32 to vector<8x128xf32>
    %194 = arith.subf %193, %186 : vector<8x128xf32>
    %195 = arith.mulf %194, %192 : vector<8x128xf32>
    %196 = arith.mulf %186, %170 : vector<8x128xf32>
    %197 = arith.addf %195, %196 : vector<8x128xf32>
    %c6 = arith.constant 6 : index
    %c0_44 = arith.constant 0 : index
    %c0_45 = arith.constant 0 : index
    %198 = vector.load %arg13[%c6, %c0_44, %c0_45] : memref<8x8x128xf32, #tpu.memory_space<vmem>>, vector<1x8x128xf32>
    %199 = vector.shape_cast %198 : vector<1x8x128xf32> to vector<8x128xf32>
    %200 = vector.shape_cast %197 : vector<8x128xf32> to vector<1x8x128xf32>
    tpu.vector_store %arg13[%c6, %c0_44, %c0_45], %200 {strides = array<i32>} : memref<8x8x128xf32, #tpu.memory_space<vmem>>, vector<1x8x128xf32>,
    %201 = vector.extract_strided_slice %6 {offsets = [7, 0, 0], sizes = [1, 8, 384], strides = [1, 1, 1]} : vector<8x8x384xf32> to vector<1x8x384xf32>
    %202 = vector.shape_cast %201 : vector<1x8x384xf32> to vector<8x384xf32>
    %cst_46 = arith.constant dense<0.000000e+00> : vector<8x384xf32>
    %203 = tpu.matmul %197, %7, %cst_46 {dimension_numbers = #tpu.dot_dimension_numbers<[1], [0], [0], [1], [0, 0, 1, 1], [], []>} : vector<8x128xf32>, vector<128x384xf32>, vector<8x384xf32> -> vector<8x384xf32>
    %204 = vector.extract_strided_slice %202 {offsets = [0, 0], sizes = [8, 256], strides = [1, 1]} : vector<8x384xf32> to vector<8x256xf32>
    %205 = vector.extract_strided_slice %203 {offsets = [0, 0], sizes = [8, 256], strides = [1, 1]} : vector<8x384xf32> to vector<8x256xf32>
    %206 = arith.addf %204, %205 : vector<8x256xf32>
    %207 = arith.negf %206 : vector<8x256xf32>
    %208 = math.exp %207 : vector<8x256xf32>
    %cst_47 = arith.constant 1.000000e+00 : f32
    %209 = vector.broadcast %cst_47 : f32 to vector<8x256xf32>
    %210 = arith.addf %209, %208 : vector<8x256xf32>
    %211 = arith.divf %209, %210 : vector<8x256xf32>
    %212 = vector.extract_strided_slice %211 {offsets = [0, 0], sizes = [8, 128], strides = [1, 1]} : vector<8x256xf32> to vector<8x128xf32>
    %213 = vector.extract_strided_slice %211 {offsets = [0, 128], sizes = [8, 128], strides = [1, 1]} : vector<8x256xf32> to vector<8x128xf32>
    %214 = vector.extract_strided_slice %202 {offsets = [0, 256], sizes = [8, 128], strides = [1, 1]} : vector<8x384xf32> to vector<8x128xf32>
    %215 = vector.extract_strided_slice %203 {offsets = [0, 256], sizes = [8, 128], strides = [1, 1]} : vector<8x384xf32> to vector<8x128xf32>
    %216 = arith.addf %215, %10 : vector<8x128xf32>
    %217 = arith.mulf %212, %216 : vector<8x128xf32>
    %218 = arith.addf %214, %217 : vector<8x128xf32>
    %219 = math.tanh %218 : vector<8x128xf32>
    %cst_48 = arith.constant 1.000000e+00 : f32
    %220 = vector.broadcast %cst_48 : f32 to vector<8x128xf32>
    %221 = arith.subf %220, %213 : vector<8x128xf32>
    %222 = arith.mulf %221, %219 : vector<8x128xf32>
    %223 = arith.mulf %213, %197 : vector<8x128xf32>
    %224 = arith.addf %222, %223 : vector<8x128xf32>
    %c7 = arith.constant 7 : index
    %c0_49 = arith.constant 0 : index
    %c0_50 = arith.constant 0 : index
    %225 = vector.load %arg13[%c7, %c0_49, %c0_50] : memref<8x8x128xf32, #tpu.memory_space<vmem>>, vector<1x8x128xf32>
    %226 = vector.shape_cast %225 : vector<1x8x128xf32> to vector<8x128xf32>
    %227 = vector.shape_cast %224 : vector<8x128xf32> to vector<1x8x128xf32>
    tpu.vector_store %arg13[%c7, %c0_49, %c0_50], %227 {strides = array<i32>} : memref<8x8x128xf32, #tpu.memory_space<vmem>>, vector<1x8x128xf32>,
    %c0_51 = arith.constant 0 : index
    %c0_52 = arith.constant 0 : index
    %c0_53 = arith.constant 0 : index
    %228 = vector.load %arg13[%c0_51, %c0_52, %c0_53] : memref<8x8x128xf32, #tpu.memory_space<vmem>>, vector<8x8x128xf32>
    %229 = vector.shape_cast %228 : vector<8x8x128xf32> to vector<64x128xf32>
    %c0_54 = arith.constant 0 : index
    %c0_55 = arith.constant 0 : index
    %230 = vector.load %arg5[%c0_54, %c0_55] : memref<128x384xf32, #tpu.memory_space<vmem>>, vector<128x384xf32>
    %cst_56 = arith.constant dense<0.000000e+00> : vector<64x384xf32>
    %231 = tpu.matmul %229, %230, %cst_56 {dimension_numbers = #tpu.dot_dimension_numbers<[1], [0], [0], [1], [0, 0, 1, 1], [], []>} : vector<64x128xf32>, vector<128x384xf32>, vector<64x384xf32> -> vector<64x384xf32>
    %c0_57 = arith.constant 0 : index
    %c0_58 = arith.constant 0 : index
    %232 = vector.load %arg8[%c0_57, %c0_58] : memref<1x384xf32, #tpu.memory_space<vmem>>, vector<1x384xf32>
    %233 = vector.broadcast %232 : vector<1x384xf32> to vector<64x384xf32>
    %234 = arith.addf %231, %233 : vector<64x384xf32>
    %235 = vector.shape_cast %234 : vector<64x384xf32> to vector<8x8x384xf32>
    %c0_59 = arith.constant 0 : index
    %c0_60 = arith.constant 0 : index
    %236 = vector.load %arg6[%c0_59, %c0_60] : memref<128x384xf32, #tpu.memory_space<vmem>>, vector<128x384xf32>
    %cst_61 = arith.constant dense<0.000000e+00> : vector<64x384xf32>
    %237 = tpu.matmul %229, %236, %cst_61 {dimension_numbers = #tpu.dot_dimension_numbers<[1], [0], [0], [1], [0, 0, 1, 1], [], []>} : vector<64x128xf32>, vector<128x384xf32>, vector<64x384xf32> -> vector<64x384xf32>
    %238 = vector.shape_cast %237 : vector<64x384xf32> to vector<8x8x384xf32>
    %c0_62 = arith.constant 0 : index
    %c0_63 = arith.constant 0 : index
    %239 = vector.load %arg7[%c0_62, %c0_63] : memref<128x384xf32, #tpu.memory_space<vmem>>, vector<128x384xf32>
    %c0_64 = arith.constant 0 : index
    %c0_65 = arith.constant 0 : index
    %240 = vector.load %arg9[%c0_64, %c0_65] : memref<1x128xf32, #tpu.memory_space<vmem>>, vector<1x128xf32>
    %241 = vector.shape_cast %240 : vector<1x128xf32> to vector<1x128xf32>
    %242 = vector.broadcast %241 : vector<1x128xf32> to vector<8x128xf32>
    %cst_66 = arith.constant 0.000000e+00 : f32
    %243 = vector.broadcast %cst_66 : f32 to vector<8x128xf32>
    %244 = vector.extract_strided_slice %235 {offsets = [0, 0, 0], sizes = [1, 8, 384], strides = [1, 1, 1]} : vector<8x8x384xf32> to vector<1x8x384xf32>
    %245 = vector.shape_cast %244 : vector<1x8x384xf32> to vector<8x384xf32>
    %246 = vector.extract_strided_slice %238 {offsets = [7, 0, 0], sizes = [1, 8, 384], strides = [1, 1, 1]} : vector<8x8x384xf32> to vector<1x8x384xf32>
    %247 = vector.shape_cast %246 : vector<1x8x384xf32> to vector<8x384xf32>
    %248 = arith.addf %245, %247 : vector<8x384xf32>
    %cst_67 = arith.constant dense<0.000000e+00> : vector<8x384xf32>
    %249 = tpu.matmul %243, %239, %cst_67 {dimension_numbers = #tpu.dot_dimension_numbers<[1], [0], [0], [1], [0, 0, 1, 1], [], []>} : vector<8x128xf32>, vector<128x384xf32>, vector<8x384xf32> -> vector<8x384xf32>
    %250 = vector.extract_strided_slice %248 {offsets = [0, 0], sizes = [8, 256], strides = [1, 1]} : vector<8x384xf32> to vector<8x256xf32>
    %251 = vector.extract_strided_slice %249 {offsets = [0, 0], sizes = [8, 256], strides = [1, 1]} : vector<8x384xf32> to vector<8x256xf32>
    %252 = arith.addf %250, %251 : vector<8x256xf32>
    %253 = arith.negf %252 : vector<8x256xf32>
    %254 = math.exp %253 : vector<8x256xf32>
    %cst_68 = arith.constant 1.000000e+00 : f32
    %255 = vector.broadcast %cst_68 : f32 to vector<8x256xf32>
    %256 = arith.addf %255, %254 : vector<8x256xf32>
    %257 = arith.divf %255, %256 : vector<8x256xf32>
    %258 = vector.extract_strided_slice %257 {offsets = [0, 0], sizes = [8, 128], strides = [1, 1]} : vector<8x256xf32> to vector<8x128xf32>
    %259 = vector.extract_strided_slice %257 {offsets = [0, 128], sizes = [8, 128], strides = [1, 1]} : vector<8x256xf32> to vector<8x128xf32>
    %260 = vector.extract_strided_slice %248 {offsets = [0, 256], sizes = [8, 128], strides = [1, 1]} : vector<8x384xf32> to vector<8x128xf32>
    %261 = vector.extract_strided_slice %249 {offsets = [0, 256], sizes = [8, 128], strides = [1, 1]} : vector<8x384xf32> to vector<8x128xf32>
    %262 = arith.addf %261, %242 : vector<8x128xf32>
    %263 = arith.mulf %258, %262 : vector<8x128xf32>
    %264 = arith.addf %260, %263 : vector<8x128xf32>
    %265 = math.tanh %264 : vector<8x128xf32>
    %cst_69 = arith.constant 1.000000e+00 : f32
    %266 = vector.broadcast %cst_69 : f32 to vector<8x128xf32>
    %267 = arith.subf %266, %259 : vector<8x128xf32>
    %268 = arith.mulf %267, %265 : vector<8x128xf32>
    %269 = arith.mulf %259, %243 : vector<8x128xf32>
    %270 = arith.addf %268, %269 : vector<8x128xf32>
    %271 = vector.extract_strided_slice %235 {offsets = [1, 0, 0], sizes = [1, 8, 384], strides = [1, 1, 1]} : vector<8x8x384xf32> to vector<1x8x384xf32>
    %272 = vector.shape_cast %271 : vector<1x8x384xf32> to vector<8x384xf32>
    %273 = vector.extract_strided_slice %238 {offsets = [6, 0, 0], sizes = [1, 8, 384], strides = [1, 1, 1]} : vector<8x8x384xf32> to vector<1x8x384xf32>
    %274 = vector.shape_cast %273 : vector<1x8x384xf32> to vector<8x384xf32>
    %275 = arith.addf %272, %274 : vector<8x384xf32>
    %cst_70 = arith.constant dense<0.000000e+00> : vector<8x384xf32>
    %276 = tpu.matmul %270, %239, %cst_70 {dimension_numbers = #tpu.dot_dimension_numbers<[1], [0], [0], [1], [0, 0, 1, 1], [], []>} : vector<8x128xf32>, vector<128x384xf32>, vector<8x384xf32> -> vector<8x384xf32>
    %277 = vector.extract_strided_slice %275 {offsets = [0, 0], sizes = [8, 256], strides = [1, 1]} : vector<8x384xf32> to vector<8x256xf32>
    %278 = vector.extract_strided_slice %276 {offsets = [0, 0], sizes = [8, 256], strides = [1, 1]} : vector<8x384xf32> to vector<8x256xf32>
    %279 = arith.addf %277, %278 : vector<8x256xf32>
    %280 = arith.negf %279 : vector<8x256xf32>
    %281 = math.exp %280 : vector<8x256xf32>
    %cst_71 = arith.constant 1.000000e+00 : f32
    %282 = vector.broadcast %cst_71 : f32 to vector<8x256xf32>
    %283 = arith.addf %282, %281 : vector<8x256xf32>
    %284 = arith.divf %282, %283 : vector<8x256xf32>
    %285 = vector.extract_strided_slice %284 {offsets = [0, 0], sizes = [8, 128], strides = [1, 1]} : vector<8x256xf32> to vector<8x128xf32>
    %286 = vector.extract_strided_slice %284 {offsets = [0, 128], sizes = [8, 128], strides = [1, 1]} : vector<8x256xf32> to vector<8x128xf32>
    %287 = vector.extract_strided_slice %275 {offsets = [0, 256], sizes = [8, 128], strides = [1, 1]} : vector<8x384xf32> to vector<8x128xf32>
    %288 = vector.extract_strided_slice %276 {offsets = [0, 256], sizes = [8, 128], strides = [1, 1]} : vector<8x384xf32> to vector<8x128xf32>
    %289 = arith.addf %288, %242 : vector<8x128xf32>
    %290 = arith.mulf %285, %289 : vector<8x128xf32>
    %291 = arith.addf %287, %290 : vector<8x128xf32>
    %292 = math.tanh %291 : vector<8x128xf32>
    %cst_72 = arith.constant 1.000000e+00 : f32
    %293 = vector.broadcast %cst_72 : f32 to vector<8x128xf32>
    %294 = arith.subf %293, %286 : vector<8x128xf32>
    %295 = arith.mulf %294, %292 : vector<8x128xf32>
    %296 = arith.mulf %286, %270 : vector<8x128xf32>
    %297 = arith.addf %295, %296 : vector<8x128xf32>
    %298 = vector.extract_strided_slice %235 {offsets = [2, 0, 0], sizes = [1, 8, 384], strides = [1, 1, 1]} : vector<8x8x384xf32> to vector<1x8x384xf32>
    %299 = vector.shape_cast %298 : vector<1x8x384xf32> to vector<8x384xf32>
    %300 = vector.extract_strided_slice %238 {offsets = [5, 0, 0], sizes = [1, 8, 384], strides = [1, 1, 1]} : vector<8x8x384xf32> to vector<1x8x384xf32>
    %301 = vector.shape_cast %300 : vector<1x8x384xf32> to vector<8x384xf32>
    %302 = arith.addf %299, %301 : vector<8x384xf32>
    %cst_73 = arith.constant dense<0.000000e+00> : vector<8x384xf32>
    %303 = tpu.matmul %297, %239, %cst_73 {dimension_numbers = #tpu.dot_dimension_numbers<[1], [0], [0], [1], [0, 0, 1, 1], [], []>} : vector<8x128xf32>, vector<128x384xf32>, vector<8x384xf32> -> vector<8x384xf32>
    %304 = vector.extract_strided_slice %302 {offsets = [0, 0], sizes = [8, 256], strides = [1, 1]} : vector<8x384xf32> to vector<8x256xf32>
    %305 = vector.extract_strided_slice %303 {offsets = [0, 0], sizes = [8, 256], strides = [1, 1]} : vector<8x384xf32> to vector<8x256xf32>
    %306 = arith.addf %304, %305 : vector<8x256xf32>
    %307 = arith.negf %306 : vector<8x256xf32>
    %308 = math.exp %307 : vector<8x256xf32>
    %cst_74 = arith.constant 1.000000e+00 : f32
    %309 = vector.broadcast %cst_74 : f32 to vector<8x256xf32>
    %310 = arith.addf %309, %308 : vector<8x256xf32>
    %311 = arith.divf %309, %310 : vector<8x256xf32>
    %312 = vector.extract_strided_slice %311 {offsets = [0, 0], sizes = [8, 128], strides = [1, 1]} : vector<8x256xf32> to vector<8x128xf32>
    %313 = vector.extract_strided_slice %311 {offsets = [0, 128], sizes = [8, 128], strides = [1, 1]} : vector<8x256xf32> to vector<8x128xf32>
    %314 = vector.extract_strided_slice %302 {offsets = [0, 256], sizes = [8, 128], strides = [1, 1]} : vector<8x384xf32> to vector<8x128xf32>
    %315 = vector.extract_strided_slice %303 {offsets = [0, 256], sizes = [8, 128], strides = [1, 1]} : vector<8x384xf32> to vector<8x128xf32>
    %316 = arith.addf %315, %242 : vector<8x128xf32>
    %317 = arith.mulf %312, %316 : vector<8x128xf32>
    %318 = arith.addf %314, %317 : vector<8x128xf32>
    %319 = math.tanh %318 : vector<8x128xf32>
    %cst_75 = arith.constant 1.000000e+00 : f32
    %320 = vector.broadcast %cst_75 : f32 to vector<8x128xf32>
    %321 = arith.subf %320, %313 : vector<8x128xf32>
    %322 = arith.mulf %321, %319 : vector<8x128xf32>
    %323 = arith.mulf %313, %297 : vector<8x128xf32>
    %324 = arith.addf %322, %323 : vector<8x128xf32>
    %325 = vector.extract_strided_slice %235 {offsets = [3, 0, 0], sizes = [1, 8, 384], strides = [1, 1, 1]} : vector<8x8x384xf32> to vector<1x8x384xf32>
    %326 = vector.shape_cast %325 : vector<1x8x384xf32> to vector<8x384xf32>
    %327 = vector.extract_strided_slice %238 {offsets = [4, 0, 0], sizes = [1, 8, 384], strides = [1, 1, 1]} : vector<8x8x384xf32> to vector<1x8x384xf32>
    %328 = vector.shape_cast %327 : vector<1x8x384xf32> to vector<8x384xf32>
    %329 = arith.addf %326, %328 : vector<8x384xf32>
    %cst_76 = arith.constant dense<0.000000e+00> : vector<8x384xf32>
    %330 = tpu.matmul %324, %239, %cst_76 {dimension_numbers = #tpu.dot_dimension_numbers<[1], [0], [0], [1], [0, 0, 1, 1], [], []>} : vector<8x128xf32>, vector<128x384xf32>, vector<8x384xf32> -> vector<8x384xf32>
    %331 = vector.extract_strided_slice %329 {offsets = [0, 0], sizes = [8, 256], strides = [1, 1]} : vector<8x384xf32> to vector<8x256xf32>
    %332 = vector.extract_strided_slice %330 {offsets = [0, 0], sizes = [8, 256], strides = [1, 1]} : vector<8x384xf32> to vector<8x256xf32>
    %333 = arith.addf %331, %332 : vector<8x256xf32>
    %334 = arith.negf %333 : vector<8x256xf32>
    %335 = math.exp %334 : vector<8x256xf32>
    %cst_77 = arith.constant 1.000000e+00 : f32
    %336 = vector.broadcast %cst_77 : f32 to vector<8x256xf32>
    %337 = arith.addf %336, %335 : vector<8x256xf32>
    %338 = arith.divf %336, %337 : vector<8x256xf32>
    %339 = vector.extract_strided_slice %338 {offsets = [0, 0], sizes = [8, 128], strides = [1, 1]} : vector<8x256xf32> to vector<8x128xf32>
    %340 = vector.extract_strided_slice %338 {offsets = [0, 128], sizes = [8, 128], strides = [1, 1]} : vector<8x256xf32> to vector<8x128xf32>
    %341 = vector.extract_strided_slice %329 {offsets = [0, 256], sizes = [8, 128], strides = [1, 1]} : vector<8x384xf32> to vector<8x128xf32>
    %342 = vector.extract_strided_slice %330 {offsets = [0, 256], sizes = [8, 128], strides = [1, 1]} : vector<8x384xf32> to vector<8x128xf32>
    %343 = arith.addf %342, %242 : vector<8x128xf32>
    %344 = arith.mulf %339, %343 : vector<8x128xf32>
    %345 = arith.addf %341, %344 : vector<8x128xf32>
    %346 = math.tanh %345 : vector<8x128xf32>
    %cst_78 = arith.constant 1.000000e+00 : f32
    %347 = vector.broadcast %cst_78 : f32 to vector<8x128xf32>
    %348 = arith.subf %347, %340 : vector<8x128xf32>
    %349 = arith.mulf %348, %346 : vector<8x128xf32>
    %350 = arith.mulf %340, %324 : vector<8x128xf32>
    %351 = arith.addf %349, %350 : vector<8x128xf32>
    %352 = vector.extract_strided_slice %235 {offsets = [4, 0, 0], sizes = [1, 8, 384], strides = [1, 1, 1]} : vector<8x8x384xf32> to vector<1x8x384xf32>
    %353 = vector.shape_cast %352 : vector<1x8x384xf32> to vector<8x384xf32>
    %354 = vector.extract_strided_slice %238 {offsets = [3, 0, 0], sizes = [1, 8, 384], strides = [1, 1, 1]} : vector<8x8x384xf32> to vector<1x8x384xf32>
    %355 = vector.shape_cast %354 : vector<1x8x384xf32> to vector<8x384xf32>
    %356 = arith.addf %353, %355 : vector<8x384xf32>
    %cst_79 = arith.constant dense<0.000000e+00> : vector<8x384xf32>
    %357 = tpu.matmul %351, %239, %cst_79 {dimension_numbers = #tpu.dot_dimension_numbers<[1], [0], [0], [1], [0, 0, 1, 1], [], []>} : vector<8x128xf32>, vector<128x384xf32>, vector<8x384xf32> -> vector<8x384xf32>
    %358 = vector.extract_strided_slice %356 {offsets = [0, 0], sizes = [8, 256], strides = [1, 1]} : vector<8x384xf32> to vector<8x256xf32>
    %359 = vector.extract_strided_slice %357 {offsets = [0, 0], sizes = [8, 256], strides = [1, 1]} : vector<8x384xf32> to vector<8x256xf32>
    %360 = arith.addf %358, %359 : vector<8x256xf32>
    %361 = arith.negf %360 : vector<8x256xf32>
    %362 = math.exp %361 : vector<8x256xf32>
    %cst_80 = arith.constant 1.000000e+00 : f32
    %363 = vector.broadcast %cst_80 : f32 to vector<8x256xf32>
    %364 = arith.addf %363, %362 : vector<8x256xf32>
    %365 = arith.divf %363, %364 : vector<8x256xf32>
    %366 = vector.extract_strided_slice %365 {offsets = [0, 0], sizes = [8, 128], strides = [1, 1]} : vector<8x256xf32> to vector<8x128xf32>
    %367 = vector.extract_strided_slice %365 {offsets = [0, 128], sizes = [8, 128], strides = [1, 1]} : vector<8x256xf32> to vector<8x128xf32>
    %368 = vector.extract_strided_slice %356 {offsets = [0, 256], sizes = [8, 128], strides = [1, 1]} : vector<8x384xf32> to vector<8x128xf32>
    %369 = vector.extract_strided_slice %357 {offsets = [0, 256], sizes = [8, 128], strides = [1, 1]} : vector<8x384xf32> to vector<8x128xf32>
    %370 = arith.addf %369, %242 : vector<8x128xf32>
    %371 = arith.mulf %366, %370 : vector<8x128xf32>
    %372 = arith.addf %368, %371 : vector<8x128xf32>
    %373 = math.tanh %372 : vector<8x128xf32>
    %cst_81 = arith.constant 1.000000e+00 : f32
    %374 = vector.broadcast %cst_81 : f32 to vector<8x128xf32>
    %375 = arith.subf %374, %367 : vector<8x128xf32>
    %376 = arith.mulf %375, %373 : vector<8x128xf32>
    %377 = arith.mulf %367, %351 : vector<8x128xf32>
    %378 = arith.addf %376, %377 : vector<8x128xf32>
    %379 = vector.extract_strided_slice %235 {offsets = [5, 0, 0], sizes = [1, 8, 384], strides = [1, 1, 1]} : vector<8x8x384xf32> to vector<1x8x384xf32>
    %380 = vector.shape_cast %379 : vector<1x8x384xf32> to vector<8x384xf32>
    %381 = vector.extract_strided_slice %238 {offsets = [2, 0, 0], sizes = [1, 8, 384], strides = [1, 1, 1]} : vector<8x8x384xf32> to vector<1x8x384xf32>
    %382 = vector.shape_cast %381 : vector<1x8x384xf32> to vector<8x384xf32>
    %383 = arith.addf %380, %382 : vector<8x384xf32>
    %cst_82 = arith.constant dense<0.000000e+00> : vector<8x384xf32>
    %384 = tpu.matmul %378, %239, %cst_82 {dimension_numbers = #tpu.dot_dimension_numbers<[1], [0], [0], [1], [0, 0, 1, 1], [], []>} : vector<8x128xf32>, vector<128x384xf32>, vector<8x384xf32> -> vector<8x384xf32>
    %385 = vector.extract_strided_slice %383 {offsets = [0, 0], sizes = [8, 256], strides = [1, 1]} : vector<8x384xf32> to vector<8x256xf32>
    %386 = vector.extract_strided_slice %384 {offsets = [0, 0], sizes = [8, 256], strides = [1, 1]} : vector<8x384xf32> to vector<8x256xf32>
    %387 = arith.addf %385, %386 : vector<8x256xf32>
    %388 = arith.negf %387 : vector<8x256xf32>
    %389 = math.exp %388 : vector<8x256xf32>
    %cst_83 = arith.constant 1.000000e+00 : f32
    %390 = vector.broadcast %cst_83 : f32 to vector<8x256xf32>
    %391 = arith.addf %390, %389 : vector<8x256xf32>
    %392 = arith.divf %390, %391 : vector<8x256xf32>
    %393 = vector.extract_strided_slice %392 {offsets = [0, 0], sizes = [8, 128], strides = [1, 1]} : vector<8x256xf32> to vector<8x128xf32>
    %394 = vector.extract_strided_slice %392 {offsets = [0, 128], sizes = [8, 128], strides = [1, 1]} : vector<8x256xf32> to vector<8x128xf32>
    %395 = vector.extract_strided_slice %383 {offsets = [0, 256], sizes = [8, 128], strides = [1, 1]} : vector<8x384xf32> to vector<8x128xf32>
    %396 = vector.extract_strided_slice %384 {offsets = [0, 256], sizes = [8, 128], strides = [1, 1]} : vector<8x384xf32> to vector<8x128xf32>
    %397 = arith.addf %396, %242 : vector<8x128xf32>
    %398 = arith.mulf %393, %397 : vector<8x128xf32>
    %399 = arith.addf %395, %398 : vector<8x128xf32>
    %400 = math.tanh %399 : vector<8x128xf32>
    %cst_84 = arith.constant 1.000000e+00 : f32
    %401 = vector.broadcast %cst_84 : f32 to vector<8x128xf32>
    %402 = arith.subf %401, %394 : vector<8x128xf32>
    %403 = arith.mulf %402, %400 : vector<8x128xf32>
    %404 = arith.mulf %394, %378 : vector<8x128xf32>
    %405 = arith.addf %403, %404 : vector<8x128xf32>
    %406 = vector.extract_strided_slice %235 {offsets = [6, 0, 0], sizes = [1, 8, 384], strides = [1, 1, 1]} : vector<8x8x384xf32> to vector<1x8x384xf32>
    %407 = vector.shape_cast %406 : vector<1x8x384xf32> to vector<8x384xf32>
    %408 = vector.extract_strided_slice %238 {offsets = [1, 0, 0], sizes = [1, 8, 384], strides = [1, 1, 1]} : vector<8x8x384xf32> to vector<1x8x384xf32>
    %409 = vector.shape_cast %408 : vector<1x8x384xf32> to vector<8x384xf32>
    %410 = arith.addf %407, %409 : vector<8x384xf32>
    %cst_85 = arith.constant dense<0.000000e+00> : vector<8x384xf32>
    %411 = tpu.matmul %405, %239, %cst_85 {dimension_numbers = #tpu.dot_dimension_numbers<[1], [0], [0], [1], [0, 0, 1, 1], [], []>} : vector<8x128xf32>, vector<128x384xf32>, vector<8x384xf32> -> vector<8x384xf32>
    %412 = vector.extract_strided_slice %410 {offsets = [0, 0], sizes = [8, 256], strides = [1, 1]} : vector<8x384xf32> to vector<8x256xf32>
    %413 = vector.extract_strided_slice %411 {offsets = [0, 0], sizes = [8, 256], strides = [1, 1]} : vector<8x384xf32> to vector<8x256xf32>
    %414 = arith.addf %412, %413 : vector<8x256xf32>
    %415 = arith.negf %414 : vector<8x256xf32>
    %416 = math.exp %415 : vector<8x256xf32>
    %cst_86 = arith.constant 1.000000e+00 : f32
    %417 = vector.broadcast %cst_86 : f32 to vector<8x256xf32>
    %418 = arith.addf %417, %416 : vector<8x256xf32>
    %419 = arith.divf %417, %418 : vector<8x256xf32>
    %420 = vector.extract_strided_slice %419 {offsets = [0, 0], sizes = [8, 128], strides = [1, 1]} : vector<8x256xf32> to vector<8x128xf32>
    %421 = vector.extract_strided_slice %419 {offsets = [0, 128], sizes = [8, 128], strides = [1, 1]} : vector<8x256xf32> to vector<8x128xf32>
    %422 = vector.extract_strided_slice %410 {offsets = [0, 256], sizes = [8, 128], strides = [1, 1]} : vector<8x384xf32> to vector<8x128xf32>
    %423 = vector.extract_strided_slice %411 {offsets = [0, 256], sizes = [8, 128], strides = [1, 1]} : vector<8x384xf32> to vector<8x128xf32>
    %424 = arith.addf %423, %242 : vector<8x128xf32>
    %425 = arith.mulf %420, %424 : vector<8x128xf32>
    %426 = arith.addf %422, %425 : vector<8x128xf32>
    %427 = math.tanh %426 : vector<8x128xf32>
    %cst_87 = arith.constant 1.000000e+00 : f32
    %428 = vector.broadcast %cst_87 : f32 to vector<8x128xf32>
    %429 = arith.subf %428, %421 : vector<8x128xf32>
    %430 = arith.mulf %429, %427 : vector<8x128xf32>
    %431 = arith.mulf %421, %405 : vector<8x128xf32>
    %432 = arith.addf %430, %431 : vector<8x128xf32>
    %433 = vector.extract_strided_slice %235 {offsets = [7, 0, 0], sizes = [1, 8, 384], strides = [1, 1, 1]} : vector<8x8x384xf32> to vector<1x8x384xf32>
    %434 = vector.shape_cast %433 : vector<1x8x384xf32> to vector<8x384xf32>
    %435 = vector.extract_strided_slice %238 {offsets = [0, 0, 0], sizes = [1, 8, 384], strides = [1, 1, 1]} : vector<8x8x384xf32> to vector<1x8x384xf32>
    %436 = vector.shape_cast %435 : vector<1x8x384xf32> to vector<8x384xf32>
    %437 = arith.addf %434, %436 : vector<8x384xf32>
    %cst_88 = arith.constant dense<0.000000e+00> : vector<8x384xf32>
    %438 = tpu.matmul %432, %239, %cst_88 {dimension_numbers = #tpu.dot_dimension_numbers<[1], [0], [0], [1], [0, 0, 1, 1], [], []>} : vector<8x128xf32>, vector<128x384xf32>, vector<8x384xf32> -> vector<8x384xf32>
    %439 = vector.extract_strided_slice %437 {offsets = [0, 0], sizes = [8, 256], strides = [1, 1]} : vector<8x384xf32> to vector<8x256xf32>
    %440 = vector.extract_strided_slice %438 {offsets = [0, 0], sizes = [8, 256], strides = [1, 1]} : vector<8x384xf32> to vector<8x256xf32>
    %441 = arith.addf %439, %440 : vector<8x256xf32>
    %442 = arith.negf %441 : vector<8x256xf32>
    %443 = math.exp %442 : vector<8x256xf32>
    %cst_89 = arith.constant 1.000000e+00 : f32
    %444 = vector.broadcast %cst_89 : f32 to vector<8x256xf32>
    %445 = arith.addf %444, %443 : vector<8x256xf32>
    %446 = arith.divf %444, %445 : vector<8x256xf32>
    %447 = vector.extract_strided_slice %446 {offsets = [0, 0], sizes = [8, 128], strides = [1, 1]} : vector<8x256xf32> to vector<8x128xf32>
    %448 = vector.extract_strided_slice %446 {offsets = [0, 128], sizes = [8, 128], strides = [1, 1]} : vector<8x256xf32> to vector<8x128xf32>
    %449 = vector.extract_strided_slice %437 {offsets = [0, 256], sizes = [8, 128], strides = [1, 1]} : vector<8x384xf32> to vector<8x128xf32>
    %450 = vector.extract_strided_slice %438 {offsets = [0, 256], sizes = [8, 128], strides = [1, 1]} : vector<8x384xf32> to vector<8x128xf32>
    %451 = arith.addf %450, %242 : vector<8x128xf32>
    %452 = arith.mulf %447, %451 : vector<8x128xf32>
    %453 = arith.addf %449, %452 : vector<8x128xf32>
    %454 = math.tanh %453 : vector<8x128xf32>
    %cst_90 = arith.constant 1.000000e+00 : f32
    %455 = vector.broadcast %cst_90 : f32 to vector<8x128xf32>
    %456 = arith.subf %455, %448 : vector<8x128xf32>
    %457 = arith.mulf %456, %454 : vector<8x128xf32>
    %458 = arith.mulf %448, %432 : vector<8x128xf32>
    %459 = arith.addf %457, %458 : vector<8x128xf32>
    %c0_91 = arith.constant 0 : index
    %c0_92 = arith.constant 0 : index
    %460 = vector.load %arg10[%c0_91, %c0_92] : memref<128x2xf32, #tpu.memory_space<vmem>>, vector<128x2xf32>
    %cst_93 = arith.constant dense<0.000000e+00> : vector<8x2xf32>
    %461 = tpu.matmul %459, %460, %cst_93 {dimension_numbers = #tpu.dot_dimension_numbers<[1], [0], [0], [1], [0, 0, 1, 1], [], []>} : vector<8x128xf32>, vector<128x2xf32>, vector<8x2xf32> -> vector<8x2xf32>
    %c0_94 = arith.constant 0 : index
    %c0_95 = arith.constant 0 : index
    %462 = vector.load %arg11[%c0_94, %c0_95] : memref<1x2xf32, #tpu.memory_space<vmem>>, vector<1x2xf32>
    %463 = vector.broadcast %462 : vector<1x2xf32> to vector<8x2xf32>
    %464 = arith.addf %461, %463 : vector<8x2xf32>
    %c0_96 = arith.constant 0 : index
    %c0_97 = arith.constant 0 : index
    %465 = vector.load %arg12[%c0_96, %c0_97] : memref<8x2xf32, #tpu.memory_space<vmem>>, vector<8x2xf32>
    tpu.vector_store %arg12[%c0_96, %c0_97], %464 {strides = array<i32>} : memref<8x2xf32, #tpu.memory_space<vmem>>, vector<8x2xf32>,
    return
  }
}

</mosaic_0001>

<llo_original>
// kernel: tpu_custom_call.1
$region0: #{tpu_custom_call.1}
  #allocation0 [shape = 'u32[]', space=smem, size = 0x4, offset = 0x4, fixed_abs, tag = 'smem constant byte address 0x4 - core index']
  #allocation1 [shape = 'u32[144,128]{1,0:T(1,128)}', space=vmem, size = 0x12000, scoped, tag = 'internal scratch']
  #allocation2 [shape = 'f32[8,8,128]{2,1,0:T(8,128)}', space=vmem, size = 0x8000, scoped, tag = 'scratch operand']
  %s0 = inlined_call_operand.vmem [shape: f32[64,8], index: 0, kind: input, shape index: {}]
  %s1 = inlined_call_operand.vmem [shape: f32[8,384], index: 1, kind: input, shape index: {}]
  %s2 = inlined_call_operand.hbm [shape: f32[128,384], index: 2, kind: input, shape index: {}]
  %s3 = inlined_call_operand.vmem [shape: f32[1,384], index: 3, kind: input, shape index: {}]
  %s4 = inlined_call_operand.vmem [shape: f32[1,128], index: 4, kind: input, shape index: {}]
  %s5 = inlined_call_operand.hbm [shape: f32[128,384], index: 5, kind: input, shape index: {}]
  %s6 = inlined_call_operand.hbm [shape: f32[128,384], index: 6, kind: input, shape index: {}]
  %s7 = inlined_call_operand.hbm [shape: f32[128,384], index: 7, kind: input, shape index: {}]
  %s8 = inlined_call_operand.vmem [shape: f32[1,384], index: 8, kind: input, shape index: {}]
  %s9 = inlined_call_operand.vmem [shape: f32[1,128], index: 9, kind: input, shape index: {}]
  %s10 = inlined_call_operand.vmem [shape: f32[128,2], index: 10, kind: input, shape index: {}]
  %s11 = inlined_call_operand.vmem [shape: f32[1,2], index: 11, kind: input, shape index: {}]
  %s12 = inlined_call_operand.vmem [shape: f32[8,2], index: 12, kind: output, shape index: {}]
  %s13 = sld [smem:[#allocation0]]
  $region74: #{tpu_custom_call.1} parent=0
    _
  %s15 = ssub.s32 1, %s13
  %s16 = scalar_select 0, %s15, %s13
  $region1: #{tpu_custom_call.1} parent=0
    #allocation3 [shape = 'u8[196608]{0}', space=vmem, size = 0x30000, scoped, tag = 'input window, operand 2, single buffered']
    #allocation4 [shape = 's32[1]{0}', space=sflag, size = 0x4, scoped, tag = 'scoped memory for tpu_custom_call.1']
    #allocation5 [shape = 'u8[196608]{0}', space=vmem, size = 0x30000, scoped, tag = 'input window, operand 5, single buffered']
    #allocation6 [shape = 's32[1]{0}', space=sflag, size = 0x4, scoped, tag = 'scoped memory for tpu_custom_call.1']
    #allocation7 [shape = 'u8[196608]{0}', space=vmem, size = 0x30000, scoped, tag = 'input window, operand 6, single buffered']
    #allocation8 [shape = 'u8[196608]{0}', space=vmem, size = 0x30000, scoped, tag = 'input window, operand 7, single buffered']
    #allocation9 [shape = 's32[1]{0}', space=sflag, size = 0x4, scoped, tag = 'scoped memory for tpu_custom_call.1']
    %17 = vsyncpa [#allocation4], 0
    %18 = vsyncpa [#allocation6], 0
    %19 = vsyncpa [#allocation9], 0
    // Predicated region
    $region2: #{tpu_custom_call.1} parent=1 // pred_check
      _
    $region3: #{tpu_custom_call.1} parent=1 // pred_check_branch
      %21 = sbr.rel (0) target = $region5
    $region4: #{tpu_custom_call.1} parent=1 // pred_region
      _
    $region5: #{tpu_custom_call.1} parent=1 // pred_fallthru
      _
    // Predicated region
    $region6: #{tpu_custom_call.1} parent=1 // pred_check
      _
    $region7: #{tpu_custom_call.1} parent=1 // pred_check_branch
      %23 = sbr.rel (0) target = $region9
    $region8: #{tpu_custom_call.1} parent=1 // pred_region
      _
    $region9: #{tpu_custom_call.1} parent=1 // pred_fallthru
      _
    // Predicated region
    $region10: #{tpu_custom_call.1} parent=1 // pred_check
      _
    $region11: #{tpu_custom_call.1} parent=1 // pred_check_branch
      %25 = sbr.rel (0) target = $region13
    $region12: #{tpu_custom_call.1} parent=1 // pred_region
      %s27 = ssub.s32 6144, 6144
      %28 = vsyncadd [#allocation4], %s27
      %s29 = sshll.u32 [#allocation3], 4
      %s30 = int_to_ptr.vmem [resolvable:$true] %s29
      %35 = dma.hbm_to_vmem [thread:$0]  %s2, 6144, %s30, [#allocation4], 384, 384, 24
    $region13: #{tpu_custom_call.1} parent=1 // pred_fallthru
      _
    // Predicated region
    $region14: #{tpu_custom_call.1} parent=1 // pred_check
      _
    $region15: #{tpu_custom_call.1} parent=1 // pred_check_branch
      %37 = sbr.rel (0) target = $region17
    $region16: #{tpu_custom_call.1} parent=1 // pred_region
      _
    $region17: #{tpu_custom_call.1} parent=1 // pred_fallthru
      _
    // Predicated region
    $region18: #{tpu_custom_call.1} parent=1 // pred_check
      _
    $region19: #{tpu_custom_call.1} parent=1 // pred_check_branch
      %39 = sbr.rel (0) target = $region21
    $region20: #{tpu_custom_call.1} parent=1 // pred_region
      _
    $region21: #{tpu_custom_call.1} parent=1 // pred_fallthru
      _
    // Predicated region
    $region22: #{tpu_custom_call.1} parent=1 // pred_check
      _
    $region23: #{tpu_custom_call.1} parent=1 // pred_check_branch
      %41 = sbr.rel (0) target = $region25
    $region24: #{tpu_custom_call.1} parent=1 // pred_region
      %s43 = ssub.s32 6144, 6144
      %44 = vsyncadd [#allocation6], %s43
      %s45 = sshll.u32 [#allocation5], 4
      %s46 = int_to_ptr.vmem [resolvable:$true] %s45
      %51 = dma.hbm_to_vmem [thread:$0]  %s5, 6144, %s46, [#allocation6], 384, 384, 24
    $region25: #{tpu_custom_call.1} parent=1 // pred_fallthru
      _
    // Predicated region
    $region26: #{tpu_custom_call.1} parent=1 // pred_check
      _
    $region27: #{tpu_custom_call.1} parent=1 // pred_check_branch
      %53 = sbr.rel (0) target = $region29
    $region28: #{tpu_custom_call.1} parent=1 // pred_region
      %s55 = ssub.s32 6144, 6144
      %56 = vsyncadd [#allocation6], %s55
      %s57 = sshll.u32 [#allocation7], 4
      %s58 = int_to_ptr.vmem [resolvable:$true] %s57
      %63 = dma.hbm_to_vmem [thread:$0]  %s6, 6144, %s58, [#allocation6], 384, 384, 24
    $region29: #{tpu_custom_call.1} parent=1 // pred_fallthru
      _
    // Predicated region
    $region30: #{tpu_custom_call.1} parent=1 // pred_check
      _
    $region31: #{tpu_custom_call.1} parent=1 // pred_check_branch
      %65 = sbr.rel (0) target = $region33
    $region32: #{tpu_custom_call.1} parent=1 // pred_region
      %s67 = ssub.s32 6144, 6144
      %68 = vsyncadd [#allocation9], %s67
      %s69 = sshll.u32 [#allocation8], 4
      %s70 = int_to_ptr.vmem [resolvable:$true] %s69
      %75 = dma.hbm_to_vmem [thread:$0]  %s7, 6144, %s70, [#allocation9], 384, 384, 24
    $region33: #{tpu_custom_call.1} parent=1 // pred_fallthru
      _
    // Predicated region
    $region34: #{tpu_custom_call.1} parent=1 // pred_check
      _
    $region35: #{tpu_custom_call.1} parent=1 // pred_check_branch
      %77 = sbr.rel (0) target = $region37
    $region36: #{tpu_custom_call.1} parent=1 // pred_region
      _
    $region37: #{tpu_custom_call.1} parent=1 // pred_fallthru
      _
    // Predicated region
    $region38: #{tpu_custom_call.1} parent=1 // pred_check
      _
    $region39: #{tpu_custom_call.1} parent=1 // pred_check_branch
      %79 = sbr.rel (0) target = $region41
    $region40: #{tpu_custom_call.1} parent=1 // pred_region
      _
    $region41: #{tpu_custom_call.1} parent=1 // pred_fallthru
      _
    // Predicated region
    $region42: #{tpu_custom_call.1} parent=1 // pred_check
      _
    $region43: #{tpu_custom_call.1} parent=1 // pred_check_branch
      %81 = sbr.rel (0) target = $region45
    $region44: #{tpu_custom_call.1} parent=1 // pred_region
      _
    $region45: #{tpu_custom_call.1} parent=1 // pred_fallthru
      _
    // Predicated region
    $region46: #{tpu_custom_call.1} parent=1 // pred_check
      _
    $region47: #{tpu_custom_call.1} parent=1 // pred_check_branch
      %83 = sbr.rel (0) target = $region49
    $region48: #{tpu_custom_call.1} parent=1 // pred_region
      _
    $region49: #{tpu_custom_call.1} parent=1 // pred_fallthru
      _
    // Predicated region
    $region50: #{tpu_custom_call.1} parent=1 // pred_check
      _
    $region51: #{tpu_custom_call.1} parent=1 // pred_check_branch
      %85 = sbr.rel (0) target = $region53
    $region52: #{tpu_custom_call.1} parent=1 // pred_region
      %86 = dma.done [#allocation4], 6144
    $region53: #{tpu_custom_call.1} parent=1 // pred_fallthru
      _
    // Predicated region
    $region54: #{tpu_custom_call.1} parent=1 // pred_check
      _
    $region55: #{tpu_custom_call.1} parent=1 // pred_check_branch
      %88 = sbr.rel (0) target = $region57
    $region56: #{tpu_custom_call.1} parent=1 // pred_region
      %89 = dma.done [#allocation6], 6144
    $region57: #{tpu_custom_call.1} parent=1 // pred_fallthru
      _
    // Predicated region
    $region58: #{tpu_custom_call.1} parent=1 // pred_check
      _
    $region59: #{tpu_custom_call.1} parent=1 // pred_check_branch
      %91 = sbr.rel (0) target = $region61
    $region60: #{tpu_custom_call.1} parent=1 // pred_region
      %92 = dma.done [#allocation6], 6144
    $region61: #{tpu_custom_call.1} parent=1 // pred_fallthru
      _
    // Predicated region
    $region62: #{tpu_custom_call.1} parent=1 // pred_check
      _
    $region63: #{tpu_custom_call.1} parent=1 // pred_check_branch
      %94 = sbr.rel (0) target = $region65
    $region64: #{tpu_custom_call.1} parent=1 // pred_region
      %95 = dma.done [#allocation9], 6144
    $region65: #{tpu_custom_call.1} parent=1 // pred_fallthru
      _
    %v96 = vld [vmem:[%s0] sm:$0xff]
    %v97 = vld [vmem:[%s0 + $0x8] sm:$0xff]
    %v98 = vld [vmem:[%s0 + $0x10] sm:$0xff]
    %v99 = vld [vmem:[%s0 + $0x18] sm:$0xff]
    %v100 = vld [vmem:[%s0 + $0x20] sm:$0xff]
    %v101 = vld [vmem:[%s0 + $0x28] sm:$0xff]
    %v102 = vld [vmem:[%s0 + $0x30] sm:$0xff]
    %v103 = vld [vmem:[%s0 + $0x38] sm:$0xff]
    %v104 = vld [vmem:[%s1] sm:$0xff]
    %v105 = vld [vmem:[%s1 + $0x8] sm:$0xff]
    %v106 = vld [vmem:[%s1 + $0x10] sm:$0xff]
    %v107 = vld [vmem:[%s3] sm:$0x7]
    %v109 = vlaneseq
    %v110 = vshrl.u32 %v109, 7
    %v111 = vsub.s32 0, %v110
    %v112 = vrot.slane %v107, %v111
    %v113 = vlaneseq
    %v114 = vshrl.u32 %v113, 7
    %v115 = vsub.s32 1, %v114
    %v116 = vrot.slane %v107, %v115
    %v117 = vlaneseq
    %v118 = vshrl.u32 %v117, 7
    %v119 = vsub.s32 2, %v118
    %v120 = vrot.slane %v107, %v119
    %vm124 = vcmask 64512
    %v126 = vsel %vm124, %v96, 0
    %v129 = vsel %vm124, %v97, 0
    %v132 = vsel %vm124, %v98, 0
    %v135 = vsel %vm124, %v99, 0
    %v138 = vsel %vm124, %v100, 0
    %v141 = vsel %vm124, %v101, 0
    %v144 = vsel %vm124, %v102, 0
    %v147 = vsel %vm124, %v103, 0
    %149 = vmatprep.subr.mxu0 %v105
    %150 = vmatpush1.msra.mxu0 %v104
    %151 = vmatprep.subr.mxu0 0.0
    %152 = vmatpush1.msra.mxu0 0.0
    %153 = vmatprep.subr.mxu0 0.0
    %154 = vmatpush1.msra.mxu0 0.0
    %155 = vmatprep.subr.mxu0 0.0
    %156 = vmatpush1.msra.mxu0 0.0
    %157 = vmatprep.subr.mxu0 0.0
    %158 = vmatpush1.msra.mxu0 0.0
    %159 = vmatprep.subr.mxu0 0.0
    %160 = vmatpush1.msra.mxu0 0.0
    %161 = vmatprep.subr.mxu0 0.0
    %162 = vmatpush1.msra.mxu0 0.0
    %163 = vmatprep.subr.mxu0 0.0
    %164 = vmatpush1.msra.mxu0 0.0
    %165 = vmatprep.subr.mxu0 0.0
    %166 = vmatpush1.msra.mxu0 0.0
    %167 = vmatprep.subr.mxu0 0.0
    %168 = vmatpush1.msra.mxu0 0.0
    %169 = vmatprep.subr.mxu0 0.0
    %170 = vmatpush1.msra.mxu0 0.0
    %171 = vmatprep.subr.mxu0 0.0
    %172 = vmatpush1.msra.mxu0 0.0
    %173 = vmatprep.subr.mxu0 0.0
    %174 = vmatpush1.msra.mxu0 0.0
    %175 = vmatprep.subr.mxu0 0.0
    %176 = vmatpush1.msra.mxu0 0.0
    %177 = vmatprep.subr.mxu0 0.0
    %178 = vmatpush1.msra.mxu0 0.0
    %179 = vmatprep.subr.mxu0 0.0
    %180 = vmatpush1.msra.mxu0 0.0
    %181 = vmatprep.subr.mxu0 0.0
    %182 = vmatpush1.msra.mxu0 0.0
    %183 = vmatprep.subr.mxu0 0.0
    %184 = vmatpush1.msra.mxu0 0.0
    %185 = vmatprep.subr.mxu0 0.0
    %186 = vmatpush1.msra.mxu0 0.0
    %187 = vmatprep.subr.mxu0 0.0
    %188 = vmatpush1.msra.mxu0 0.0
    %189 = vmatprep.subr.mxu0 0.0
    %190 = vmatpush1.msra.mxu0 0.0
    %191 = vmatprep.subr.mxu0 0.0
    %192 = vmatpush1.msra.mxu0 0.0
    %193 = vmatprep.subr.mxu0 0.0
    %194 = vmatpush1.msra.mxu0 0.0
    %195 = vmatprep.subr.mxu0 0.0
    %196 = vmatpush1.msra.mxu0 0.0
    %197 = vmatprep.subr.mxu0 0.0
    %198 = vmatpush1.msra.mxu0 0.0
    %199 = vmatprep.subr.mxu0 0.0
    %200 = vmatpush1.msra.mxu0 0.0
    %201 = vmatprep.subr.mxu0 0.0
    %202 = vmatpush1.msra.mxu0 0.0
    %203 = vmatprep.subr.mxu0 0.0
    %204 = vmatpush1.msra.mxu0 0.0
    %205 = vmatprep.subr.mxu0 0.0
    %206 = vmatpush1.msra.mxu0 0.0
    %207 = vmatprep.subr.mxu0 0.0
    %208 = vmatpush1.msra.mxu0 0.0
    %209 = vmatprep.subr.mxu0 0.0
    %210 = vmatpush1.msra.mxu0 0.0
    %211 = vmatprep.subr.mxu0 0.0
    %212 = vmatpush1.msra.mxu0 0.0
    %213 = vmatprep.mubr.f32.mxu0 0.0
    %214 = vmatmul.mubr.f32.gmra.mrb[0].mxu0 %v126
    %v215 = vpop.f32.mrb[0].mxu0
    %v216 = vadd.f32 %v112, %v215
    %v217 = vpop.f32.mrb[0].mxu0
    %v218 = vadd.f32 %v116, %v217
    %219 = vmatprep.mubr.f32.mxu0 0.0
    %220 = vmatmul.mubr.f32.gmra.mrb[0].mxu0 %v129
    %v221 = vpop.f32.mrb[0].mxu0
    %v222 = vadd.f32 %v112, %v221
    %v223 = vpop.f32.mrb[0].mxu0
    %v224 = vadd.f32 %v116, %v223
    %225 = vmatprep.mubr.f32.mxu0 0.0
    %226 = vmatmul.mubr.f32.gmra.mrb[0].mxu0 %v132
    %v227 = vpop.f32.mrb[0].mxu0
    %v228 = vadd.f32 %v112, %v227
    %v229 = vpop.f32.mrb[0].mxu0
    %v230 = vadd.f32 %v116, %v229
    %231 = vmatprep.mubr.f32.mxu0 0.0
    %232 = vmatmul.mubr.f32.gmra.mrb[0].mxu0 %v135
    %v233 = vpop.f32.mrb[0].mxu0
    %v234 = vadd.f32 %v112, %v233
    %v235 = vpop.f32.mrb[0].mxu0
    %v236 = vadd.f32 %v116, %v235
    %237 = vmatprep.mubr.f32.mxu0 0.0
    %238 = vmatmul.mubr.f32.gmra.mrb[0].mxu0 %v138
    %v239 = vpop.f32.mrb[0].mxu0
    %v240 = vadd.f32 %v112, %v239
    %v241 = vpop.f32.mrb[0].mxu0
    %v242 = vadd.f32 %v116, %v241
    %243 = vmatprep.mubr.f32.mxu0 0.0
    %244 = vmatmul.mubr.f32.gmra.mrb[0].mxu0 %v141
    %v245 = vpop.f32.mrb[0].mxu0
    %v246 = vadd.f32 %v112, %v245
    %v247 = vpop.f32.mrb[0].mxu0
    %v248 = vadd.f32 %v116, %v247
    %249 = vmatprep.mubr.f32.mxu0 0.0
    %250 = vmatmul.mubr.f32.gmra.mrb[0].mxu0 %v144
    %v251 = vpop.f32.mrb[0].mxu0
    %v252 = vadd.f32 %v112, %v251
    %v253 = vpop.f32.mrb[0].mxu0
    %v254 = vadd.f32 %v116, %v253
    %255 = vmatprep.mubr.f32.mxu0 0.0
    %256 = vmatmul.mubr.f32.gmra.mrb[0].mxu0 %v147
    %v257 = vpop.f32.mrb[0].mxu0
    %v258 = vadd.f32 %v112, %v257
    %v259 = vpop.f32.mrb[0].mxu0
    %v260 = vadd.f32 %v116, %v259
    %261 = vdwg.mxu0
    %262 = vmatprep.subr.mxu0 0.0
    %263 = vmatpush1.msra.mxu0 %v106
    %264 = vmatprep.subr.mxu0 0.0
    %265 = vmatpush1.msra.mxu0 0.0
    %266 = vmatprep.subr.mxu0 0.0
    %267 = vmatpush1.msra.mxu0 0.0
    %268 = vmatprep.subr.mxu0 0.0
    %269 = vmatpush1.msra.mxu0 0.0
    %270 = vmatprep.subr.mxu0 0.0
    %271 = vmatpush1.msra.mxu0 0.0
    %272 = vmatprep.subr.mxu0 0.0
    %273 = vmatpush1.msra.mxu0 0.0
    %274 = vmatprep.subr.mxu0 0.0
    %275 = vmatpush1.msra.mxu0 0.0
    %276 = vmatprep.subr.mxu0 0.0
    %277 = vmatpush1.msra.mxu0 0.0
    %278 = vmatprep.subr.mxu0 0.0
    %279 = vmatpush1.msra.mxu0 0.0
    %280 = vmatprep.subr.mxu0 0.0
    %281 = vmatpush1.msra.mxu0 0.0
    %282 = vmatprep.subr.mxu0 0.0
    %283 = vmatpush1.msra.mxu0 0.0
    %284 = vmatprep.subr.mxu0 0.0
    %285 = vmatpush1.msra.mxu0 0.0
    %286 = vmatprep.subr.mxu0 0.0
    %287 = vmatpush1.msra.mxu0 0.0
    %288 = vmatprep.subr.mxu0 0.0
    %289 = vmatpush1.msra.mxu0 0.0
    %290 = vmatprep.subr.mxu0 0.0
    %291 = vmatpush1.msra.mxu0 0.0
    %292 = vmatprep.subr.mxu0 0.0
    %293 = vmatpush1.msra.mxu0 0.0
    %294 = vmatprep.subr.mxu0 0.0
    %295 = vmatpush1.msra.mxu0 0.0
    %296 = vmatprep.subr.mxu0 0.0
    %297 = vmatpush1.msra.mxu0 0.0
    %298 = vmatprep.subr.mxu0 0.0
    %299 = vmatpush1.msra.mxu0 0.0
    %300 = vmatprep.subr.mxu0 0.0
    %301 = vmatpush1.msra.mxu0 0.0
    %302 = vmatprep.subr.mxu0 0.0
    %303 = vmatpush1.msra.mxu0 0.0
    %304 = vmatprep.subr.mxu0 0.0
    %305 = vmatpush1.msra.mxu0 0.0
    %306 = vmatprep.subr.mxu0 0.0
    %307 = vmatpush1.msra.mxu0 0.0
    %308 = vmatprep.subr.mxu0 0.0
    %309 = vmatpush1.msra.mxu0 0.0
    %310 = vmatprep.subr.mxu0 0.0
    %311 = vmatpush1.msra.mxu0 0.0
    %312 = vmatprep.subr.mxu0 0.0
    %313 = vmatpush1.msra.mxu0 0.0
    %314 = vmatprep.subr.mxu0 0.0
    %315 = vmatpush1.msra.mxu0 0.0
    %316 = vmatprep.subr.mxu0 0.0
    %317 = vmatpush1.msra.mxu0 0.0
    %318 = vmatprep.subr.mxu0 0.0
    %319 = vmatpush1.msra.mxu0 0.0
    %320 = vmatprep.subr.mxu0 0.0
    %321 = vmatpush1.msra.mxu0 0.0
    %322 = vmatprep.subr.mxu0 0.0
    %323 = vmatpush1.msra.mxu0 0.0
    %324 = vmatprep.subr.mxu0 0.0
    %325 = vmatpush1.msra.mxu0 0.0
    %326 = vmatprep.mubr.f32.mxu0 0.0
    %327 = vmatmul.mubr.f32.gmra.mrb[0].mxu0 %v126
    %v328 = vpop.f32.mrb[0].mxu0
    %v329 = vadd.f32 %v120, %v328
    %v330 = vpop.f32.mrb[0].mxu0
    %331 = vmatprep.mubr.f32.mxu0 0.0
    %332 = vmatmul.mubr.f32.gmra.mrb[0].mxu0 %v129
    %v333 = vpop.f32.mrb[0].mxu0
    %v334 = vadd.f32 %v120, %v333
    %v335 = vpop.f32.mrb[0].mxu0
    %336 = vmatprep.mubr.f32.mxu0 0.0
    %337 = vmatmul.mubr.f32.gmra.mrb[0].mxu0 %v132
    %v338 = vpop.f32.mrb[0].mxu0
    %v339 = vadd.f32 %v120, %v338
    %v340 = vpop.f32.mrb[0].mxu0
    %341 = vmatprep.mubr.f32.mxu0 0.0
    %342 = vmatmul.mubr.f32.gmra.mrb[0].mxu0 %v135
    %v343 = vpop.f32.mrb[0].mxu0
    %v344 = vadd.f32 %v120, %v343
    %v345 = vpop.f32.mrb[0].mxu0
    %346 = vmatprep.mubr.f32.mxu0 0.0
    %347 = vmatmul.mubr.f32.gmra.mrb[0].mxu0 %v138
    %v348 = vpop.f32.mrb[0].mxu0
    %v349 = vadd.f32 %v120, %v348
    %v350 = vpop.f32.mrb[0].mxu0
    %351 = vmatprep.mubr.f32.mxu0 0.0
    %352 = vmatmul.mubr.f32.gmra.mrb[0].mxu0 %v141
    %v353 = vpop.f32.mrb[0].mxu0
    %v354 = vadd.f32 %v120, %v353
    %v355 = vpop.f32.mrb[0].mxu0
    %356 = vmatprep.mubr.f32.mxu0 0.0
    %357 = vmatmul.mubr.f32.gmra.mrb[0].mxu0 %v144
    %v358 = vpop.f32.mrb[0].mxu0
    %v359 = vadd.f32 %v120, %v358
    %v360 = vpop.f32.mrb[0].mxu0
    %361 = vmatprep.mubr.f32.mxu0 0.0
    %362 = vmatmul.mubr.f32.gmra.mrb[0].mxu0 %v147
    %v363 = vpop.f32.mrb[0].mxu0
    %v364 = vadd.f32 %v120, %v363
    %v365 = vpop.f32.mrb[0].mxu0
    %366 = vdwg.mxu0
    %v367 = vld [vmem:[#allocation3] sm:$0xff]
    %v368 = vld [vmem:[#allocation3 + $0x8] sm:$0xff]
    %v369 = vld [vmem:[#allocation3 + $0x10] sm:$0xff]
    %v370 = vld [vmem:[#allocation3 + $0x18] sm:$0xff]
    %v371 = vld [vmem:[#allocation3 + $0x20] sm:$0xff]
    %v372 = vld [vmem:[#allocation3 + $0x28] sm:$0xff]
    %v373 = vld [vmem:[#allocation3 + $0x30] sm:$0xff]
    %v374 = vld [vmem:[#allocation3 + $0x38] sm:$0xff]
    %v375 = vld [vmem:[#allocation3 + $0x40] sm:$0xff]
    %v376 = vld [vmem:[#allocation3 + $0x48] sm:$0xff]
    %v377 = vld [vmem:[#allocation3 + $0x50] sm:$0xff]
    %v378 = vld [vmem:[#allocation3 + $0x58] sm:$0xff]
    %v379 = vld [vmem:[#allocation3 + $0x60] sm:$0xff]
    %v380 = vld [vmem:[#allocation3 + $0x68] sm:$0xff]
    %v381 = vld [vmem:[#allocation3 + $0x70] sm:$0xff]
    %v382 = vld [vmem:[#allocation3 + $0x78] sm:$0xff]
    %v383 = vld [vmem:[#allocation3 + $0x80] sm:$0xff]
    %v384 = vld [vmem:[#allocation3 + $0x88] sm:$0xff]
    %v385 = vld [vmem:[#allocation3 + $0x90] sm:$0xff]
    %v386 = vld [vmem:[#allocation3 + $0x98] sm:$0xff]
    %v387 = vld [vmem:[#allocation3 + $0xa0] sm:$0xff]
    %v388 = vld [vmem:[#allocation3 + $0xa8] sm:$0xff]
    %v389 = vld [vmem:[#allocation3 + $0xb0] sm:$0xff]
    %v390 = vld [vmem:[#allocation3 + $0xb8] sm:$0xff]
    %v391 = vld [vmem:[#allocation3 + $0xc0] sm:$0xff]
    %v392 = vld [vmem:[#allocation3 + $0xc8] sm:$0xff]
    %v393 = vld [vmem:[#allocation3 + $0xd0] sm:$0xff]
    %v394 = vld [vmem:[#allocation3 + $0xd8] sm:$0xff]
    %v395 = vld [vmem:[#allocation3 + $0xe0] sm:$0xff]
    %v396 = vld [vmem:[#allocation3 + $0xe8] sm:$0xff]
    %v397 = vld [vmem:[#allocation3 + $0xf0] sm:$0xff]
    %v398 = vld [vmem:[#allocation3 + $0xf8] sm:$0xff]
    %v399 = vld [vmem:[#allocation3 + $0x100] sm:$0xff]
    %v400 = vld [vmem:[#allocation3 + $0x108] sm:$0xff]
    %v401 = vld [vmem:[#allocation3 + $0x110] sm:$0xff]
    %v402 = vld [vmem:[#allocation3 + $0x118] sm:$0xff]
    %v403 = vld [vmem:[#allocation3 + $0x120] sm:$0xff]
    %v404 = vld [vmem:[#allocation3 + $0x128] sm:$0xff]
    %v405 = vld [vmem:[#allocation3 + $0x130] sm:$0xff]
    %v406 = vld [vmem:[#allocation3 + $0x138] sm:$0xff]
    %v407 = vld [vmem:[#allocation3 + $0x140] sm:$0xff]
    %v408 = vld [vmem:[#allocation3 + $0x148] sm:$0xff]
    %v409 = vld [vmem:[#allocation3 + $0x150] sm:$0xff]
    %v410 = vld [vmem:[#allocation3 + $0x158] sm:$0xff]
    %v411 = vld [vmem:[#allocation3 + $0x160] sm:$0xff]
    %v412 = vld [vmem:[#allocation3 + $0x168] sm:$0xff]
    %v413 = vld [vmem:[#allocation3 + $0x170] sm:$0xff]
    %v414 = vld [vmem:[#allocation3 + $0x178] sm:$0xff]
    %v415 = vld [vmem:[%s4] sm:$0x1]
    %v417 = vlaneseq
    %v418 = vshrl.u32 %v417, 7
    %v419 = vsub.s32 0, %v418
    %v420 = vrot.slane %v415, %v419
    %422 = vmatprep.subr.mxu0 %v368
    %423 = vmatpush1.msra.mxu0 %v367
    %424 = vmatprep.subr.mxu0 %v371
    %425 = vmatpush1.msra.mxu0 %v370
    %426 = vmatprep.subr.mxu0 %v374
    %427 = vmatpush1.msra.mxu0 %v373
    %428 = vmatprep.subr.mxu0 %v377
    %429 = vmatpush1.msra.mxu0 %v376
    %430 = vmatprep.subr.mxu0 %v380
    %431 = vmatpush1.msra.mxu0 %v379
    %432 = vmatprep.subr.mxu0 %v383
    %433 = vmatpush1.msra.mxu0 %v382
    %434 = vmatprep.subr.mxu0 %v386
    %435 = vmatpush1.msra.mxu0 %v385
    %436 = vmatprep.subr.mxu0 %v389
    %437 = vmatpush1.msra.mxu0 %v388
    %438 = vmatprep.subr.mxu0 %v392
    %439 = vmatpush1.msra.mxu0 %v391
    %440 = vmatprep.subr.mxu0 %v395
    %441 = vmatpush1.msra.mxu0 %v394
    %442 = vmatprep.subr.mxu0 %v398
    %443 = vmatpush1.msra.mxu0 %v397
    %444 = vmatprep.subr.mxu0 %v401
    %445 = vmatpush1.msra.mxu0 %v400
    %446 = vmatprep.subr.mxu0 %v404
    %447 = vmatpush1.msra.mxu0 %v403
    %448 = vmatprep.subr.mxu0 %v407
    %449 = vmatpush1.msra.mxu0 %v406
    %450 = vmatprep.subr.mxu0 %v410
    %451 = vmatpush1.msra.mxu0 %v409
    %452 = vmatprep.subr.mxu0 %v413
    %453 = vmatpush1.msra.mxu0 %v412
    %454 = vmatprep.subr.mxu0 0.0
    %455 = vmatpush1.msra.mxu0 0.0
    %456 = vmatprep.subr.mxu0 0.0
    %457 = vmatpush1.msra.mxu0 0.0
    %458 = vmatprep.subr.mxu0 0.0
    %459 = vmatpush1.msra.mxu0 0.0
    %460 = vmatprep.subr.mxu0 0.0
    %461 = vmatpush1.msra.mxu0 0.0
    %462 = vmatprep.subr.mxu0 0.0
    %463 = vmatpush1.msra.mxu0 0.0
    %464 = vmatprep.subr.mxu0 0.0
    %465 = vmatpush1.msra.mxu0 0.0
    %466 = vmatprep.subr.mxu0 0.0
    %467 = vmatpush1.msra.mxu0 0.0
    %468 = vmatprep.subr.mxu0 0.0
    %469 = vmatpush1.msra.mxu0 0.0
    %470 = vmatprep.subr.mxu0 0.0
    %471 = vmatpush1.msra.mxu0 0.0
    %472 = vmatprep.subr.mxu0 0.0
    %473 = vmatpush1.msra.mxu0 0.0
    %474 = vmatprep.subr.mxu0 0.0
    %475 = vmatpush1.msra.mxu0 0.0
    %476 = vmatprep.subr.mxu0 0.0
    %477 = vmatpush1.msra.mxu0 0.0
    %478 = vmatprep.subr.mxu0 0.0
    %479 = vmatpush1.msra.mxu0 0.0
    %480 = vmatprep.subr.mxu0 0.0
    %481 = vmatpush1.msra.mxu0 0.0
    %482 = vmatprep.subr.mxu0 0.0
    %483 = vmatpush1.msra.mxu0 0.0
    %484 = vmatprep.subr.mxu0 0.0
    %485 = vmatpush1.msra.mxu0 0.0
    %486 = vmatprep.mubr.f32.mxu0 0.0
    %487 = vmatmul.mubr.f32.gmra.mrb[0].mxu0 0.0
    %v488 = vpop.f32.mrb[0].mxu0
    %v489 = vadd.f32 0.0, %v488
    %v490 = vpop.f32.mrb[0].mxu0
    %v491 = vadd.f32 0.0, %v490
    %492 = vdwg.mxu0
    %493 = vmatprep.subr.mxu0 0.0
    %494 = vmatpush1.msra.mxu0 %v369
    %495 = vmatprep.subr.mxu0 0.0
    %496 = vmatpush1.msra.mxu0 %v372
    %497 = vmatprep.subr.mxu0 0.0
    %498 = vmatpush1.msra.mxu0 %v375
    %499 = vmatprep.subr.mxu0 0.0
    %500 = vmatpush1.msra.mxu0 %v378
    %501 = vmatprep.subr.mxu0 0.0
    %502 = vmatpush1.msra.mxu0 %v381
    %503 = vmatprep.subr.mxu0 0.0
    %504 = vmatpush1.msra.mxu0 %v384
    %505 = vmatprep.subr.mxu0 0.0
    %506 = vmatpush1.msra.mxu0 %v387
    %507 = vmatprep.subr.mxu0 0.0
    %508 = vmatpush1.msra.mxu0 %v390
    %509 = vmatprep.subr.mxu0 0.0
    %510 = vmatpush1.msra.mxu0 %v393
    %511 = vmatprep.subr.mxu0 0.0
    %512 = vmatpush1.msra.mxu0 %v396
    %513 = vmatprep.subr.mxu0 0.0
    %514 = vmatpush1.msra.mxu0 %v399
    %515 = vmatprep.subr.mxu0 0.0
    %516 = vmatpush1.msra.mxu0 %v402
    %517 = vmatprep.subr.mxu0 0.0
    %518 = vmatpush1.msra.mxu0 %v405
    %519 = vmatprep.subr.mxu0 0.0
    %520 = vmatpush1.msra.mxu0 %v408
    %521 = vmatprep.subr.mxu0 0.0
    %522 = vmatpush1.msra.mxu0 %v411
    %523 = vmatprep.subr.mxu0 0.0
    %524 = vmatpush1.msra.mxu0 %v414
    %525 = vmatprep.subr.mxu0 0.0
    %526 = vmatpush1.msra.mxu0 0.0
    %527 = vmatprep.subr.mxu0 0.0
    %528 = vmatpush1.msra.mxu0 0.0
    %529 = vmatprep.subr.mxu0 0.0
    %530 = vmatpush1.msra.mxu0 0.0
    %531 = vmatprep.subr.mxu0 0.0
    %532 = vmatpush1.msra.mxu0 0.0
    %533 = vmatprep.subr.mxu0 0.0
    %534 = vmatpush1.msra.mxu0 0.0
    %535 = vmatprep.subr.mxu0 0.0
    %536 = vmatpush1.msra.mxu0 0.0
    %537 = vmatprep.subr.mxu0 0.0
    %538 = vmatpush1.msra.mxu0 0.0
    %539 = vmatprep.subr.mxu0 0.0
    %540 = vmatpush1.msra.mxu0 0.0
    %541 = vmatprep.subr.mxu0 0.0
    %542 = vmatpush1.msra.mxu0 0.0
    %543 = vmatprep.subr.mxu0 0.0
    %544 = vmatpush1.msra.mxu0 0.0
    %545 = vmatprep.subr.mxu0 0.0
    %546 = vmatpush1.msra.mxu0 0.0
    %547 = vmatprep.subr.mxu0 0.0
    %548 = vmatpush1.msra.mxu0 0.0
    %549 = vmatprep.subr.mxu0 0.0
    %550 = vmatpush1.msra.mxu0 0.0
    %551 = vmatprep.subr.mxu0 0.0
    %552 = vmatpush1.msra.mxu0 0.0
    %553 = vmatprep.subr.mxu0 0.0
    %554 = vmatpush1.msra.mxu0 0.0
    %555 = vmatprep.subr.mxu0 0.0
    %556 = vmatpush1.msra.mxu0 0.0
    %557 = vmatprep.mubr.f32.mxu0 0.0
    %558 = vmatmul.mubr.f32.gmra.mrb[0].mxu0 0.0
    %v559 = vpop.f32.mrb[0].mxu0
    %v560 = vadd.f32 0.0, %v559
    %v561 = vpop.f32.mrb[0].mxu0
    %562 = vdwg.mxu0
    %v563 = vadd.f32 %v216, %v489
    %v564 = vadd.f32 %v218, %v491
    %v565 = vxor.u32 %v563, 2147483648
    %v566 = vxor.u32 %v564, 2147483648
    %v567 = vmul.f32 %v565, 1.442695
    %v568 = vpow.pop %v567
    %v569 = vmul.f32 %v566, 1.442695
    %v570 = vpow.pop %v569
    %v571 = vadd.f32 %v568, 1.0
    %v572 = vadd.f32 %v570, 1.0
    %v573 = vrcp.pop %v571
    %v574 = vmul.f32 1.0, %v573
    %v575 = vrcp.pop %v572
    %v576 = vmul.f32 1.0, %v575
    %v577 = vadd.f32 %v560, %v420
    %v578 = vmul.f32 %v574, %v577
    %v579 = vadd.f32 %v329, %v578
    %v580 = vtanh.pop %v579
    %v581 = vsub.f32 1.0, %v576
    %v582 = vmul.f32 %v581, %v580
    %v583 = vmul.f32 %v576, 0.0
    %v584 = vadd.f32 %v582, %v583
    %585 = vst [vmem:[#allocation2] sm:$0xff] %v584
    %586 = vmatprep.subr.mxu0 %v368
    %587 = vmatpush1.msra.mxu0 %v367
    %588 = vmatprep.subr.mxu0 %v371
    %589 = vmatpush1.msra.mxu0 %v370
    %590 = vmatprep.subr.mxu0 %v374
    %591 = vmatpush1.msra.mxu0 %v373
    %592 = vmatprep.subr.mxu0 %v377
    %593 = vmatpush1.msra.mxu0 %v376
    %594 = vmatprep.subr.mxu0 %v380
    %595 = vmatpush1.msra.mxu0 %v379
    %596 = vmatprep.subr.mxu0 %v383
    %597 = vmatpush1.msra.mxu0 %v382
    %598 = vmatprep.subr.mxu0 %v386
    %599 = vmatpush1.msra.mxu0 %v385
    %600 = vmatprep.subr.mxu0 %v389
    %601 = vmatpush1.msra.mxu0 %v388
    %602 = vmatprep.subr.mxu0 %v392
    %603 = vmatpush1.msra.mxu0 %v391
    %604 = vmatprep.subr.mxu0 %v395
    %605 = vmatpush1.msra.mxu0 %v394
    %606 = vmatprep.subr.mxu0 %v398
    %607 = vmatpush1.msra.mxu0 %v397
    %608 = vmatprep.subr.mxu0 %v401
    %609 = vmatpush1.msra.mxu0 %v400
    %610 = vmatprep.subr.mxu0 %v404
    %611 = vmatpush1.msra.mxu0 %v403
    %612 = vmatprep.subr.mxu0 %v407
    %613 = vmatpush1.msra.mxu0 %v406
    %614 = vmatprep.subr.mxu0 %v410
    %615 = vmatpush1.msra.mxu0 %v409
    %616 = vmatprep.subr.mxu0 %v413
    %617 = vmatpush1.msra.mxu0 %v412
    %618 = vmatprep.subr.mxu0 0.0
    %619 = vmatpush1.msra.mxu0 0.0
    %620 = vmatprep.subr.mxu0 0.0
    %621 = vmatpush1.msra.mxu0 0.0
    %622 = vmatprep.subr.mxu0 0.0
    %623 = vmatpush1.msra.mxu0 0.0
    %624 = vmatprep.subr.mxu0 0.0
    %625 = vmatpush1.msra.mxu0 0.0
    %626 = vmatprep.subr.mxu0 0.0
    %627 = vmatpush1.msra.mxu0 0.0
    %628 = vmatprep.subr.mxu0 0.0
    %629 = vmatpush1.msra.mxu0 0.0
    %630 = vmatprep.subr.mxu0 0.0
    %631 = vmatpush1.msra.mxu0 0.0
    %632 = vmatprep.subr.mxu0 0.0
    %633 = vmatpush1.msra.mxu0 0.0
    %634 = vmatprep.subr.mxu0 0.0
    %635 = vmatpush1.msra.mxu0 0.0
    %636 = vmatprep.subr.mxu0 0.0
    %637 = vmatpush1.msra.mxu0 0.0
    %638 = vmatprep.subr.mxu0 0.0
    %639 = vmatpush1.msra.mxu0 0.0
    %640 = vmatprep.subr.mxu0 0.0
    %641 = vmatpush1.msra.mxu0 0.0
    %642 = vmatprep.subr.mxu0 0.0
    %643 = vmatpush1.msra.mxu0 0.0
    %644 = vmatprep.subr.mxu0 0.0
    %645 = vmatpush1.msra.mxu0 0.0
    %646 = vmatprep.subr.mxu0 0.0
    %647 = vmatpush1.msra.mxu0 0.0
    %648 = vmatprep.subr.mxu0 0.0
    %649 = vmatpush1.msra.mxu0 0.0
    %650 = vmatprep.mubr.f32.mxu0 0.0
    %651 = vmatmul.mubr.f32.gmra.mrb[0].mxu0 %v584
    %v652 = vpop.f32.mrb[0].mxu0
    %v653 = vadd.f32 0.0, %v652
    %v654 = vpop.f32.mrb[0].mxu0
    %v655 = vadd.f32 0.0, %v654
    %656 = vdwg.mxu0
    %657 = vmatprep.subr.mxu0 0.0
    %658 = vmatpush1.msra.mxu0 %v369
    %659 = vmatprep.subr.mxu0 0.0
    %660 = vmatpush1.msra.mxu0 %v372
    %661 = vmatprep.subr.mxu0 0.0
    %662 = vmatpush1.msra.mxu0 %v375
    %663 = vmatprep.subr.mxu0 0.0
    %664 = vmatpush1.msra.mxu0 %v378
    %665 = vmatprep.subr.mxu0 0.0
    %666 = vmatpush1.msra.mxu0 %v381
    %667 = vmatprep.subr.mxu0 0.0
    %668 = vmatpush1.msra.mxu0 %v384
    %669 = vmatprep.subr.mxu0 0.0
    %670 = vmatpush1.msra.mxu0 %v387
    %671 = vmatprep.subr.mxu0 0.0
    %672 = vmatpush1.msra.mxu0 %v390
    %673 = vmatprep.subr.mxu0 0.0
    %674 = vmatpush1.msra.mxu0 %v393
    %675 = vmatprep.subr.mxu0 0.0
    %676 = vmatpush1.msra.mxu0 %v396
    %677 = vmatprep.subr.mxu0 0.0
    %678 = vmatpush1.msra.mxu0 %v399
    %679 = vmatprep.subr.mxu0 0.0
    %680 = vmatpush1.msra.mxu0 %v402
    %681 = vmatprep.subr.mxu0 0.0
    %682 = vmatpush1.msra.mxu0 %v405
    %683 = vmatprep.subr.mxu0 0.0
    %684 = vmatpush1.msra.mxu0 %v408
    %685 = vmatprep.subr.mxu0 0.0
    %686 = vmatpush1.msra.mxu0 %v411
    %687 = vmatprep.subr.mxu0 0.0
    %688 = vmatpush1.msra.mxu0 %v414
    %689 = vmatprep.subr.mxu0 0.0
    %690 = vmatpush1.msra.mxu0 0.0
    %691 = vmatprep.subr.mxu0 0.0
    %692 = vmatpush1.msra.mxu0 0.0
    %693 = vmatprep.subr.mxu0 0.0
    %694 = vmatpush1.msra.mxu0 0.0
    %695 = vmatprep.subr.mxu0 0.0
    %696 = vmatpush1.msra.mxu0 0.0
    %697 = vmatprep.subr.mxu0 0.0
    %698 = vmatpush1.msra.mxu0 0.0
    %699 = vmatprep.subr.mxu0 0.0
    %700 = vmatpush1.msra.mxu0 0.0
    %701 = vmatprep.subr.mxu0 0.0
    %702 = vmatpush1.msra.mxu0 0.0
    %703 = vmatprep.subr.mxu0 0.0
    %704 = vmatpush1.msra.mxu0 0.0
    %705 = vmatprep.subr.mxu0 0.0
    %706 = vmatpush1.msra.mxu0 0.0
    %707 = vmatprep.subr.mxu0 0.0
    %708 = vmatpush1.msra.mxu0 0.0
    %709 = vmatprep.subr.mxu0 0.0
    %710 = vmatpush1.msra.mxu0 0.0
    %711 = vmatprep.subr.mxu0 0.0
    %712 = vmatpush1.msra.mxu0 0.0
    %713 = vmatprep.subr.mxu0 0.0
    %714 = vmatpush1.msra.mxu0 0.0
    %715 = vmatprep.subr.mxu0 0.0
    %716 = vmatpush1.msra.mxu0 0.0
    %717 = vmatprep.subr.mxu0 0.0
    %718 = vmatpush1.msra.mxu0 0.0
    %719 = vmatprep.subr.mxu0 0.0
    %720 = vmatpush1.msra.mxu0 0.0
    %721 = vmatprep.mubr.f32.mxu0 0.0
    %722 = vmatmul.mubr.f32.gmra.mrb[0].mxu0 %v584
    %v723 = vpop.f32.mrb[0].mxu0
    %v724 = vadd.f32 0.0, %v723
    %v725 = vpop.f32.mrb[0].mxu0
    %726 = vdwg.mxu0
    %v727 = vadd.f32 %v222, %v653
    %v728 = vadd.f32 %v224, %v655
    %v729 = vxor.u32 %v727, 2147483648
    %v730 = vxor.u32 %v728, 2147483648
    %v731 = vmul.f32 %v729, 1.442695
    %v732 = vpow.pop %v731
    %v733 = vmul.f32 %v730, 1.442695
    %v734 = vpow.pop %v733
    %v735 = vadd.f32 %v732, 1.0
    %v736 = vadd.f32 %v734, 1.0
    %v737 = vrcp.pop %v735
    %v738 = vmul.f32 1.0, %v737
    %v739 = vrcp.pop %v736
    %v740 = vmul.f32 1.0, %v739
    %v741 = vadd.f32 %v724, %v420
    %v742 = vmul.f32 %v738, %v741
    %v743 = vadd.f32 %v334, %v742
    %v744 = vtanh.pop %v743
    %v745 = vsub.f32 1.0, %v740
    %v746 = vmul.f32 %v745, %v744
    %v747 = vmul.f32 %v740, %v584
    %v748 = vadd.f32 %v746, %v747
    %s749 = scalar_lea.vmem [#allocation2], 8
    %750 = vst [vmem:[%s749] sm:$0xff] %v748
    %751 = vmatprep.subr.mxu0 %v368
    %752 = vmatpush1.msra.mxu0 %v367
    %753 = vmatprep.subr.mxu0 %v371
    %754 = vmatpush1.msra.mxu0 %v370
    %755 = vmatprep.subr.mxu0 %v374
    %756 = vmatpush1.msra.mxu0 %v373
    %757 = vmatprep.subr.mxu0 %v377
    %758 = vmatpush1.msra.mxu0 %v376
    %759 = vmatprep.subr.mxu0 %v380
    %760 = vmatpush1.msra.mxu0 %v379
    %761 = vmatprep.subr.mxu0 %v383
    %762 = vmatpush1.msra.mxu0 %v382
    %763 = vmatprep.subr.mxu0 %v386
    %764 = vmatpush1.msra.mxu0 %v385
    %765 = vmatprep.subr.mxu0 %v389
    %766 = vmatpush1.msra.mxu0 %v388
    %767 = vmatprep.subr.mxu0 %v392
    %768 = vmatpush1.msra.mxu0 %v391
    %769 = vmatprep.subr.mxu0 %v395
    %770 = vmatpush1.msra.mxu0 %v394
    %771 = vmatprep.subr.mxu0 %v398
    %772 = vmatpush1.msra.mxu0 %v397
    %773 = vmatprep.subr.mxu0 %v401
    %774 = vmatpush1.msra.mxu0 %v400
    %775 = vmatprep.subr.mxu0 %v404
    %776 = vmatpush1.msra.mxu0 %v403
    %777 = vmatprep.subr.mxu0 %v407
    %778 = vmatpush1.msra.mxu0 %v406
    %779 = vmatprep.subr.mxu0 %v410
    %780 = vmatpush1.msra.mxu0 %v409
    %781 = vmatprep.subr.mxu0 %v413
    %782 = vmatpush1.msra.mxu0 %v412
    %783 = vmatprep.subr.mxu0 0.0
    %784 = vmatpush1.msra.mxu0 0.0
    %785 = vmatprep.subr.mxu0 0.0
    %786 = vmatpush1.msra.mxu0 0.0
    %787 = vmatprep.subr.mxu0 0.0
    %788 = vmatpush1.msra.mxu0 0.0
    %789 = vmatprep.subr.mxu0 0.0
    %790 = vmatpush1.msra.mxu0 0.0
    %791 = vmatprep.subr.mxu0 0.0
    %792 = vmatpush1.msra.mxu0 0.0
    %793 = vmatprep.subr.mxu0 0.0
    %794 = vmatpush1.msra.mxu0 0.0
    %795 = vmatprep.subr.mxu0 0.0
    %796 = vmatpush1.msra.mxu0 0.0
    %797 = vmatprep.subr.mxu0 0.0
    %798 = vmatpush1.msra.mxu0 0.0
    %799 = vmatprep.subr.mxu0 0.0
    %800 = vmatpush1.msra.mxu0 0.0
    %801 = vmatprep.subr.mxu0 0.0
    %802 = vmatpush1.msra.mxu0 0.0
    %803 = vmatprep.subr.mxu0 0.0
    %804 = vmatpush1.msra.mxu0 0.0
    %805 = vmatprep.subr.mxu0 0.0
    %806 = vmatpush1.msra.mxu0 0.0
    %807 = vmatprep.subr.mxu0 0.0
    %808 = vmatpush1.msra.mxu0 0.0
    %809 = vmatprep.subr.mxu0 0.0
    %810 = vmatpush1.msra.mxu0 0.0
    %811 = vmatprep.subr.mxu0 0.0
    %812 = vmatpush1.msra.mxu0 0.0
    %813 = vmatprep.subr.mxu0 0.0
    %814 = vmatpush1.msra.mxu0 0.0
    %815 = vmatprep.mubr.f32.mxu0 0.0
    %816 = vmatmul.mubr.f32.gmra.mrb[0].mxu0 %v748
    %v817 = vpop.f32.mrb[0].mxu0
    %v818 = vadd.f32 0.0, %v817
    %v819 = vpop.f32.mrb[0].mxu0
    %v820 = vadd.f32 0.0, %v819
    %821 = vdwg.mxu0
    %822 = vmatprep.subr.mxu0 0.0
    %823 = vmatpush1.msra.mxu0 %v369
    %824 = vmatprep.subr.mxu0 0.0
    %825 = vmatpush1.msra.mxu0 %v372
    %826 = vmatprep.subr.mxu0 0.0
    %827 = vmatpush1.msra.mxu0 %v375
    %828 = vmatprep.subr.mxu0 0.0
    %829 = vmatpush1.msra.mxu0 %v378
    %830 = vmatprep.subr.mxu0 0.0
    %831 = vmatpush1.msra.mxu0 %v381
    %832 = vmatprep.subr.mxu0 0.0
    %833 = vmatpush1.msra.mxu0 %v384
    %834 = vmatprep.subr.mxu0 0.0
    %835 = vmatpush1.msra.mxu0 %v387
    %836 = vmatprep.subr.mxu0 0.0
    %837 = vmatpush1.msra.mxu0 %v390
    %838 = vmatprep.subr.mxu0 0.0
    %839 = vmatpush1.msra.mxu0 %v393
    %840 = vmatprep.subr.mxu0 0.0
    %841 = vmatpush1.msra.mxu0 %v396
    %842 = vmatprep.subr.mxu0 0.0
    %843 = vmatpush1.msra.mxu0 %v399
    %844 = vmatprep.subr.mxu0 0.0
    %845 = vmatpush1.msra.mxu0 %v402
    %846 = vmatprep.subr.mxu0 0.0
    %847 = vmatpush1.msra.mxu0 %v405
    %848 = vmatprep.subr.mxu0 0.0
    %849 = vmatpush1.msra.mxu0 %v408
    %850 = vmatprep.subr.mxu0 0.0
    %851 = vmatpush1.msra.mxu0 %v411
    %852 = vmatprep.subr.mxu0 0.0
    %853 = vmatpush1.msra.mxu0 %v414
    %854 = vmatprep.subr.mxu0 0.0
    %855 = vmatpush1.msra.mxu0 0.0
    %856 = vmatprep.subr.mxu0 0.0
    %857 = vmatpush1.msra.mxu0 0.0
    %858 = vmatprep.subr.mxu0 0.0
    %859 = vmatpush1.msra.mxu0 0.0
    %860 = vmatprep.subr.mxu0 0.0
    %861 = vmatpush1.msra.mxu0 0.0
    %862 = vmatprep.subr.mxu0 0.0
    %863 = vmatpush1.msra.mxu0 0.0
    %864 = vmatprep.subr.mxu0 0.0
    %865 = vmatpush1.msra.mxu0 0.0
    %866 = vmatprep.subr.mxu0 0.0
    %867 = vmatpush1.msra.mxu0 0.0
    %868 = vmatprep.subr.mxu0 0.0
    %869 = vmatpush1.msra.mxu0 0.0
    %870 = vmatprep.subr.mxu0 0.0
    %871 = vmatpush1.msra.mxu0 0.0
    %872 = vmatprep.subr.mxu0 0.0
    %873 = vmatpush1.msra.mxu0 0.0
    %874 = vmatprep.subr.mxu0 0.0
    %875 = vmatpush1.msra.mxu0 0.0
    %876 = vmatprep.subr.mxu0 0.0
    %877 = vmatpush1.msra.mxu0 0.0
    %878 = vmatprep.subr.mxu0 0.0
    %879 = vmatpush1.msra.mxu0 0.0
    %880 = vmatprep.subr.mxu0 0.0
    %881 = vmatpush1.msra.mxu0 0.0
    %882 = vmatprep.subr.mxu0 0.0
    %883 = vmatpush1.msra.mxu0 0.0
    %884 = vmatprep.subr.mxu0 0.0
    %885 = vmatpush1.msra.mxu0 0.0
    %886 = vmatprep.mubr.f32.mxu0 0.0
    %887 = vmatmul.mubr.f32.gmra.mrb[0].mxu0 %v748
    %v888 = vpop.f32.mrb[0].mxu0
    %v889 = vadd.f32 0.0, %v888
    %v890 = vpop.f32.mrb[0].mxu0
    %891 = vdwg.mxu0
    %v892 = vadd.f32 %v228, %v818
    %v893 = vadd.f32 %v230, %v820
    %v894 = vxor.u32 %v892, 2147483648
    %v895 = vxor.u32 %v893, 2147483648
    %v896 = vmul.f32 %v894, 1.442695
    %v897 = vpow.pop %v896
    %v898 = vmul.f32 %v895, 1.442695
    %v899 = vpow.pop %v898
    %v900 = vadd.f32 %v897, 1.0
    %v901 = vadd.f32 %v899, 1.0
    %v902 = vrcp.pop %v900
    %v903 = vmul.f32 1.0, %v902
    %v904 = vrcp.pop %v901
    %v905 = vmul.f32 1.0, %v904
    %v906 = vadd.f32 %v889, %v420
    %v907 = vmul.f32 %v903, %v906
    %v908 = vadd.f32 %v339, %v907
    %v909 = vtanh.pop %v908
    %v910 = vsub.f32 1.0, %v905
    %v911 = vmul.f32 %v910, %v909
    %v912 = vmul.f32 %v905, %v748
    %v913 = vadd.f32 %v911, %v912
    %s914 = scalar_lea.vmem [#allocation2], 16
    %915 = vst [vmem:[%s914] sm:$0xff] %v913
    %916 = vmatprep.subr.mxu0 %v368
    %917 = vmatpush1.msra.mxu0 %v367
    %918 = vmatprep.subr.mxu0 %v371
    %919 = vmatpush1.msra.mxu0 %v370
    %920 = vmatprep.subr.mxu0 %v374
    %921 = vmatpush1.msra.mxu0 %v373
    %922 = vmatprep.subr.mxu0 %v377
    %923 = vmatpush1.msra.mxu0 %v376
    %924 = vmatprep.subr.mxu0 %v380
    %925 = vmatpush1.msra.mxu0 %v379
    %926 = vmatprep.subr.mxu0 %v383
    %927 = vmatpush1.msra.mxu0 %v382
    %928 = vmatprep.subr.mxu0 %v386
    %929 = vmatpush1.msra.mxu0 %v385
    %930 = vmatprep.subr.mxu0 %v389
    %931 = vmatpush1.msra.mxu0 %v388
    %932 = vmatprep.subr.mxu0 %v392
    %933 = vmatpush1.msra.mxu0 %v391
    %934 = vmatprep.subr.mxu0 %v395
    %935 = vmatpush1.msra.mxu0 %v394
    %936 = vmatprep.subr.mxu0 %v398
    %937 = vmatpush1.msra.mxu0 %v397
    %938 = vmatprep.subr.mxu0 %v401
    %939 = vmatpush1.msra.mxu0 %v400
    %940 = vmatprep.subr.mxu0 %v404
    %941 = vmatpush1.msra.mxu0 %v403
    %942 = vmatprep.subr.mxu0 %v407
    %943 = vmatpush1.msra.mxu0 %v406
    %944 = vmatprep.subr.mxu0 %v410
    %945 = vmatpush1.msra.mxu0 %v409
    %946 = vmatprep.subr.mxu0 %v413
    %947 = vmatpush1.msra.mxu0 %v412
    %948 = vmatprep.subr.mxu0 0.0
    %949 = vmatpush1.msra.mxu0 0.0
    %950 = vmatprep.subr.mxu0 0.0
    %951 = vmatpush1.msra.mxu0 0.0
    %952 = vmatprep.subr.mxu0 0.0
    %953 = vmatpush1.msra.mxu0 0.0
    %954 = vmatprep.subr.mxu0 0.0
    %955 = vmatpush1.msra.mxu0 0.0
    %956 = vmatprep.subr.mxu0 0.0
    %957 = vmatpush1.msra.mxu0 0.0
    %958 = vmatprep.subr.mxu0 0.0
    %959 = vmatpush1.msra.mxu0 0.0
    %960 = vmatprep.subr.mxu0 0.0
    %961 = vmatpush1.msra.mxu0 0.0
    %962 = vmatprep.subr.mxu0 0.0
    %963 = vmatpush1.msra.mxu0 0.0
    %964 = vmatprep.subr.mxu0 0.0
    %965 = vmatpush1.msra.mxu0 0.0
    %966 = vmatprep.subr.mxu0 0.0
    %967 = vmatpush1.msra.mxu0 0.0
    %968 = vmatprep.subr.mxu0 0.0
    %969 = vmatpush1.msra.mxu0 0.0
    %970 = vmatprep.subr.mxu0 0.0
    %971 = vmatpush1.msra.mxu0 0.0
    %972 = vmatprep.subr.mxu0 0.0
    %973 = vmatpush1.msra.mxu0 0.0
    %974 = vmatprep.subr.mxu0 0.0
    %975 = vmatpush1.msra.mxu0 0.0
    %976 = vmatprep.subr.mxu0 0.0
    %977 = vmatpush1.msra.mxu0 0.0
    %978 = vmatprep.subr.mxu0 0.0
    %979 = vmatpush1.msra.mxu0 0.0
    %980 = vmatprep.mubr.f32.mxu0 0.0
    %981 = vmatmul.mubr.f32.gmra.mrb[0].mxu0 %v913
    %v982 = vpop.f32.mrb[0].mxu0
    %v983 = vadd.f32 0.0, %v982
    %v984 = vpop.f32.mrb[0].mxu0
    %v985 = vadd.f32 0.0, %v984
    %986 = vdwg.mxu0
    %987 = vmatprep.subr.mxu0 0.0
    %988 = vmatpush1.msra.mxu0 %v369
    %989 = vmatprep.subr.mxu0 0.0
    %990 = vmatpush1.msra.mxu0 %v372
    %991 = vmatprep.subr.mxu0 0.0
    %992 = vmatpush1.msra.mxu0 %v375
    %993 = vmatprep.subr.mxu0 0.0
    %994 = vmatpush1.msra.mxu0 %v378
    %995 = vmatprep.subr.mxu0 0.0
    %996 = vmatpush1.msra.mxu0 %v381
    %997 = vmatprep.subr.mxu0 0.0
    %998 = vmatpush1.msra.mxu0 %v384
    %999 = vmatprep.subr.mxu0 0.0
    %1000 = vmatpush1.msra.mxu0 %v387
    %1001 = vmatprep.subr.mxu0 0.0
    %1002 = vmatpush1.msra.mxu0 %v390
    %1003 = vmatprep.subr.mxu0 0.0
    %1004 = vmatpush1.msra.mxu0 %v393
    %1005 = vmatprep.subr.mxu0 0.0
    %1006 = vmatpush1.msra.mxu0 %v396
    %1007 = vmatprep.subr.mxu0 0.0
    %1008 = vmatpush1.msra.mxu0 %v399
    %1009 = vmatprep.subr.mxu0 0.0
    %1010 = vmatpush1.msra.mxu0 %v402
    %1011 = vmatprep.subr.mxu0 0.0
    %1012 = vmatpush1.msra.mxu0 %v405
    %1013 = vmatprep.subr.mxu0 0.0
    %1014 = vmatpush1.msra.mxu0 %v408
    %1015 = vmatprep.subr.mxu0 0.0
    %1016 = vmatpush1.msra.mxu0 %v411
    %1017 = vmatprep.subr.mxu0 0.0
    %1018 = vmatpush1.msra.mxu0 %v414
    %1019 = vmatprep.subr.mxu0 0.0
    %1020 = vmatpush1.msra.mxu0 0.0
    %1021 = vmatprep.subr.mxu0 0.0
    %1022 = vmatpush1.msra.mxu0 0.0
    %1023 = vmatprep.subr.mxu0 0.0
    %1024 = vmatpush1.msra.mxu0 0.0
    %1025 = vmatprep.subr.mxu0 0.0
    %1026 = vmatpush1.msra.mxu0 0.0
    %1027 = vmatprep.subr.mxu0 0.0
    %1028 = vmatpush1.msra.mxu0 0.0
    %1029 = vmatprep.subr.mxu0 0.0
    %1030 = vmatpush1.msra.mxu0 0.0
    %1031 = vmatprep.subr.mxu0 0.0
    %1032 = vmatpush1.msra.mxu0 0.0
    %1033 = vmatprep.subr.mxu0 0.0
    %1034 = vmatpush1.msra.mxu0 0.0
    %1035 = vmatprep.subr.mxu0 0.0
    %1036 = vmatpush1.msra.mxu0 0.0
    %1037 = vmatprep.subr.mxu0 0.0
    %1038 = vmatpush1.msra.mxu0 0.0
    %1039 = vmatprep.subr.mxu0 0.0
    %1040 = vmatpush1.msra.mxu0 0.0
    %1041 = vmatprep.subr.mxu0 0.0
    %1042 = vmatpush1.msra.mxu0 0.0
    %1043 = vmatprep.subr.mxu0 0.0
    %1044 = vmatpush1.msra.mxu0 0.0
    %1045 = vmatprep.subr.mxu0 0.0
    %1046 = vmatpush1.msra.mxu0 0.0
    %1047 = vmatprep.subr.mxu0 0.0
    %1048 = vmatpush1.msra.mxu0 0.0
    %1049 = vmatprep.subr.mxu0 0.0
    %1050 = vmatpush1.msra.mxu0 0.0
    %1051 = vmatprep.mubr.f32.mxu0 0.0
    %1052 = vmatmul.mubr.f32.gmra.mrb[0].mxu0 %v913
    %v1053 = vpop.f32.mrb[0].mxu0
    %v1054 = vadd.f32 0.0, %v1053
    %v1055 = vpop.f32.mrb[0].mxu0
    %1056 = vdwg.mxu0
    %v1057 = vadd.f32 %v234, %v983
    %v1058 = vadd.f32 %v236, %v985
    %v1059 = vxor.u32 %v1057, 2147483648
    %v1060 = vxor.u32 %v1058, 2147483648
    %v1061 = vmul.f32 %v1059, 1.442695
    %v1062 = vpow.pop %v1061
    %v1063 = vmul.f32 %v1060, 1.442695
    %v1064 = vpow.pop %v1063
    %v1065 = vadd.f32 %v1062, 1.0
    %v1066 = vadd.f32 %v1064, 1.0
    %v1067 = vrcp.pop %v1065
    %v1068 = vmul.f32 1.0, %v1067
    %v1069 = vrcp.pop %v1066
    %v1070 = vmul.f32 1.0, %v1069
    %v1071 = vadd.f32 %v1054, %v420
    %v1072 = vmul.f32 %v1068, %v1071
    %v1073 = vadd.f32 %v344, %v1072
    %v1074 = vtanh.pop %v1073
    %v1075 = vsub.f32 1.0, %v1070
    %v1076 = vmul.f32 %v1075, %v1074
    %v1077 = vmul.f32 %v1070, %v913
    %v1078 = vadd.f32 %v1076, %v1077
    %s1079 = scalar_lea.vmem [#allocation2], 24
    %1080 = vst [vmem:[%s1079] sm:$0xff] %v1078
    %1081 = vmatprep.subr.mxu0 %v368
    %1082 = vmatpush1.msra.mxu0 %v367
    %1083 = vmatprep.subr.mxu0 %v371
    %1084 = vmatpush1.msra.mxu0 %v370
    %1085 = vmatprep.subr.mxu0 %v374
    %1086 = vmatpush1.msra.mxu0 %v373
    %1087 = vmatprep.subr.mxu0 %v377
    %1088 = vmatpush1.msra.mxu0 %v376
    %1089 = vmatprep.subr.mxu0 %v380
    %1090 = vmatpush1.msra.mxu0 %v379
    %1091 = vmatprep.subr.mxu0 %v383
    %1092 = vmatpush1.msra.mxu0 %v382
    %1093 = vmatprep.subr.mxu0 %v386
    %1094 = vmatpush1.msra.mxu0 %v385
    %1095 = vmatprep.subr.mxu0 %v389
    %1096 = vmatpush1.msra.mxu0 %v388
    %1097 = vmatprep.subr.mxu0 %v392
    %1098 = vmatpush1.msra.mxu0 %v391
    %1099 = vmatprep.subr.mxu0 %v395
    %1100 = vmatpush1.msra.mxu0 %v394
    %1101 = vmatprep.subr.mxu0 %v398
    %1102 = vmatpush1.msra.mxu0 %v397
    %1103 = vmatprep.subr.mxu0 %v401
    %1104 = vmatpush1.msra.mxu0 %v400
    %1105 = vmatprep.subr.mxu0 %v404
    %1106 = vmatpush1.msra.mxu0 %v403
    %1107 = vmatprep.subr.mxu0 %v407
    %1108 = vmatpush1.msra.mxu0 %v406
    %1109 = vmatprep.subr.mxu0 %v410
    %1110 = vmatpush1.msra.mxu0 %v409
    %1111 = vmatprep.subr.mxu0 %v413
    %1112 = vmatpush1.msra.mxu0 %v412
    %1113 = vmatprep.subr.mxu0 0.0
    %1114 = vmatpush1.msra.mxu0 0.0
    %1115 = vmatprep.subr.mxu0 0.0
    %1116 = vmatpush1.msra.mxu0 0.0
    %1117 = vmatprep.subr.mxu0 0.0
    %1118 = vmatpush1.msra.mxu0 0.0
    %1119 = vmatprep.subr.mxu0 0.0
    %1120 = vmatpush1.msra.mxu0 0.0
    %1121 = vmatprep.subr.mxu0 0.0
    %1122 = vmatpush1.msra.mxu0 0.0
    %1123 = vmatprep.subr.mxu0 0.0
    %1124 = vmatpush1.msra.mxu0 0.0
    %1125 = vmatprep.subr.mxu0 0.0
    %1126 = vmatpush1.msra.mxu0 0.0
    %1127 = vmatprep.subr.mxu0 0.0
    %1128 = vmatpush1.msra.mxu0 0.0
    %1129 = vmatprep.subr.mxu0 0.0
    %1130 = vmatpush1.msra.mxu0 0.0
    %1131 = vmatprep.subr.mxu0 0.0
    %1132 = vmatpush1.msra.mxu0 0.0
    %1133 = vmatprep.subr.mxu0 0.0
    %1134 = vmatpush1.msra.mxu0 0.0
    %1135 = vmatprep.subr.mxu0 0.0
    %1136 = vmatpush1.msra.mxu0 0.0
    %1137 = vmatprep.subr.mxu0 0.0
    %1138 = vmatpush1.msra.mxu0 0.0
    %1139 = vmatprep.subr.mxu0 0.0
    %1140 = vmatpush1.msra.mxu0 0.0
    %1141 = vmatprep.subr.mxu0 0.0
    %1142 = vmatpush1.msra.mxu0 0.0
    %1143 = vmatprep.subr.mxu0 0.0
    %1144 = vmatpush1.msra.mxu0 0.0
    %1145 = vmatprep.mubr.f32.mxu0 0.0
    %1146 = vmatmul.mubr.f32.gmra.mrb[0].mxu0 %v1078
    %v1147 = vpop.f32.mrb[0].mxu0
    %v1148 = vadd.f32 0.0, %v1147
    %v1149 = vpop.f32.mrb[0].mxu0
    %v1150 = vadd.f32 0.0, %v1149
    %1151 = vdwg.mxu0
    %1152 = vmatprep.subr.mxu0 0.0
    %1153 = vmatpush1.msra.mxu0 %v369
    %1154 = vmatprep.subr.mxu0 0.0
    %1155 = vmatpush1.msra.mxu0 %v372
    %1156 = vmatprep.subr.mxu0 0.0
    %1157 = vmatpush1.msra.mxu0 %v375
    %1158 = vmatprep.subr.mxu0 0.0
    %1159 = vmatpush1.msra.mxu0 %v378
    %1160 = vmatprep.subr.mxu0 0.0
    %1161 = vmatpush1.msra.mxu0 %v381
    %1162 = vmatprep.subr.mxu0 0.0
    %1163 = vmatpush1.msra.mxu0 %v384
    %1164 = vmatprep.subr.mxu0 0.0
    %1165 = vmatpush1.msra.mxu0 %v387
    %1166 = vmatprep.subr.mxu0 0.0
    %1167 = vmatpush1.msra.mxu0 %v390
    %1168 = vmatprep.subr.mxu0 0.0
    %1169 = vmatpush1.msra.mxu0 %v393
    %1170 = vmatprep.subr.mxu0 0.0
    %1171 = vmatpush1.msra.mxu0 %v396
    %1172 = vmatprep.subr.mxu0 0.0
    %1173 = vmatpush1.msra.mxu0 %v399
    %1174 = vmatprep.subr.mxu0 0.0
    %1175 = vmatpush1.msra.mxu0 %v402
    %1176 = vmatprep.subr.mxu0 0.0
    %1177 = vmatpush1.msra.mxu0 %v405
    %1178 = vmatprep.subr.mxu0 0.0
    %1179 = vmatpush1.msra.mxu0 %v408
    %1180 = vmatprep.subr.mxu0 0.0
    %1181 = vmatpush1.msra.mxu0 %v411
    %1182 = vmatprep.subr.mxu0 0.0
    %1183 = vmatpush1.msra.mxu0 %v414
    %1184 = vmatprep.subr.mxu0 0.0
    %1185 = vmatpush1.msra.mxu0 0.0
    %1186 = vmatprep.subr.mxu0 0.0
    %1187 = vmatpush1.msra.mxu0 0.0
    %1188 = vmatprep.subr.mxu0 0.0
    %1189 = vmatpush1.msra.mxu0 0.0
    %1190 = vmatprep.subr.mxu0 0.0
    %1191 = vmatpush1.msra.mxu0 0.0
    %1192 = vmatprep.subr.mxu0 0.0
    %1193 = vmatpush1.msra.mxu0 0.0
    %1194 = vmatprep.subr.mxu0 0.0
    %1195 = vmatpush1.msra.mxu0 0.0
    %1196 = vmatprep.subr.mxu0 0.0
    %1197 = vmatpush1.msra.mxu0 0.0
    %1198 = vmatprep.subr.mxu0 0.0
    %1199 = vmatpush1.msra.mxu0 0.0
    %1200 = vmatprep.subr.mxu0 0.0
    %1201 = vmatpush1.msra.mxu0 0.0
    %1202 = vmatprep.subr.mxu0 0.0
    %1203 = vmatpush1.msra.mxu0 0.0
    %1204 = vmatprep.subr.mxu0 0.0
    %1205 = vmatpush1.msra.mxu0 0.0
    %1206 = vmatprep.subr.mxu0 0.0
    %1207 = vmatpush1.msra.mxu0 0.0
    %1208 = vmatprep.subr.mxu0 0.0
    %1209 = vmatpush1.msra.mxu0 0.0
    %1210 = vmatprep.subr.mxu0 0.0
    %1211 = vmatpush1.msra.mxu0 0.0
    %1212 = vmatprep.subr.mxu0 0.0
    %1213 = vmatpush1.msra.mxu0 0.0
    %1214 = vmatprep.subr.mxu0 0.0
    %1215 = vmatpush1.msra.mxu0 0.0
    %1216 = vmatprep.mubr.f32.mxu0 0.0
    %1217 = vmatmul.mubr.f32.gmra.mrb[0].mxu0 %v1078
    %v1218 = vpop.f32.mrb[0].mxu0
    %v1219 = vadd.f32 0.0, %v1218
    %v1220 = vpop.f32.mrb[0].mxu0
    %1221 = vdwg.mxu0
    %v1222 = vadd.f32 %v240, %v1148
    %v1223 = vadd.f32 %v242, %v1150
    %v1224 = vxor.u32 %v1222, 2147483648
    %v1225 = vxor.u32 %v1223, 2147483648
    %v1226 = vmul.f32 %v1224, 1.442695
    %v1227 = vpow.pop %v1226
    %v1228 = vmul.f32 %v1225, 1.442695
    %v1229 = vpow.pop %v1228
    %v1230 = vadd.f32 %v1227, 1.0
    %v1231 = vadd.f32 %v1229, 1.0
    %v1232 = vrcp.pop %v1230
    %v1233 = vmul.f32 1.0, %v1232
    %v1234 = vrcp.pop %v1231
    %v1235 = vmul.f32 1.0, %v1234
    %v1236 = vadd.f32 %v1219, %v420
    %v1237 = vmul.f32 %v1233, %v1236
    %v1238 = vadd.f32 %v349, %v1237
    %v1239 = vtanh.pop %v1238
    %v1240 = vsub.f32 1.0, %v1235
    %v1241 = vmul.f32 %v1240, %v1239
    %v1242 = vmul.f32 %v1235, %v1078
    %v1243 = vadd.f32 %v1241, %v1242
    %s1244 = scalar_lea.vmem [#allocation2], 32
    %1245 = vst [vmem:[%s1244] sm:$0xff] %v1243
    %1246 = vmatprep.subr.mxu0 %v368
    %1247 = vmatpush1.msra.mxu0 %v367
    %1248 = vmatprep.subr.mxu0 %v371
    %1249 = vmatpush1.msra.mxu0 %v370
    %1250 = vmatprep.subr.mxu0 %v374
    %1251 = vmatpush1.msra.mxu0 %v373
    %1252 = vmatprep.subr.mxu0 %v377
    %1253 = vmatpush1.msra.mxu0 %v376
    %1254 = vmatprep.subr.mxu0 %v380
    %1255 = vmatpush1.msra.mxu0 %v379
    %1256 = vmatprep.subr.mxu0 %v383
    %1257 = vmatpush1.msra.mxu0 %v382
    %1258 = vmatprep.subr.mxu0 %v386
    %1259 = vmatpush1.msra.mxu0 %v385
    %1260 = vmatprep.subr.mxu0 %v389
    %1261 = vmatpush1.msra.mxu0 %v388
    %1262 = vmatprep.subr.mxu0 %v392
    %1263 = vmatpush1.msra.mxu0 %v391
    %1264 = vmatprep.subr.mxu0 %v395
    %1265 = vmatpush1.msra.mxu0 %v394
    %1266 = vmatprep.subr.mxu0 %v398
    %1267 = vmatpush1.msra.mxu0 %v397
    %1268 = vmatprep.subr.mxu0 %v401
    %1269 = vmatpush1.msra.mxu0 %v400
    %1270 = vmatprep.subr.mxu0 %v404
    %1271 = vmatpush1.msra.mxu0 %v403
    %1272 = vmatprep.subr.mxu0 %v407
    %1273 = vmatpush1.msra.mxu0 %v406
    %1274 = vmatprep.subr.mxu0 %v410
    %1275 = vmatpush1.msra.mxu0 %v409
    %1276 = vmatprep.subr.mxu0 %v413
    %1277 = vmatpush1.msra.mxu0 %v412
    %1278 = vmatprep.subr.mxu0 0.0
    %1279 = vmatpush1.msra.mxu0 0.0
    %1280 = vmatprep.subr.mxu0 0.0
    %1281 = vmatpush1.msra.mxu0 0.0
    %1282 = vmatprep.subr.mxu0 0.0
    %1283 = vmatpush1.msra.mxu0 0.0
    %1284 = vmatprep.subr.mxu0 0.0
    %1285 = vmatpush1.msra.mxu0 0.0
    %1286 = vmatprep.subr.mxu0 0.0
    %1287 = vmatpush1.msra.mxu0 0.0
    %1288 = vmatprep.subr.mxu0 0.0
    %1289 = vmatpush1.msra.mxu0 0.0
    %1290 = vmatprep.subr.mxu0 0.0
    %1291 = vmatpush1.msra.mxu0 0.0
    %1292 = vmatprep.subr.mxu0 0.0
    %1293 = vmatpush1.msra.mxu0 0.0
    %1294 = vmatprep.subr.mxu0 0.0
    %1295 = vmatpush1.msra.mxu0 0.0
    %1296 = vmatprep.subr.mxu0 0.0
    %1297 = vmatpush1.msra.mxu0 0.0
    %1298 = vmatprep.subr.mxu0 0.0
    %1299 = vmatpush1.msra.mxu0 0.0
    %1300 = vmatprep.subr.mxu0 0.0
    %1301 = vmatpush1.msra.mxu0 0.0
    %1302 = vmatprep.subr.mxu0 0.0
    %1303 = vmatpush1.msra.mxu0 0.0
    %1304 = vmatprep.subr.mxu0 0.0
    %1305 = vmatpush1.msra.mxu0 0.0
    %1306 = vmatprep.subr.mxu0 0.0
    %1307 = vmatpush1.msra.mxu0 0.0
    %1308 = vmatprep.subr.mxu0 0.0
    %1309 = vmatpush1.msra.mxu0 0.0
    %1310 = vmatprep.mubr.f32.mxu0 0.0
    %1311 = vmatmul.mubr.f32.gmra.mrb[0].mxu0 %v1243
    %v1312 = vpop.f32.mrb[0].mxu0
    %v1313 = vadd.f32 0.0, %v1312
    %v1314 = vpop.f32.mrb[0].mxu0
    %v1315 = vadd.f32 0.0, %v1314
    %1316 = vdwg.mxu0
    %1317 = vmatprep.subr.mxu0 0.0
    %1318 = vmatpush1.msra.mxu0 %v369
    %1319 = vmatprep.subr.mxu0 0.0
    %1320 = vmatpush1.msra.mxu0 %v372
    %1321 = vmatprep.subr.mxu0 0.0
    %1322 = vmatpush1.msra.mxu0 %v375
    %1323 = vmatprep.subr.mxu0 0.0
    %1324 = vmatpush1.msra.mxu0 %v378
    %1325 = vmatprep.subr.mxu0 0.0
    %1326 = vmatpush1.msra.mxu0 %v381
    %1327 = vmatprep.subr.mxu0 0.0
    %1328 = vmatpush1.msra.mxu0 %v384
    %1329 = vmatprep.subr.mxu0 0.0
    %1330 = vmatpush1.msra.mxu0 %v387
    %1331 = vmatprep.subr.mxu0 0.0
    %1332 = vmatpush1.msra.mxu0 %v390
    %1333 = vmatprep.subr.mxu0 0.0
    %1334 = vmatpush1.msra.mxu0 %v393
    %1335 = vmatprep.subr.mxu0 0.0
    %1336 = vmatpush1.msra.mxu0 %v396
    %1337 = vmatprep.subr.mxu0 0.0
    %1338 = vmatpush1.msra.mxu0 %v399
    %1339 = vmatprep.subr.mxu0 0.0
    %1340 = vmatpush1.msra.mxu0 %v402
    %1341 = vmatprep.subr.mxu0 0.0
    %1342 = vmatpush1.msra.mxu0 %v405
    %1343 = vmatprep.subr.mxu0 0.0
    %1344 = vmatpush1.msra.mxu0 %v408
    %1345 = vmatprep.subr.mxu0 0.0
    %1346 = vmatpush1.msra.mxu0 %v411
    %1347 = vmatprep.subr.mxu0 0.0
    %1348 = vmatpush1.msra.mxu0 %v414
    %1349 = vmatprep.subr.mxu0 0.0
    %1350 = vmatpush1.msra.mxu0 0.0
    %1351 = vmatprep.subr.mxu0 0.0
    %1352 = vmatpush1.msra.mxu0 0.0
    %1353 = vmatprep.subr.mxu0 0.0
    %1354 = vmatpush1.msra.mxu0 0.0
    %1355 = vmatprep.subr.mxu0 0.0
    %1356 = vmatpush1.msra.mxu0 0.0
    %1357 = vmatprep.subr.mxu0 0.0
    %1358 = vmatpush1.msra.mxu0 0.0
    %1359 = vmatprep.subr.mxu0 0.0
    %1360 = vmatpush1.msra.mxu0 0.0
    %1361 = vmatprep.subr.mxu0 0.0
    %1362 = vmatpush1.msra.mxu0 0.0
    %1363 = vmatprep.subr.mxu0 0.0
    %1364 = vmatpush1.msra.mxu0 0.0
    %1365 = vmatprep.subr.mxu0 0.0
    %1366 = vmatpush1.msra.mxu0 0.0
    %1367 = vmatprep.subr.mxu0 0.0
    %1368 = vmatpush1.msra.mxu0 0.0
    %1369 = vmatprep.subr.mxu0 0.0
    %1370 = vmatpush1.msra.mxu0 0.0
    %1371 = vmatprep.subr.mxu0 0.0
    %1372 = vmatpush1.msra.mxu0 0.0
    %1373 = vmatprep.subr.mxu0 0.0
    %1374 = vmatpush1.msra.mxu0 0.0
    %1375 = vmatprep.subr.mxu0 0.0
    %1376 = vmatpush1.msra.mxu0 0.0
    %1377 = vmatprep.subr.mxu0 0.0
    %1378 = vmatpush1.msra.mxu0 0.0
    %1379 = vmatprep.subr.mxu0 0.0
    %1380 = vmatpush1.msra.mxu0 0.0
    %1381 = vmatprep.mubr.f32.mxu0 0.0
    %1382 = vmatmul.mubr.f32.gmra.mrb[0].mxu0 %v1243
    %v1383 = vpop.f32.mrb[0].mxu0
    %v1384 = vadd.f32 0.0, %v1383
    %v1385 = vpop.f32.mrb[0].mxu0
    %1386 = vdwg.mxu0
    %v1387 = vadd.f32 %v246, %v1313
    %v1388 = vadd.f32 %v248, %v1315
    %v1389 = vxor.u32 %v1387, 2147483648
    %v1390 = vxor.u32 %v1388, 2147483648
    %v1391 = vmul.f32 %v1389, 1.442695
    %v1392 = vpow.pop %v1391
    %v1393 = vmul.f32 %v1390, 1.442695
    %v1394 = vpow.pop %v1393
    %v1395 = vadd.f32 %v1392, 1.0
    %v1396 = vadd.f32 %v1394, 1.0
    %v1397 = vrcp.pop %v1395
    %v1398 = vmul.f32 1.0, %v1397
    %v1399 = vrcp.pop %v1396
    %v1400 = vmul.f32 1.0, %v1399
    %v1401 = vadd.f32 %v1384, %v420
    %v1402 = vmul.f32 %v1398, %v1401
    %v1403 = vadd.f32 %v354, %v1402
    %v1404 = vtanh.pop %v1403
    %v1405 = vsub.f32 1.0, %v1400
    %v1406 = vmul.f32 %v1405, %v1404
    %v1407 = vmul.f32 %v1400, %v1243
    %v1408 = vadd.f32 %v1406, %v1407
    %s1409 = scalar_lea.vmem [#allocation2], 40
    %1410 = vst [vmem:[%s1409] sm:$0xff] %v1408
    %1411 = vmatprep.subr.mxu0 %v368
    %1412 = vmatpush1.msra.mxu0 %v367
    %1413 = vmatprep.subr.mxu0 %v371
    %1414 = vmatpush1.msra.mxu0 %v370
    %1415 = vmatprep.subr.mxu0 %v374
    %1416 = vmatpush1.msra.mxu0 %v373
    %1417 = vmatprep.subr.mxu0 %v377
    %1418 = vmatpush1.msra.mxu0 %v376
    %1419 = vmatprep.subr.mxu0 %v380
    %1420 = vmatpush1.msra.mxu0 %v379
    %1421 = vmatprep.subr.mxu0 %v383
    %1422 = vmatpush1.msra.mxu0 %v382
    %1423 = vmatprep.subr.mxu0 %v386
    %1424 = vmatpush1.msra.mxu0 %v385
    %1425 = vmatprep.subr.mxu0 %v389
    %1426 = vmatpush1.msra.mxu0 %v388
    %1427 = vmatprep.subr.mxu0 %v392
    %1428 = vmatpush1.msra.mxu0 %v391
    %1429 = vmatprep.subr.mxu0 %v395
    %1430 = vmatpush1.msra.mxu0 %v394
    %1431 = vmatprep.subr.mxu0 %v398
    %1432 = vmatpush1.msra.mxu0 %v397
    %1433 = vmatprep.subr.mxu0 %v401
    %1434 = vmatpush1.msra.mxu0 %v400
    %1435 = vmatprep.subr.mxu0 %v404
    %1436 = vmatpush1.msra.mxu0 %v403
    %1437 = vmatprep.subr.mxu0 %v407
    %1438 = vmatpush1.msra.mxu0 %v406
    %1439 = vmatprep.subr.mxu0 %v410
    %1440 = vmatpush1.msra.mxu0 %v409
    %1441 = vmatprep.subr.mxu0 %v413
    %1442 = vmatpush1.msra.mxu0 %v412
    %1443 = vmatprep.subr.mxu0 0.0
    %1444 = vmatpush1.msra.mxu0 0.0
    %1445 = vmatprep.subr.mxu0 0.0
    %1446 = vmatpush1.msra.mxu0 0.0
    %1447 = vmatprep.subr.mxu0 0.0
    %1448 = vmatpush1.msra.mxu0 0.0
    %1449 = vmatprep.subr.mxu0 0.0
    %1450 = vmatpush1.msra.mxu0 0.0
    %1451 = vmatprep.subr.mxu0 0.0
    %1452 = vmatpush1.msra.mxu0 0.0
    %1453 = vmatprep.subr.mxu0 0.0
    %1454 = vmatpush1.msra.mxu0 0.0
    %1455 = vmatprep.subr.mxu0 0.0
    %1456 = vmatpush1.msra.mxu0 0.0
    %1457 = vmatprep.subr.mxu0 0.0
    %1458 = vmatpush1.msra.mxu0 0.0
    %1459 = vmatprep.subr.mxu0 0.0
    %1460 = vmatpush1.msra.mxu0 0.0
    %1461 = vmatprep.subr.mxu0 0.0
    %1462 = vmatpush1.msra.mxu0 0.0
    %1463 = vmatprep.subr.mxu0 0.0
    %1464 = vmatpush1.msra.mxu0 0.0
    %1465 = vmatprep.subr.mxu0 0.0
    %1466 = vmatpush1.msra.mxu0 0.0
    %1467 = vmatprep.subr.mxu0 0.0
    %1468 = vmatpush1.msra.mxu0 0.0
    %1469 = vmatprep.subr.mxu0 0.0
    %1470 = vmatpush1.msra.mxu0 0.0
    %1471 = vmatprep.subr.mxu0 0.0
    %1472 = vmatpush1.msra.mxu0 0.0
    %1473 = vmatprep.subr.mxu0 0.0
    %1474 = vmatpush1.msra.mxu0 0.0
    %1475 = vmatprep.mubr.f32.mxu0 0.0
    %1476 = vmatmul.mubr.f32.gmra.mrb[0].mxu0 %v1408
    %v1477 = vpop.f32.mrb[0].mxu0
    %v1478 = vadd.f32 0.0, %v1477
    %v1479 = vpop.f32.mrb[0].mxu0
    %v1480 = vadd.f32 0.0, %v1479
    %1481 = vdwg.mxu0
    %1482 = vmatprep.subr.mxu0 0.0
    %1483 = vmatpush1.msra.mxu0 %v369
    %1484 = vmatprep.subr.mxu0 0.0
    %1485 = vmatpush1.msra.mxu0 %v372
    %1486 = vmatprep.subr.mxu0 0.0
    %1487 = vmatpush1.msra.mxu0 %v375
    %1488 = vmatprep.subr.mxu0 0.0
    %1489 = vmatpush1.msra.mxu0 %v378
    %1490 = vmatprep.subr.mxu0 0.0
    %1491 = vmatpush1.msra.mxu0 %v381
    %1492 = vmatprep.subr.mxu0 0.0
    %1493 = vmatpush1.msra.mxu0 %v384
    %1494 = vmatprep.subr.mxu0 0.0
    %1495 = vmatpush1.msra.mxu0 %v387
    %1496 = vmatprep.subr.mxu0 0.0
    %1497 = vmatpush1.msra.mxu0 %v390
    %1498 = vmatprep.subr.mxu0 0.0
    %1499 = vmatpush1.msra.mxu0 %v393
    %1500 = vmatprep.subr.mxu0 0.0
    %1501 = vmatpush1.msra.mxu0 %v396
    %1502 = vmatprep.subr.mxu0 0.0
    %1503 = vmatpush1.msra.mxu0 %v399
    %1504 = vmatprep.subr.mxu0 0.0
    %1505 = vmatpush1.msra.mxu0 %v402
    %1506 = vmatprep.subr.mxu0 0.0
    %1507 = vmatpush1.msra.mxu0 %v405
    %1508 = vmatprep.subr.mxu0 0.0
    %1509 = vmatpush1.msra.mxu0 %v408
    %1510 = vmatprep.subr.mxu0 0.0
    %1511 = vmatpush1.msra.mxu0 %v411
    %1512 = vmatprep.subr.mxu0 0.0
    %1513 = vmatpush1.msra.mxu0 %v414
    %1514 = vmatprep.subr.mxu0 0.0
    %1515 = vmatpush1.msra.mxu0 0.0
    %1516 = vmatprep.subr.mxu0 0.0
    %1517 = vmatpush1.msra.mxu0 0.0
    %1518 = vmatprep.subr.mxu0 0.0
    %1519 = vmatpush1.msra.mxu0 0.0
    %1520 = vmatprep.subr.mxu0 0.0
    %1521 = vmatpush1.msra.mxu0 0.0
    %1522 = vmatprep.subr.mxu0 0.0
    %1523 = vmatpush1.msra.mxu0 0.0
    %1524 = vmatprep.subr.mxu0 0.0
    %1525 = vmatpush1.msra.mxu0 0.0
    %1526 = vmatprep.subr.mxu0 0.0
    %1527 = vmatpush1.msra.mxu0 0.0
    %1528 = vmatprep.subr.mxu0 0.0
    %1529 = vmatpush1.msra.mxu0 0.0
    %1530 = vmatprep.subr.mxu0 0.0
    %1531 = vmatpush1.msra.mxu0 0.0
    %1532 = vmatprep.subr.mxu0 0.0
    %1533 = vmatpush1.msra.mxu0 0.0
    %1534 = vmatprep.subr.mxu0 0.0
    %1535 = vmatpush1.msra.mxu0 0.0
    %1536 = vmatprep.subr.mxu0 0.0
    %1537 = vmatpush1.msra.mxu0 0.0
    %1538 = vmatprep.subr.mxu0 0.0
    %1539 = vmatpush1.msra.mxu0 0.0
    %1540 = vmatprep.subr.mxu0 0.0
    %1541 = vmatpush1.msra.mxu0 0.0
    %1542 = vmatprep.subr.mxu0 0.0
    %1543 = vmatpush1.msra.mxu0 0.0
    %1544 = vmatprep.subr.mxu0 0.0
    %1545 = vmatpush1.msra.mxu0 0.0
    %1546 = vmatprep.mubr.f32.mxu0 0.0
    %1547 = vmatmul.mubr.f32.gmra.mrb[0].mxu0 %v1408
    %v1548 = vpop.f32.mrb[0].mxu0
    %v1549 = vadd.f32 0.0, %v1548
    %v1550 = vpop.f32.mrb[0].mxu0
    %1551 = vdwg.mxu0
    %v1552 = vadd.f32 %v252, %v1478
    %v1553 = vadd.f32 %v254, %v1480
    %v1554 = vxor.u32 %v1552, 2147483648
    %v1555 = vxor.u32 %v1553, 2147483648
    %v1556 = vmul.f32 %v1554, 1.442695
    %v1557 = vpow.pop %v1556
    %v1558 = vmul.f32 %v1555, 1.442695
    %v1559 = vpow.pop %v1558
    %v1560 = vadd.f32 %v1557, 1.0
    %v1561 = vadd.f32 %v1559, 1.0
    %v1562 = vrcp.pop %v1560
    %v1563 = vmul.f32 1.0, %v1562
    %v1564 = vrcp.pop %v1561
    %v1565 = vmul.f32 1.0, %v1564
    %v1566 = vadd.f32 %v1549, %v420
    %v1567 = vmul.f32 %v1563, %v1566
    %v1568 = vadd.f32 %v359, %v1567
    %v1569 = vtanh.pop %v1568
    %v1570 = vsub.f32 1.0, %v1565
    %v1571 = vmul.f32 %v1570, %v1569
    %v1572 = vmul.f32 %v1565, %v1408
    %v1573 = vadd.f32 %v1571, %v1572
    %s1574 = scalar_lea.vmem [#allocation2], 48
    %1575 = vst [vmem:[%s1574] sm:$0xff] %v1573
    %1576 = vmatprep.subr.mxu0 %v368
    %1577 = vmatpush1.msra.mxu0 %v367
    %1578 = vmatprep.subr.mxu0 %v371
    %1579 = vmatpush1.msra.mxu0 %v370
    %1580 = vmatprep.subr.mxu0 %v374
    %1581 = vmatpush1.msra.mxu0 %v373
    %1582 = vmatprep.subr.mxu0 %v377
    %1583 = vmatpush1.msra.mxu0 %v376
    %1584 = vmatprep.subr.mxu0 %v380
    %1585 = vmatpush1.msra.mxu0 %v379
    %1586 = vmatprep.subr.mxu0 %v383
    %1587 = vmatpush1.msra.mxu0 %v382
    %1588 = vmatprep.subr.mxu0 %v386
    %1589 = vmatpush1.msra.mxu0 %v385
    %1590 = vmatprep.subr.mxu0 %v389
    %1591 = vmatpush1.msra.mxu0 %v388
    %1592 = vmatprep.subr.mxu0 %v392
    %1593 = vmatpush1.msra.mxu0 %v391
    %1594 = vmatprep.subr.mxu0 %v395
    %1595 = vmatpush1.msra.mxu0 %v394
    %1596 = vmatprep.subr.mxu0 %v398
    %1597 = vmatpush1.msra.mxu0 %v397
    %1598 = vmatprep.subr.mxu0 %v401
    %1599 = vmatpush1.msra.mxu0 %v400
    %1600 = vmatprep.subr.mxu0 %v404
    %1601 = vmatpush1.msra.mxu0 %v403
    %1602 = vmatprep.subr.mxu0 %v407
    %1603 = vmatpush1.msra.mxu0 %v406
    %1604 = vmatprep.subr.mxu0 %v410
    %1605 = vmatpush1.msra.mxu0 %v409
    %1606 = vmatprep.subr.mxu0 %v413
    %1607 = vmatpush1.msra.mxu0 %v412
    %1608 = vmatprep.subr.mxu0 0.0
    %1609 = vmatpush1.msra.mxu0 0.0
    %1610 = vmatprep.subr.mxu0 0.0
    %1611 = vmatpush1.msra.mxu0 0.0
    %1612 = vmatprep.subr.mxu0 0.0
    %1613 = vmatpush1.msra.mxu0 0.0
    %1614 = vmatprep.subr.mxu0 0.0
    %1615 = vmatpush1.msra.mxu0 0.0
    %1616 = vmatprep.subr.mxu0 0.0
    %1617 = vmatpush1.msra.mxu0 0.0
    %1618 = vmatprep.subr.mxu0 0.0
    %1619 = vmatpush1.msra.mxu0 0.0
    %1620 = vmatprep.subr.mxu0 0.0
    %1621 = vmatpush1.msra.mxu0 0.0
    %1622 = vmatprep.subr.mxu0 0.0
    %1623 = vmatpush1.msra.mxu0 0.0
    %1624 = vmatprep.subr.mxu0 0.0
    %1625 = vmatpush1.msra.mxu0 0.0
    %1626 = vmatprep.subr.mxu0 0.0
    %1627 = vmatpush1.msra.mxu0 0.0
    %1628 = vmatprep.subr.mxu0 0.0
    %1629 = vmatpush1.msra.mxu0 0.0
    %1630 = vmatprep.subr.mxu0 0.0
    %1631 = vmatpush1.msra.mxu0 0.0
    %1632 = vmatprep.subr.mxu0 0.0
    %1633 = vmatpush1.msra.mxu0 0.0
    %1634 = vmatprep.subr.mxu0 0.0
    %1635 = vmatpush1.msra.mxu0 0.0
    %1636 = vmatprep.subr.mxu0 0.0
    %1637 = vmatpush1.msra.mxu0 0.0
    %1638 = vmatprep.subr.mxu0 0.0
    %1639 = vmatpush1.msra.mxu0 0.0
    %1640 = vmatprep.mubr.f32.mxu0 0.0
    %1641 = vmatmul.mubr.f32.gmra.mrb[0].mxu0 %v1573
    %v1642 = vpop.f32.mrb[0].mxu0
    %v1643 = vadd.f32 0.0, %v1642
    %v1644 = vpop.f32.mrb[0].mxu0
    %v1645 = vadd.f32 0.0, %v1644
    %1646 = vdwg.mxu0
    %1647 = vmatprep.subr.mxu0 0.0
    %1648 = vmatpush1.msra.mxu0 %v369
    %1649 = vmatprep.subr.mxu0 0.0
    %1650 = vmatpush1.msra.mxu0 %v372
    %1651 = vmatprep.subr.mxu0 0.0
    %1652 = vmatpush1.msra.mxu0 %v375
    %1653 = vmatprep.subr.mxu0 0.0
    %1654 = vmatpush1.msra.mxu0 %v378
    %1655 = vmatprep.subr.mxu0 0.0
    %1656 = vmatpush1.msra.mxu0 %v381
    %1657 = vmatprep.subr.mxu0 0.0
    %1658 = vmatpush1.msra.mxu0 %v384
    %1659 = vmatprep.subr.mxu0 0.0
    %1660 = vmatpush1.msra.mxu0 %v387
    %1661 = vmatprep.subr.mxu0 0.0
    %1662 = vmatpush1.msra.mxu0 %v390
    %1663 = vmatprep.subr.mxu0 0.0
    %1664 = vmatpush1.msra.mxu0 %v393
    %1665 = vmatprep.subr.mxu0 0.0
    %1666 = vmatpush1.msra.mxu0 %v396
    %1667 = vmatprep.subr.mxu0 0.0
    %1668 = vmatpush1.msra.mxu0 %v399
    %1669 = vmatprep.subr.mxu0 0.0
    %1670 = vmatpush1.msra.mxu0 %v402
    %1671 = vmatprep.subr.mxu0 0.0
    %1672 = vmatpush1.msra.mxu0 %v405
    %1673 = vmatprep.subr.mxu0 0.0
    %1674 = vmatpush1.msra.mxu0 %v408
    %1675 = vmatprep.subr.mxu0 0.0
    %1676 = vmatpush1.msra.mxu0 %v411
    %1677 = vmatprep.subr.mxu0 0.0
    %1678 = vmatpush1.msra.mxu0 %v414
    %1679 = vmatprep.subr.mxu0 0.0
    %1680 = vmatpush1.msra.mxu0 0.0
    %1681 = vmatprep.subr.mxu0 0.0
    %1682 = vmatpush1.msra.mxu0 0.0
    %1683 = vmatprep.subr.mxu0 0.0
    %1684 = vmatpush1.msra.mxu0 0.0
    %1685 = vmatprep.subr.mxu0 0.0
    %1686 = vmatpush1.msra.mxu0 0.0
    %1687 = vmatprep.subr.mxu0 0.0
    %1688 = vmatpush1.msra.mxu0 0.0
    %1689 = vmatprep.subr.mxu0 0.0
    %1690 = vmatpush1.msra.mxu0 0.0
    %1691 = vmatprep.subr.mxu0 0.0
    %1692 = vmatpush1.msra.mxu0 0.0
    %1693 = vmatprep.subr.mxu0 0.0
    %1694 = vmatpush1.msra.mxu0 0.0
    %1695 = vmatprep.subr.mxu0 0.0
    %1696 = vmatpush1.msra.mxu0 0.0
    %1697 = vmatprep.subr.mxu0 0.0
    %1698 = vmatpush1.msra.mxu0 0.0
    %1699 = vmatprep.subr.mxu0 0.0
    %1700 = vmatpush1.msra.mxu0 0.0
    %1701 = vmatprep.subr.mxu0 0.0
    %1702 = vmatpush1.msra.mxu0 0.0
    %1703 = vmatprep.subr.mxu0 0.0
    %1704 = vmatpush1.msra.mxu0 0.0
    %1705 = vmatprep.subr.mxu0 0.0
    %1706 = vmatpush1.msra.mxu0 0.0
    %1707 = vmatprep.subr.mxu0 0.0
    %1708 = vmatpush1.msra.mxu0 0.0
    %1709 = vmatprep.subr.mxu0 0.0
    %1710 = vmatpush1.msra.mxu0 0.0
    %1711 = vmatprep.mubr.f32.mxu0 0.0
    %1712 = vmatmul.mubr.f32.gmra.mrb[0].mxu0 %v1573
    %v1713 = vpop.f32.mrb[0].mxu0
    %v1714 = vadd.f32 0.0, %v1713
    %v1715 = vpop.f32.mrb[0].mxu0
    %1716 = vdwg.mxu0
    %v1717 = vadd.f32 %v258, %v1643
    %v1718 = vadd.f32 %v260, %v1645
    %v1719 = vxor.u32 %v1717, 2147483648
    %v1720 = vxor.u32 %v1718, 2147483648
    %v1721 = vmul.f32 %v1719, 1.442695
    %v1722 = vpow.pop %v1721
    %v1723 = vmul.f32 %v1720, 1.442695
    %v1724 = vpow.pop %v1723
    %v1725 = vadd.f32 %v1722, 1.0
    %v1726 = vadd.f32 %v1724, 1.0
    %v1727 = vrcp.pop %v1725
    %v1728 = vmul.f32 1.0, %v1727
    %v1729 = vrcp.pop %v1726
    %v1730 = vmul.f32 1.0, %v1729
    %v1731 = vadd.f32 %v1714, %v420
    %v1732 = vmul.f32 %v1728, %v1731
    %v1733 = vadd.f32 %v364, %v1732
    %v1734 = vtanh.pop %v1733
    %v1735 = vsub.f32 1.0, %v1730
    %v1736 = vmul.f32 %v1735, %v1734
    %v1737 = vmul.f32 %v1730, %v1573
    %v1738 = vadd.f32 %v1736, %v1737
    %s1739 = scalar_lea.vmem [#allocation2], 56
    %1740 = vst [vmem:[%s1739] sm:$0xff] %v1738
    %v1741 = vld [vmem:[#allocation2] sm:$0xff]
    %v1742 = vld [vmem:[#allocation2 + $0x8] sm:$0xff]
    %v1743 = vld [vmem:[#allocation2 + $0x10] sm:$0xff]
    %v1744 = vld [vmem:[#allocation2 + $0x18] sm:$0xff]
    %v1745 = vld [vmem:[#allocation2 + $0x20] sm:$0xff]
    %v1746 = vld [vmem:[#allocation2 + $0x28] sm:$0xff]
    %v1747 = vld [vmem:[#allocation2 + $0x30] sm:$0xff]
    %v1748 = vld [vmem:[#allocation2 + $0x38] sm:$0xff]
    %v1749 = vld [vmem:[#allocation5] sm:$0xff]
    %v1750 = vld [vmem:[#allocation5 + $0x8] sm:$0xff]
    %v1751 = vld [vmem:[#allocation5 + $0x10] sm:$0xff]
    %v1752 = vld [vmem:[#allocation5 + $0x18] sm:$0xff]
    %v1753 = vld [vmem:[#allocation5 + $0x20] sm:$0xff]
    %v1754 = vld [vmem:[#allocation5 + $0x28] sm:$0xff]
    %v1755 = vld [vmem:[#allocation5 + $0x30] sm:$0xff]
    %v1756 = vld [vmem:[#allocation5 + $0x38] sm:$0xff]
    %v1757 = vld [vmem:[#allocation5 + $0x40] sm:$0xff]
    %v1758 = vld [vmem:[#allocation5 + $0x48] sm:$0xff]
    %v1759 = vld [vmem:[#allocation5 + $0x50] sm:$0xff]
    %v1760 = vld [vmem:[#allocation5 + $0x58] sm:$0xff]
    %v1761 = vld [vmem:[#allocation5 + $0x60] sm:$0xff]
    %v1762 = vld [vmem:[#allocation5 + $0x68] sm:$0xff]
    %v1763 = vld [vmem:[#allocation5 + $0x70] sm:$0xff]
    %v1764 = vld [vmem:[#allocation5 + $0x78] sm:$0xff]
    %v1765 = vld [vmem:[#allocation5 + $0x80] sm:$0xff]
    %v1766 = vld [vmem:[#allocation5 + $0x88] sm:$0xff]
    %v1767 = vld [vmem:[#allocation5 + $0x90] sm:$0xff]
    %v1768 = vld [vmem:[#allocation5 + $0x98] sm:$0xff]
    %v1769 = vld [vmem:[#allocation5 + $0xa0] sm:$0xff]
    %v1770 = vld [vmem:[#allocation5 + $0xa8] sm:$0xff]
    %v1771 = vld [vmem:[#allocation5 + $0xb0] sm:$0xff]
    %v1772 = vld [vmem:[#allocation5 + $0xb8] sm:$0xff]
    %v1773 = vld [vmem:[#allocation5 + $0xc0] sm:$0xff]
    %v1774 = vld [vmem:[#allocation5 + $0xc8] sm:$0xff]
    %v1775 = vld [vmem:[#allocation5 + $0xd0] sm:$0xff]
    %v1776 = vld [vmem:[#allocation5 + $0xd8] sm:$0xff]
    %v1777 = vld [vmem:[#allocation5 + $0xe0] sm:$0xff]
    %v1778 = vld [vmem:[#allocation5 + $0xe8] sm:$0xff]
    %v1779 = vld [vmem:[#allocation5 + $0xf0] sm:$0xff]
    %v1780 = vld [vmem:[#allocation5 + $0xf8] sm:$0xff]
    %v1781 = vld [vmem:[#allocation5 + $0x100] sm:$0xff]
    %v1782 = vld [vmem:[#allocation5 + $0x108] sm:$0xff]
    %v1783 = vld [vmem:[#allocation5 + $0x110] sm:$0xff]
    %v1784 = vld [vmem:[#allocation5 + $0x118] sm:$0xff]
    %v1785 = vld [vmem:[#allocation5 + $0x120] sm:$0xff]
    %v1786 = vld [vmem:[#allocation5 + $0x128] sm:$0xff]
    %v1787 = vld [vmem:[#allocation5 + $0x130] sm:$0xff]
    %v1788 = vld [vmem:[#allocation5 + $0x138] sm:$0xff]
    %v1789 = vld [vmem:[#allocation5 + $0x140] sm:$0xff]
    %v1790 = vld [vmem:[#allocation5 + $0x148] sm:$0xff]
    %v1791 = vld [vmem:[#allocation5 + $0x150] sm:$0xff]
    %v1792 = vld [vmem:[#allocation5 + $0x158] sm:$0xff]
    %v1793 = vld [vmem:[#allocation5 + $0x160] sm:$0xff]
    %v1794 = vld [vmem:[#allocation5 + $0x168] sm:$0xff]
    %v1795 = vld [vmem:[#allocation5 + $0x170] sm:$0xff]
    %v1796 = vld [vmem:[#allocation5 + $0x178] sm:$0xff]
    %v1797 = vld [vmem:[%s8] sm:$0x7]
    %v1799 = vlaneseq
    %v1800 = vshrl.u32 %v1799, 7
    %v1801 = vsub.s32 0, %v1800
    %v1802 = vrot.slane %v1797, %v1801
    %v1803 = vlaneseq
    %v1804 = vshrl.u32 %v1803, 7
    %v1805 = vsub.s32 1, %v1804
    %v1806 = vrot.slane %v1797, %v1805
    %v1807 = vlaneseq
    %v1808 = vshrl.u32 %v1807, 7
    %v1809 = vsub.s32 2, %v1808
    %v1810 = vrot.slane %v1797, %v1809
    %1814 = vmatprep.subr.mxu0 %v1750
    %1815 = vmatpush1.msra.mxu0 %v1749
    %1816 = vmatprep.subr.mxu0 %v1753
    %1817 = vmatpush1.msra.mxu0 %v1752
    %1818 = vmatprep.subr.mxu0 %v1756
    %1819 = vmatpush1.msra.mxu0 %v1755
    %1820 = vmatprep.subr.mxu0 %v1759
    %1821 = vmatpush1.msra.mxu0 %v1758
    %1822 = vmatprep.subr.mxu0 %v1762
    %1823 = vmatpush1.msra.mxu0 %v1761
    %1824 = vmatprep.subr.mxu0 %v1765
    %1825 = vmatpush1.msra.mxu0 %v1764
    %1826 = vmatprep.subr.mxu0 %v1768
    %1827 = vmatpush1.msra.mxu0 %v1767
    %1828 = vmatprep.subr.mxu0 %v1771
    %1829 = vmatpush1.msra.mxu0 %v1770
    %1830 = vmatprep.subr.mxu0 %v1774
    %1831 = vmatpush1.msra.mxu0 %v1773
    %1832 = vmatprep.subr.mxu0 %v1777
    %1833 = vmatpush1.msra.mxu0 %v1776
    %1834 = vmatprep.subr.mxu0 %v1780
    %1835 = vmatpush1.msra.mxu0 %v1779
    %1836 = vmatprep.subr.mxu0 %v1783
    %1837 = vmatpush1.msra.mxu0 %v1782
    %1838 = vmatprep.subr.mxu0 %v1786
    %1839 = vmatpush1.msra.mxu0 %v1785
    %1840 = vmatprep.subr.mxu0 %v1789
    %1841 = vmatpush1.msra.mxu0 %v1788
    %1842 = vmatprep.subr.mxu0 %v1792
    %1843 = vmatpush1.msra.mxu0 %v1791
    %1844 = vmatprep.subr.mxu0 %v1795
    %1845 = vmatpush1.msra.mxu0 %v1794
    %1846 = vmatprep.subr.mxu0 0.0
    %1847 = vmatpush1.msra.mxu0 0.0
    %1848 = vmatprep.subr.mxu0 0.0
    %1849 = vmatpush1.msra.mxu0 0.0
    %1850 = vmatprep.subr.mxu0 0.0
    %1851 = vmatpush1.msra.mxu0 0.0
    %1852 = vmatprep.subr.mxu0 0.0
    %1853 = vmatpush1.msra.mxu0 0.0
    %1854 = vmatprep.subr.mxu0 0.0
    %1855 = vmatpush1.msra.mxu0 0.0
    %1856 = vmatprep.subr.mxu0 0.0
    %1857 = vmatpush1.msra.mxu0 0.0
    %1858 = vmatprep.subr.mxu0 0.0
    %1859 = vmatpush1.msra.mxu0 0.0
    %1860 = vmatprep.subr.mxu0 0.0
    %1861 = vmatpush1.msra.mxu0 0.0
    %1862 = vmatprep.subr.mxu0 0.0
    %1863 = vmatpush1.msra.mxu0 0.0
    %1864 = vmatprep.subr.mxu0 0.0
    %1865 = vmatpush1.msra.mxu0 0.0
    %1866 = vmatprep.subr.mxu0 0.0
    %1867 = vmatpush1.msra.mxu0 0.0
    %1868 = vmatprep.subr.mxu0 0.0
    %1869 = vmatpush1.msra.mxu0 0.0
    %1870 = vmatprep.subr.mxu0 0.0
    %1871 = vmatpush1.msra.mxu0 0.0
    %1872 = vmatprep.subr.mxu0 0.0
    %1873 = vmatpush1.msra.mxu0 0.0
    %1874 = vmatprep.subr.mxu0 0.0
    %1875 = vmatpush1.msra.mxu0 0.0
    %1876 = vmatprep.subr.mxu0 0.0
    %1877 = vmatpush1.msra.mxu0 0.0
    %1878 = vmatprep.mubr.f32.mxu0 0.0
    %1879 = vmatmul.mubr.f32.gmra.mrb[0].mxu0 %v1741
    %v1880 = vpop.f32.mrb[0].mxu0
    %v1881 = vadd.f32 %v1802, %v1880
    %v1882 = vpop.f32.mrb[0].mxu0
    %v1883 = vadd.f32 %v1806, %v1882
    %1884 = vmatprep.mubr.f32.mxu0 0.0
    %1885 = vmatmul.mubr.f32.gmra.mrb[0].mxu0 %v1742
    %v1886 = vpop.f32.mrb[0].mxu0
    %v1887 = vadd.f32 %v1802, %v1886
    %v1888 = vpop.f32.mrb[0].mxu0
    %v1889 = vadd.f32 %v1806, %v1888
    %1890 = vmatprep.mubr.f32.mxu0 0.0
    %1891 = vmatmul.mubr.f32.gmra.mrb[0].mxu0 %v1743
    %v1892 = vpop.f32.mrb[0].mxu0
    %v1893 = vadd.f32 %v1802, %v1892
    %v1894 = vpop.f32.mrb[0].mxu0
    %v1895 = vadd.f32 %v1806, %v1894
    %1896 = vmatprep.mubr.f32.mxu0 0.0
    %1897 = vmatmul.mubr.f32.gmra.mrb[0].mxu0 %v1744
    %v1898 = vpop.f32.mrb[0].mxu0
    %v1899 = vadd.f32 %v1802, %v1898
    %v1900 = vpop.f32.mrb[0].mxu0
    %v1901 = vadd.f32 %v1806, %v1900
    %1902 = vmatprep.mubr.f32.mxu0 0.0
    %1903 = vmatmul.mubr.f32.gmra.mrb[0].mxu0 %v1745
    %v1904 = vpop.f32.mrb[0].mxu0
    %v1905 = vadd.f32 %v1802, %v1904
    %v1906 = vpop.f32.mrb[0].mxu0
    %v1907 = vadd.f32 %v1806, %v1906
    %1908 = vmatprep.mubr.f32.mxu0 0.0
    %1909 = vmatmul.mubr.f32.gmra.mrb[0].mxu0 %v1746
    %v1910 = vpop.f32.mrb[0].mxu0
    %v1911 = vadd.f32 %v1802, %v1910
    %v1912 = vpop.f32.mrb[0].mxu0
    %v1913 = vadd.f32 %v1806, %v1912
    %1914 = vmatprep.mubr.f32.mxu0 0.0
    %1915 = vmatmul.mubr.f32.gmra.mrb[0].mxu0 %v1747
    %v1916 = vpop.f32.mrb[0].mxu0
    %v1917 = vadd.f32 %v1802, %v1916
    %v1918 = vpop.f32.mrb[0].mxu0
    %v1919 = vadd.f32 %v1806, %v1918
    %1920 = vmatprep.mubr.f32.mxu0 0.0
    %1921 = vmatmul.mubr.f32.gmra.mrb[0].mxu0 %v1748
    %v1922 = vpop.f32.mrb[0].mxu0
    %v1923 = vadd.f32 %v1802, %v1922
    %v1924 = vpop.f32.mrb[0].mxu0
    %v1925 = vadd.f32 %v1806, %v1924
    %1926 = vdwg.mxu0
    %1927 = vmatprep.subr.mxu0 0.0
    %1928 = vmatpush1.msra.mxu0 %v1751
    %1929 = vmatprep.subr.mxu0 0.0
    %1930 = vmatpush1.msra.mxu0 %v1754
    %1931 = vmatprep.subr.mxu0 0.0
    %1932 = vmatpush1.msra.mxu0 %v1757
    %1933 = vmatprep.subr.mxu0 0.0
    %1934 = vmatpush1.msra.mxu0 %v1760
    %1935 = vmatprep.subr.mxu0 0.0
    %1936 = vmatpush1.msra.mxu0 %v1763
    %1937 = vmatprep.subr.mxu0 0.0
    %1938 = vmatpush1.msra.mxu0 %v1766
    %1939 = vmatprep.subr.mxu0 0.0
    %1940 = vmatpush1.msra.mxu0 %v1769
    %1941 = vmatprep.subr.mxu0 0.0
    %1942 = vmatpush1.msra.mxu0 %v1772
    %1943 = vmatprep.subr.mxu0 0.0
    %1944 = vmatpush1.msra.mxu0 %v1775
    %1945 = vmatprep.subr.mxu0 0.0
    %1946 = vmatpush1.msra.mxu0 %v1778
    %1947 = vmatprep.subr.mxu0 0.0
    %1948 = vmatpush1.msra.mxu0 %v1781
    %1949 = vmatprep.subr.mxu0 0.0
    %1950 = vmatpush1.msra.mxu0 %v1784
    %1951 = vmatprep.subr.mxu0 0.0
    %1952 = vmatpush1.msra.mxu0 %v1787
    %1953 = vmatprep.subr.mxu0 0.0
    %1954 = vmatpush1.msra.mxu0 %v1790
    %1955 = vmatprep.subr.mxu0 0.0
    %1956 = vmatpush1.msra.mxu0 %v1793
    %1957 = vmatprep.subr.mxu0 0.0
    %1958 = vmatpush1.msra.mxu0 %v1796
    %1959 = vmatprep.subr.mxu0 0.0
    %1960 = vmatpush1.msra.mxu0 0.0
    %1961 = vmatprep.subr.mxu0 0.0
    %1962 = vmatpush1.msra.mxu0 0.0
    %1963 = vmatprep.subr.mxu0 0.0
    %1964 = vmatpush1.msra.mxu0 0.0
    %1965 = vmatprep.subr.mxu0 0.0
    %1966 = vmatpush1.msra.mxu0 0.0
    %1967 = vmatprep.subr.mxu0 0.0
    %1968 = vmatpush1.msra.mxu0 0.0
    %1969 = vmatprep.subr.mxu0 0.0
    %1970 = vmatpush1.msra.mxu0 0.0
    %1971 = vmatprep.subr.mxu0 0.0
    %1972 = vmatpush1.msra.mxu0 0.0
    %1973 = vmatprep.subr.mxu0 0.0
    %1974 = vmatpush1.msra.mxu0 0.0
    %1975 = vmatprep.subr.mxu0 0.0
    %1976 = vmatpush1.msra.mxu0 0.0
    %1977 = vmatprep.subr.mxu0 0.0
    %1978 = vmatpush1.msra.mxu0 0.0
    %1979 = vmatprep.subr.mxu0 0.0
    %1980 = vmatpush1.msra.mxu0 0.0
    %1981 = vmatprep.subr.mxu0 0.0
    %1982 = vmatpush1.msra.mxu0 0.0
    %1983 = vmatprep.subr.mxu0 0.0
    %1984 = vmatpush1.msra.mxu0 0.0
    %1985 = vmatprep.subr.mxu0 0.0
    %1986 = vmatpush1.msra.mxu0 0.0
    %1987 = vmatprep.subr.mxu0 0.0
    %1988 = vmatpush1.msra.mxu0 0.0
    %1989 = vmatprep.subr.mxu0 0.0
    %1990 = vmatpush1.msra.mxu0 0.0
    %1991 = vmatprep.mubr.f32.mxu0 0.0
    %1992 = vmatmul.mubr.f32.gmra.mrb[0].mxu0 %v1741
    %v1993 = vpop.f32.mrb[0].mxu0
    %v1994 = vadd.f32 %v1810, %v1993
    %v1995 = vpop.f32.mrb[0].mxu0
    %1996 = vmatprep.mubr.f32.mxu0 0.0
    %1997 = vmatmul.mubr.f32.gmra.mrb[0].mxu0 %v1742
    %v1998 = vpop.f32.mrb[0].mxu0
    %v1999 = vadd.f32 %v1810, %v1998
    %v2000 = vpop.f32.mrb[0].mxu0
    %2001 = vmatprep.mubr.f32.mxu0 0.0
    %2002 = vmatmul.mubr.f32.gmra.mrb[0].mxu0 %v1743
    %v2003 = vpop.f32.mrb[0].mxu0
    %v2004 = vadd.f32 %v1810, %v2003
    %v2005 = vpop.f32.mrb[0].mxu0
    %2006 = vmatprep.mubr.f32.mxu0 0.0
    %2007 = vmatmul.mubr.f32.gmra.mrb[0].mxu0 %v1744
    %v2008 = vpop.f32.mrb[0].mxu0
    %v2009 = vadd.f32 %v1810, %v2008
    %v2010 = vpop.f32.mrb[0].mxu0
    %2011 = vmatprep.mubr.f32.mxu0 0.0
    %2012 = vmatmul.mubr.f32.gmra.mrb[0].mxu0 %v1745
    %v2013 = vpop.f32.mrb[0].mxu0
    %v2014 = vadd.f32 %v1810, %v2013
    %v2015 = vpop.f32.mrb[0].mxu0
    %2016 = vmatprep.mubr.f32.mxu0 0.0
    %2017 = vmatmul.mubr.f32.gmra.mrb[0].mxu0 %v1746
    %v2018 = vpop.f32.mrb[0].mxu0
    %v2019 = vadd.f32 %v1810, %v2018
    %v2020 = vpop.f32.mrb[0].mxu0
    %2021 = vmatprep.mubr.f32.mxu0 0.0
    %2022 = vmatmul.mubr.f32.gmra.mrb[0].mxu0 %v1747
    %v2023 = vpop.f32.mrb[0].mxu0
    %v2024 = vadd.f32 %v1810, %v2023
    %v2025 = vpop.f32.mrb[0].mxu0
    %2026 = vmatprep.mubr.f32.mxu0 0.0
    %2027 = vmatmul.mubr.f32.gmra.mrb[0].mxu0 %v1748
    %v2028 = vpop.f32.mrb[0].mxu0
    %v2029 = vadd.f32 %v1810, %v2028
    %v2030 = vpop.f32.mrb[0].mxu0
    %2031 = vdwg.mxu0
    %v2032 = vld [vmem:[#allocation7] sm:$0xff]
    %v2033 = vld [vmem:[#allocation7 + $0x8] sm:$0xff]
    %v2034 = vld [vmem:[#allocation7 + $0x10] sm:$0xff]
    %v2035 = vld [vmem:[#allocation7 + $0x18] sm:$0xff]
    %v2036 = vld [vmem:[#allocation7 + $0x20] sm:$0xff]
    %v2037 = vld [vmem:[#allocation7 + $0x28] sm:$0xff]
    %v2038 = vld [vmem:[#allocation7 + $0x30] sm:$0xff]
    %v2039 = vld [vmem:[#allocation7 + $0x38] sm:$0xff]
    %v2040 = vld [vmem:[#allocation7 + $0x40] sm:$0xff]
    %v2041 = vld [vmem:[#allocation7 + $0x48] sm:$0xff]
    %v2042 = vld [vmem:[#allocation7 + $0x50] sm:$0xff]
    %v2043 = vld [vmem:[#allocation7 + $0x58] sm:$0xff]
    %v2044 = vld [vmem:[#allocation7 + $0x60] sm:$0xff]
    %v2045 = vld [vmem:[#allocation7 + $0x68] sm:$0xff]
    %v2046 = vld [vmem:[#allocation7 + $0x70] sm:$0xff]
    %v2047 = vld [vmem:[#allocation7 + $0x78] sm:$0xff]
    %v2048 = vld [vmem:[#allocation7 + $0x80] sm:$0xff]
    %v2049 = vld [vmem:[#allocation7 + $0x88] sm:$0xff]
    %v2050 = vld [vmem:[#allocation7 + $0x90] sm:$0xff]
    %v2051 = vld [vmem:[#allocation7 + $0x98] sm:$0xff]
    %v2052 = vld [vmem:[#allocation7 + $0xa0] sm:$0xff]
    %v2053 = vld [vmem:[#allocation7 + $0xa8] sm:$0xff]
    %v2054 = vld [vmem:[#allocation7 + $0xb0] sm:$0xff]
    %v2055 = vld [vmem:[#allocation7 + $0xb8] sm:$0xff]
    %v2056 = vld [vmem:[#allocation7 + $0xc0] sm:$0xff]
    %v2057 = vld [vmem:[#allocation7 + $0xc8] sm:$0xff]
    %v2058 = vld [vmem:[#allocation7 + $0xd0] sm:$0xff]
    %v2059 = vld [vmem:[#allocation7 + $0xd8] sm:$0xff]
    %v2060 = vld [vmem:[#allocation7 + $0xe0] sm:$0xff]
    %v2061 = vld [vmem:[#allocation7 + $0xe8] sm:$0xff]
    %v2062 = vld [vmem:[#allocation7 + $0xf0] sm:$0xff]
    %v2063 = vld [vmem:[#allocation7 + $0xf8] sm:$0xff]
    %v2064 = vld [vmem:[#allocation7 + $0x100] sm:$0xff]
    %v2065 = vld [vmem:[#allocation7 + $0x108] sm:$0xff]
    %v2066 = vld [vmem:[#allocation7 + $0x110] sm:$0xff]
    %v2067 = vld [vmem:[#allocation7 + $0x118] sm:$0xff]
    %v2068 = vld [vmem:[#allocation7 + $0x120] sm:$0xff]
    %v2069 = vld [vmem:[#allocation7 + $0x128] sm:$0xff]
    %v2070 = vld [vmem:[#allocation7 + $0x130] sm:$0xff]
    %v2071 = vld [vmem:[#allocation7 + $0x138] sm:$0xff]
    %v2072 = vld [vmem:[#allocation7 + $0x140] sm:$0xff]
    %v2073 = vld [vmem:[#allocation7 + $0x148] sm:$0xff]
    %v2074 = vld [vmem:[#allocation7 + $0x150] sm:$0xff]
    %v2075 = vld [vmem:[#allocation7 + $0x158] sm:$0xff]
    %v2076 = vld [vmem:[#allocation7 + $0x160] sm:$0xff]
    %v2077 = vld [vmem:[#allocation7 + $0x168] sm:$0xff]
    %v2078 = vld [vmem:[#allocation7 + $0x170] sm:$0xff]
    %v2079 = vld [vmem:[#allocation7 + $0x178] sm:$0xff]
    %2080 = vmatprep.subr.mxu0 %v2033
    %2081 = vmatpush1.msra.mxu0 %v2032
    %2082 = vmatprep.subr.mxu0 %v2036
    %2083 = vmatpush1.msra.mxu0 %v2035
    %2084 = vmatprep.subr.mxu0 %v2039
    %2085 = vmatpush1.msra.mxu0 %v2038
    %2086 = vmatprep.subr.mxu0 %v2042
    %2087 = vmatpush1.msra.mxu0 %v2041
    %2088 = vmatprep.subr.mxu0 %v2045
    %2089 = vmatpush1.msra.mxu0 %v2044
    %2090 = vmatprep.subr.mxu0 %v2048
    %2091 = vmatpush1.msra.mxu0 %v2047
    %2092 = vmatprep.subr.mxu0 %v2051
    %2093 = vmatpush1.msra.mxu0 %v2050
    %2094 = vmatprep.subr.mxu0 %v2054
    %2095 = vmatpush1.msra.mxu0 %v2053
    %2096 = vmatprep.subr.mxu0 %v2057
    %2097 = vmatpush1.msra.mxu0 %v2056
    %2098 = vmatprep.subr.mxu0 %v2060
    %2099 = vmatpush1.msra.mxu0 %v2059
    %2100 = vmatprep.subr.mxu0 %v2063
    %2101 = vmatpush1.msra.mxu0 %v2062
    %2102 = vmatprep.subr.mxu0 %v2066
    %2103 = vmatpush1.msra.mxu0 %v2065
    %2104 = vmatprep.subr.mxu0 %v2069
    %2105 = vmatpush1.msra.mxu0 %v2068
    %2106 = vmatprep.subr.mxu0 %v2072
    %2107 = vmatpush1.msra.mxu0 %v2071
    %2108 = vmatprep.subr.mxu0 %v2075
    %2109 = vmatpush1.msra.mxu0 %v2074
    %2110 = vmatprep.subr.mxu0 %v2078
    %2111 = vmatpush1.msra.mxu0 %v2077
    %2112 = vmatprep.subr.mxu0 0.0
    %2113 = vmatpush1.msra.mxu0 0.0
    %2114 = vmatprep.subr.mxu0 0.0
    %2115 = vmatpush1.msra.mxu0 0.0
    %2116 = vmatprep.subr.mxu0 0.0
    %2117 = vmatpush1.msra.mxu0 0.0
    %2118 = vmatprep.subr.mxu0 0.0
    %2119 = vmatpush1.msra.mxu0 0.0
    %2120 = vmatprep.subr.mxu0 0.0
    %2121 = vmatpush1.msra.mxu0 0.0
    %2122 = vmatprep.subr.mxu0 0.0
    %2123 = vmatpush1.msra.mxu0 0.0
    %2124 = vmatprep.subr.mxu0 0.0
    %2125 = vmatpush1.msra.mxu0 0.0
    %2126 = vmatprep.subr.mxu0 0.0
    %2127 = vmatpush1.msra.mxu0 0.0
    %2128 = vmatprep.subr.mxu0 0.0
    %2129 = vmatpush1.msra.mxu0 0.0
    %2130 = vmatprep.subr.mxu0 0.0
    %2131 = vmatpush1.msra.mxu0 0.0
    %2132 = vmatprep.subr.mxu0 0.0
    %2133 = vmatpush1.msra.mxu0 0.0
    %2134 = vmatprep.subr.mxu0 0.0
    %2135 = vmatpush1.msra.mxu0 0.0
    %2136 = vmatprep.subr.mxu0 0.0
    %2137 = vmatpush1.msra.mxu0 0.0
    %2138 = vmatprep.subr.mxu0 0.0
    %2139 = vmatpush1.msra.mxu0 0.0
    %2140 = vmatprep.subr.mxu0 0.0
    %2141 = vmatpush1.msra.mxu0 0.0
    %2142 = vmatprep.subr.mxu0 0.0
    %2143 = vmatpush1.msra.mxu0 0.0
    %2144 = vmatprep.mubr.f32.mxu0 0.0
    %2145 = vmatmul.mubr.f32.gmra.mrb[0].mxu0 %v1741
    %v2146 = vpop.f32.mrb[0].mxu0
    %v2147 = vadd.f32 0.0, %v2146
    %v2148 = vpop.f32.mrb[0].mxu0
    %v2149 = vadd.f32 0.0, %v2148
    %2150 = vmatprep.mubr.f32.mxu0 0.0
    %2151 = vmatmul.mubr.f32.gmra.mrb[0].mxu0 %v1742
    %v2152 = vpop.f32.mrb[0].mxu0
    %v2153 = vadd.f32 0.0, %v2152
    %v2154 = vpop.f32.mrb[0].mxu0
    %v2155 = vadd.f32 0.0, %v2154
    %2156 = vmatprep.mubr.f32.mxu0 0.0
    %2157 = vmatmul.mubr.f32.gmra.mrb[0].mxu0 %v1743
    %v2158 = vpop.f32.mrb[0].mxu0
    %v2159 = vadd.f32 0.0, %v2158
    %v2160 = vpop.f32.mrb[0].mxu0
    %v2161 = vadd.f32 0.0, %v2160
    %2162 = vmatprep.mubr.f32.mxu0 0.0
    %2163 = vmatmul.mubr.f32.gmra.mrb[0].mxu0 %v1744
    %v2164 = vpop.f32.mrb[0].mxu0
    %v2165 = vadd.f32 0.0, %v2164
    %v2166 = vpop.f32.mrb[0].mxu0
    %v2167 = vadd.f32 0.0, %v2166
    %2168 = vmatprep.mubr.f32.mxu0 0.0
    %2169 = vmatmul.mubr.f32.gmra.mrb[0].mxu0 %v1745
    %v2170 = vpop.f32.mrb[0].mxu0
    %v2171 = vadd.f32 0.0, %v2170
    %v2172 = vpop.f32.mrb[0].mxu0
    %v2173 = vadd.f32 0.0, %v2172
    %2174 = vmatprep.mubr.f32.mxu0 0.0
    %2175 = vmatmul.mubr.f32.gmra.mrb[0].mxu0 %v1746
    %v2176 = vpop.f32.mrb[0].mxu0
    %v2177 = vadd.f32 0.0, %v2176
    %v2178 = vpop.f32.mrb[0].mxu0
    %v2179 = vadd.f32 0.0, %v2178
    %2180 = vmatprep.mubr.f32.mxu0 0.0
    %2181 = vmatmul.mubr.f32.gmra.mrb[0].mxu0 %v1747
    %v2182 = vpop.f32.mrb[0].mxu0
    %v2183 = vadd.f32 0.0, %v2182
    %v2184 = vpop.f32.mrb[0].mxu0
    %v2185 = vadd.f32 0.0, %v2184
    %2186 = vmatprep.mubr.f32.mxu0 0.0
    %2187 = vmatmul.mubr.f32.gmra.mrb[0].mxu0 %v1748
    %v2188 = vpop.f32.mrb[0].mxu0
    %v2189 = vadd.f32 0.0, %v2188
    %v2190 = vpop.f32.mrb[0].mxu0
    %v2191 = vadd.f32 0.0, %v2190
    %2192 = vdwg.mxu0
    %2193 = vmatprep.subr.mxu0 0.0
    %2194 = vmatpush1.msra.mxu0 %v2034
    %2195 = vmatprep.subr.mxu0 0.0
    %2196 = vmatpush1.msra.mxu0 %v2037
    %2197 = vmatprep.subr.mxu0 0.0
    %2198 = vmatpush1.msra.mxu0 %v2040
    %2199 = vmatprep.subr.mxu0 0.0
    %2200 = vmatpush1.msra.mxu0 %v2043
    %2201 = vmatprep.subr.mxu0 0.0
    %2202 = vmatpush1.msra.mxu0 %v2046
    %2203 = vmatprep.subr.mxu0 0.0
    %2204 = vmatpush1.msra.mxu0 %v2049
    %2205 = vmatprep.subr.mxu0 0.0
    %2206 = vmatpush1.msra.mxu0 %v2052
    %2207 = vmatprep.subr.mxu0 0.0
    %2208 = vmatpush1.msra.mxu0 %v2055
    %2209 = vmatprep.subr.mxu0 0.0
    %2210 = vmatpush1.msra.mxu0 %v2058
    %2211 = vmatprep.subr.mxu0 0.0
    %2212 = vmatpush1.msra.mxu0 %v2061
    %2213 = vmatprep.subr.mxu0 0.0
    %2214 = vmatpush1.msra.mxu0 %v2064
    %2215 = vmatprep.subr.mxu0 0.0
    %2216 = vmatpush1.msra.mxu0 %v2067
    %2217 = vmatprep.subr.mxu0 0.0
    %2218 = vmatpush1.msra.mxu0 %v2070
    %2219 = vmatprep.subr.mxu0 0.0
    %2220 = vmatpush1.msra.mxu0 %v2073
    %2221 = vmatprep.subr.mxu0 0.0
    %2222 = vmatpush1.msra.mxu0 %v2076
    %2223 = vmatprep.subr.mxu0 0.0
    %2224 = vmatpush1.msra.mxu0 %v2079
    %2225 = vmatprep.subr.mxu0 0.0
    %2226 = vmatpush1.msra.mxu0 0.0
    %2227 = vmatprep.subr.mxu0 0.0
    %2228 = vmatpush1.msra.mxu0 0.0
    %2229 = vmatprep.subr.mxu0 0.0
    %2230 = vmatpush1.msra.mxu0 0.0
    %2231 = vmatprep.subr.mxu0 0.0
    %2232 = vmatpush1.msra.mxu0 0.0
    %2233 = vmatprep.subr.mxu0 0.0
    %2234 = vmatpush1.msra.mxu0 0.0
    %2235 = vmatprep.subr.mxu0 0.0
    %2236 = vmatpush1.msra.mxu0 0.0
    %2237 = vmatprep.subr.mxu0 0.0
    %2238 = vmatpush1.msra.mxu0 0.0
    %2239 = vmatprep.subr.mxu0 0.0
    %2240 = vmatpush1.msra.mxu0 0.0
    %2241 = vmatprep.subr.mxu0 0.0
    %2242 = vmatpush1.msra.mxu0 0.0
    %2243 = vmatprep.subr.mxu0 0.0
    %2244 = vmatpush1.msra.mxu0 0.0
    %2245 = vmatprep.subr.mxu0 0.0
    %2246 = vmatpush1.msra.mxu0 0.0
    %2247 = vmatprep.subr.mxu0 0.0
    %2248 = vmatpush1.msra.mxu0 0.0
    %2249 = vmatprep.subr.mxu0 0.0
    %2250 = vmatpush1.msra.mxu0 0.0
    %2251 = vmatprep.subr.mxu0 0.0
    %2252 = vmatpush1.msra.mxu0 0.0
    %2253 = vmatprep.subr.mxu0 0.0
    %2254 = vmatpush1.msra.mxu0 0.0
    %2255 = vmatprep.subr.mxu0 0.0
    %2256 = vmatpush1.msra.mxu0 0.0
    %2257 = vmatprep.mubr.f32.mxu0 0.0
    %2258 = vmatmul.mubr.f32.gmra.mrb[0].mxu0 %v1741
    %v2259 = vpop.f32.mrb[0].mxu0
    %v2260 = vadd.f32 0.0, %v2259
    %v2261 = vpop.f32.mrb[0].mxu0
    %2262 = vmatprep.mubr.f32.mxu0 0.0
    %2263 = vmatmul.mubr.f32.gmra.mrb[0].mxu0 %v1742
    %v2264 = vpop.f32.mrb[0].mxu0
    %v2265 = vadd.f32 0.0, %v2264
    %v2266 = vpop.f32.mrb[0].mxu0
    %2267 = vmatprep.mubr.f32.mxu0 0.0
    %2268 = vmatmul.mubr.f32.gmra.mrb[0].mxu0 %v1743
    %v2269 = vpop.f32.mrb[0].mxu0
    %v2270 = vadd.f32 0.0, %v2269
    %v2271 = vpop.f32.mrb[0].mxu0
    %2272 = vmatprep.mubr.f32.mxu0 0.0
    %2273 = vmatmul.mubr.f32.gmra.mrb[0].mxu0 %v1744
    %v2274 = vpop.f32.mrb[0].mxu0
    %v2275 = vadd.f32 0.0, %v2274
    %v2276 = vpop.f32.mrb[0].mxu0
    %2277 = vmatprep.mubr.f32.mxu0 0.0
    %2278 = vmatmul.mubr.f32.gmra.mrb[0].mxu0 %v1745
    %v2279 = vpop.f32.mrb[0].mxu0
    %v2280 = vadd.f32 0.0, %v2279
    %v2281 = vpop.f32.mrb[0].mxu0
    %2282 = vmatprep.mubr.f32.mxu0 0.0
    %2283 = vmatmul.mubr.f32.gmra.mrb[0].mxu0 %v1746
    %v2284 = vpop.f32.mrb[0].mxu0
    %v2285 = vadd.f32 0.0, %v2284
    %v2286 = vpop.f32.mrb[0].mxu0
    %2287 = vmatprep.mubr.f32.mxu0 0.0
    %2288 = vmatmul.mubr.f32.gmra.mrb[0].mxu0 %v1747
    %v2289 = vpop.f32.mrb[0].mxu0
    %v2290 = vadd.f32 0.0, %v2289
    %v2291 = vpop.f32.mrb[0].mxu0
    %2292 = vmatprep.mubr.f32.mxu0 0.0
    %2293 = vmatmul.mubr.f32.gmra.mrb[0].mxu0 %v1748
    %v2294 = vpop.f32.mrb[0].mxu0
    %v2295 = vadd.f32 0.0, %v2294
    %v2296 = vpop.f32.mrb[0].mxu0
    %2297 = vdwg.mxu0
    %v2298 = vld [vmem:[#allocation8] sm:$0xff]
    %v2299 = vld [vmem:[#allocation8 + $0x8] sm:$0xff]
    %v2300 = vld [vmem:[#allocation8 + $0x10] sm:$0xff]
    %v2301 = vld [vmem:[#allocation8 + $0x18] sm:$0xff]
    %v2302 = vld [vmem:[#allocation8 + $0x20] sm:$0xff]
    %v2303 = vld [vmem:[#allocation8 + $0x28] sm:$0xff]
    %v2304 = vld [vmem:[#allocation8 + $0x30] sm:$0xff]
    %v2305 = vld [vmem:[#allocation8 + $0x38] sm:$0xff]
    %v2306 = vld [vmem:[#allocation8 + $0x40] sm:$0xff]
    %v2307 = vld [vmem:[#allocation8 + $0x48] sm:$0xff]
    %v2308 = vld [vmem:[#allocation8 + $0x50] sm:$0xff]
    %v2309 = vld [vmem:[#allocation8 + $0x58] sm:$0xff]
    %v2310 = vld [vmem:[#allocation8 + $0x60] sm:$0xff]
    %v2311 = vld [vmem:[#allocation8 + $0x68] sm:$0xff]
    %v2312 = vld [vmem:[#allocation8 + $0x70] sm:$0xff]
    %v2313 = vld [vmem:[#allocation8 + $0x78] sm:$0xff]
    %v2314 = vld [vmem:[#allocation8 + $0x80] sm:$0xff]
    %v2315 = vld [vmem:[#allocation8 + $0x88] sm:$0xff]
    %v2316 = vld [vmem:[#allocation8 + $0x90] sm:$0xff]
    %v2317 = vld [vmem:[#allocation8 + $0x98] sm:$0xff]
    %v2318 = vld [vmem:[#allocation8 + $0xa0] sm:$0xff]
    %v2319 = vld [vmem:[#allocation8 + $0xa8] sm:$0xff]
    %v2320 = vld [vmem:[#allocation8 + $0xb0] sm:$0xff]
    %v2321 = vld [vmem:[#allocation8 + $0xb8] sm:$0xff]
    %v2322 = vld [vmem:[#allocation8 + $0xc0] sm:$0xff]
    %v2323 = vld [vmem:[#allocation8 + $0xc8] sm:$0xff]
    %v2324 = vld [vmem:[#allocation8 + $0xd0] sm:$0xff]
    %v2325 = vld [vmem:[#allocation8 + $0xd8] sm:$0xff]
    %v2326 = vld [vmem:[#allocation8 + $0xe0] sm:$0xff]
    %v2327 = vld [vmem:[#allocation8 + $0xe8] sm:$0xff]
    %v2328 = vld [vmem:[#allocation8 + $0xf0] sm:$0xff]
    %v2329 = vld [vmem:[#allocation8 + $0xf8] sm:$0xff]
    %v2330 = vld [vmem:[#allocation8 + $0x100] sm:$0xff]
    %v2331 = vld [vmem:[#allocation8 + $0x108] sm:$0xff]
    %v2332 = vld [vmem:[#allocation8 + $0x110] sm:$0xff]
    %v2333 = vld [vmem:[#allocation8 + $0x118] sm:$0xff]
    %v2334 = vld [vmem:[#allocation8 + $0x120] sm:$0xff]
    %v2335 = vld [vmem:[#allocation8 + $0x128] sm:$0xff]
    %v2336 = vld [vmem:[#allocation8 + $0x130] sm:$0xff]
    %v2337 = vld [vmem:[#allocation8 + $0x138] sm:$0xff]
    %v2338 = vld [vmem:[#allocation8 + $0x140] sm:$0xff]
    %v2339 = vld [vmem:[#allocation8 + $0x148] sm:$0xff]
    %v2340 = vld [vmem:[#allocation8 + $0x150] sm:$0xff]
    %v2341 = vld [vmem:[#allocation8 + $0x158] sm:$0xff]
    %v2342 = vld [vmem:[#allocation8 + $0x160] sm:$0xff]
    %v2343 = vld [vmem:[#allocation8 + $0x168] sm:$0xff]
    %v2344 = vld [vmem:[#allocation8 + $0x170] sm:$0xff]
    %v2345 = vld [vmem:[#allocation8 + $0x178] sm:$0xff]
    %v2346 = vld [vmem:[%s9] sm:$0x1]
    %v2348 = vlaneseq
    %v2349 = vshrl.u32 %v2348, 7
    %v2350 = vsub.s32 0, %v2349
    %v2351 = vrot.slane %v2346, %v2350
    %v2353 = vadd.f32 %v1881, %v2189
    %v2354 = vadd.f32 %v1883, %v2191
    %v2355 = vadd.f32 %v1994, %v2295
    %2356 = vmatprep.subr.mxu0 %v2299
    %2357 = vmatpush1.msra.mxu0 %v2298
    %2358 = vmatprep.subr.mxu0 %v2302
    %2359 = vmatpush1.msra.mxu0 %v2301
    %2360 = vmatprep.subr.mxu0 %v2305
    %2361 = vmatpush1.msra.mxu0 %v2304
    %2362 = vmatprep.subr.mxu0 %v2308
    %2363 = vmatpush1.msra.mxu0 %v2307
    %2364 = vmatprep.subr.mxu0 %v2311
    %2365 = vmatpush1.msra.mxu0 %v2310
    %2366 = vmatprep.subr.mxu0 %v2314
    %2367 = vmatpush1.msra.mxu0 %v2313
    %2368 = vmatprep.subr.mxu0 %v2317
    %2369 = vmatpush1.msra.mxu0 %v2316
    %2370 = vmatprep.subr.mxu0 %v2320
    %2371 = vmatpush1.msra.mxu0 %v2319
    %2372 = vmatprep.subr.mxu0 %v2323
    %2373 = vmatpush1.msra.mxu0 %v2322
    %2374 = vmatprep.subr.mxu0 %v2326
    %2375 = vmatpush1.msra.mxu0 %v2325
    %2376 = vmatprep.subr.mxu0 %v2329
    %2377 = vmatpush1.msra.mxu0 %v2328
    %2378 = vmatprep.subr.mxu0 %v2332
    %2379 = vmatpush1.msra.mxu0 %v2331
    %2380 = vmatprep.subr.mxu0 %v2335
    %2381 = vmatpush1.msra.mxu0 %v2334
    %2382 = vmatprep.subr.mxu0 %v2338
    %2383 = vmatpush1.msra.mxu0 %v2337
    %2384 = vmatprep.subr.mxu0 %v2341
    %2385 = vmatpush1.msra.mxu0 %v2340
    %2386 = vmatprep.subr.mxu0 %v2344
    %2387 = vmatpush1.msra.mxu0 %v2343
    %2388 = vmatprep.subr.mxu0 0.0
    %2389 = vmatpush1.msra.mxu0 0.0
    %2390 = vmatprep.subr.mxu0 0.0
    %2391 = vmatpush1.msra.mxu0 0.0
    %2392 = vmatprep.subr.mxu0 0.0
    %2393 = vmatpush1.msra.mxu0 0.0
    %2394 = vmatprep.subr.mxu0 0.0
    %2395 = vmatpush1.msra.mxu0 0.0
    %2396 = vmatprep.subr.mxu0 0.0
    %2397 = vmatpush1.msra.mxu0 0.0
    %2398 = vmatprep.subr.mxu0 0.0
    %2399 = vmatpush1.msra.mxu0 0.0
    %2400 = vmatprep.subr.mxu0 0.0
    %2401 = vmatpush1.msra.mxu0 0.0
    %2402 = vmatprep.subr.mxu0 0.0
    %2403 = vmatpush1.msra.mxu0 0.0
    %2404 = vmatprep.subr.mxu0 0.0
    %2405 = vmatpush1.msra.mxu0 0.0
    %2406 = vmatprep.subr.mxu0 0.0
    %2407 = vmatpush1.msra.mxu0 0.0
    %2408 = vmatprep.subr.mxu0 0.0
    %2409 = vmatpush1.msra.mxu0 0.0
    %2410 = vmatprep.subr.mxu0 0.0
    %2411 = vmatpush1.msra.mxu0 0.0
    %2412 = vmatprep.subr.mxu0 0.0
    %2413 = vmatpush1.msra.mxu0 0.0
    %2414 = vmatprep.subr.mxu0 0.0
    %2415 = vmatpush1.msra.mxu0 0.0
    %2416 = vmatprep.subr.mxu0 0.0
    %2417 = vmatpush1.msra.mxu0 0.0
    %2418 = vmatprep.subr.mxu0 0.0
    %2419 = vmatpush1.msra.mxu0 0.0
    %2420 = vmatprep.mubr.f32.mxu0 0.0
    %2421 = vmatmul.mubr.f32.gmra.mrb[0].mxu0 0.0
    %v2422 = vpop.f32.mrb[0].mxu0
    %v2423 = vadd.f32 0.0, %v2422
    %v2424 = vpop.f32.mrb[0].mxu0
    %v2425 = vadd.f32 0.0, %v2424
    %2426 = vdwg.mxu0
    %2427 = vmatprep.subr.mxu0 0.0
    %2428 = vmatpush1.msra.mxu0 %v2300
    %2429 = vmatprep.subr.mxu0 0.0
    %2430 = vmatpush1.msra.mxu0 %v2303
    %2431 = vmatprep.subr.mxu0 0.0
    %2432 = vmatpush1.msra.mxu0 %v2306
    %2433 = vmatprep.subr.mxu0 0.0
    %2434 = vmatpush1.msra.mxu0 %v2309
    %2435 = vmatprep.subr.mxu0 0.0
    %2436 = vmatpush1.msra.mxu0 %v2312
    %2437 = vmatprep.subr.mxu0 0.0
    %2438 = vmatpush1.msra.mxu0 %v2315
    %2439 = vmatprep.subr.mxu0 0.0
    %2440 = vmatpush1.msra.mxu0 %v2318
    %2441 = vmatprep.subr.mxu0 0.0
    %2442 = vmatpush1.msra.mxu0 %v2321
    %2443 = vmatprep.subr.mxu0 0.0
    %2444 = vmatpush1.msra.mxu0 %v2324
    %2445 = vmatprep.subr.mxu0 0.0
    %2446 = vmatpush1.msra.mxu0 %v2327
    %2447 = vmatprep.subr.mxu0 0.0
    %2448 = vmatpush1.msra.mxu0 %v2330
    %2449 = vmatprep.subr.mxu0 0.0
    %2450 = vmatpush1.msra.mxu0 %v2333
    %2451 = vmatprep.subr.mxu0 0.0
    %2452 = vmatpush1.msra.mxu0 %v2336
    %2453 = vmatprep.subr.mxu0 0.0
    %2454 = vmatpush1.msra.mxu0 %v2339
    %2455 = vmatprep.subr.mxu0 0.0
    %2456 = vmatpush1.msra.mxu0 %v2342
    %2457 = vmatprep.subr.mxu0 0.0
    %2458 = vmatpush1.msra.mxu0 %v2345
    %2459 = vmatprep.subr.mxu0 0.0
    %2460 = vmatpush1.msra.mxu0 0.0
    %2461 = vmatprep.subr.mxu0 0.0
    %2462 = vmatpush1.msra.mxu0 0.0
    %2463 = vmatprep.subr.mxu0 0.0
    %2464 = vmatpush1.msra.mxu0 0.0
    %2465 = vmatprep.subr.mxu0 0.0
    %2466 = vmatpush1.msra.mxu0 0.0
    %2467 = vmatprep.subr.mxu0 0.0
    %2468 = vmatpush1.msra.mxu0 0.0
    %2469 = vmatprep.subr.mxu0 0.0
    %2470 = vmatpush1.msra.mxu0 0.0
    %2471 = vmatprep.subr.mxu0 0.0
    %2472 = vmatpush1.msra.mxu0 0.0
    %2473 = vmatprep.subr.mxu0 0.0
    %2474 = vmatpush1.msra.mxu0 0.0
    %2475 = vmatprep.subr.mxu0 0.0
    %2476 = vmatpush1.msra.mxu0 0.0
    %2477 = vmatprep.subr.mxu0 0.0
    %2478 = vmatpush1.msra.mxu0 0.0
    %2479 = vmatprep.subr.mxu0 0.0
    %2480 = vmatpush1.msra.mxu0 0.0
    %2481 = vmatprep.subr.mxu0 0.0
    %2482 = vmatpush1.msra.mxu0 0.0
    %2483 = vmatprep.subr.mxu0 0.0
    %2484 = vmatpush1.msra.mxu0 0.0
    %2485 = vmatprep.subr.mxu0 0.0
    %2486 = vmatpush1.msra.mxu0 0.0
    %2487 = vmatprep.subr.mxu0 0.0
    %2488 = vmatpush1.msra.mxu0 0.0
    %2489 = vmatprep.subr.mxu0 0.0
    %2490 = vmatpush1.msra.mxu0 0.0
    %2491 = vmatprep.mubr.f32.mxu0 0.0
    %2492 = vmatmul.mubr.f32.gmra.mrb[0].mxu0 0.0
    %v2493 = vpop.f32.mrb[0].mxu0
    %v2494 = vadd.f32 0.0, %v2493
    %v2495 = vpop.f32.mrb[0].mxu0
    %2496 = vdwg.mxu0
    %v2497 = vadd.f32 %v2353, %v2423
    %v2498 = vadd.f32 %v2354, %v2425
    %v2499 = vxor.u32 %v2497, 2147483648
    %v2500 = vxor.u32 %v2498, 2147483648
    %v2501 = vmul.f32 %v2499, 1.442695
    %v2502 = vpow.pop %v2501
    %v2503 = vmul.f32 %v2500, 1.442695
    %v2504 = vpow.pop %v2503
    %v2505 = vadd.f32 %v2502, 1.0
    %v2506 = vadd.f32 %v2504, 1.0
    %v2507 = vrcp.pop %v2505
    %v2508 = vmul.f32 1.0, %v2507
    %v2509 = vrcp.pop %v2506
    %v2510 = vmul.f32 1.0, %v2509
    %v2511 = vadd.f32 %v2494, %v2351
    %v2512 = vmul.f32 %v2508, %v2511
    %v2513 = vadd.f32 %v2355, %v2512
    %v2514 = vtanh.pop %v2513
    %v2515 = vsub.f32 1.0, %v2510
    %v2516 = vmul.f32 %v2515, %v2514
    %v2517 = vmul.f32 %v2510, 0.0
    %v2518 = vadd.f32 %v2516, %v2517
    %v2519 = vadd.f32 %v1887, %v2183
    %v2520 = vadd.f32 %v1889, %v2185
    %v2521 = vadd.f32 %v1999, %v2290
    %2522 = vmatprep.subr.mxu0 %v2299
    %2523 = vmatpush1.msra.mxu0 %v2298
    %2524 = vmatprep.subr.mxu0 %v2302
    %2525 = vmatpush1.msra.mxu0 %v2301
    %2526 = vmatprep.subr.mxu0 %v2305
    %2527 = vmatpush1.msra.mxu0 %v2304
    %2528 = vmatprep.subr.mxu0 %v2308
    %2529 = vmatpush1.msra.mxu0 %v2307
    %2530 = vmatprep.subr.mxu0 %v2311
    %2531 = vmatpush1.msra.mxu0 %v2310
    %2532 = vmatprep.subr.mxu0 %v2314
    %2533 = vmatpush1.msra.mxu0 %v2313
    %2534 = vmatprep.subr.mxu0 %v2317
    %2535 = vmatpush1.msra.mxu0 %v2316
    %2536 = vmatprep.subr.mxu0 %v2320
    %2537 = vmatpush1.msra.mxu0 %v2319
    %2538 = vmatprep.subr.mxu0 %v2323
    %2539 = vmatpush1.msra.mxu0 %v2322
    %2540 = vmatprep.subr.mxu0 %v2326
    %2541 = vmatpush1.msra.mxu0 %v2325
    %2542 = vmatprep.subr.mxu0 %v2329
    %2543 = vmatpush1.msra.mxu0 %v2328
    %2544 = vmatprep.subr.mxu0 %v2332
    %2545 = vmatpush1.msra.mxu0 %v2331
    %2546 = vmatprep.subr.mxu0 %v2335
    %2547 = vmatpush1.msra.mxu0 %v2334
    %2548 = vmatprep.subr.mxu0 %v2338
    %2549 = vmatpush1.msra.mxu0 %v2337
    %2550 = vmatprep.subr.mxu0 %v2341
    %2551 = vmatpush1.msra.mxu0 %v2340
    %2552 = vmatprep.subr.mxu0 %v2344
    %2553 = vmatpush1.msra.mxu0 %v2343
    %2554 = vmatprep.subr.mxu0 0.0
    %2555 = vmatpush1.msra.mxu0 0.0
    %2556 = vmatprep.subr.mxu0 0.0
    %2557 = vmatpush1.msra.mxu0 0.0
    %2558 = vmatprep.subr.mxu0 0.0
    %2559 = vmatpush1.msra.mxu0 0.0
    %2560 = vmatprep.subr.mxu0 0.0
    %2561 = vmatpush1.msra.mxu0 0.0
    %2562 = vmatprep.subr.mxu0 0.0
    %2563 = vmatpush1.msra.mxu0 0.0
    %2564 = vmatprep.subr.mxu0 0.0
    %2565 = vmatpush1.msra.mxu0 0.0
    %2566 = vmatprep.subr.mxu0 0.0
    %2567 = vmatpush1.msra.mxu0 0.0
    %2568 = vmatprep.subr.mxu0 0.0
    %2569 = vmatpush1.msra.mxu0 0.0
    %2570 = vmatprep.subr.mxu0 0.0
    %2571 = vmatpush1.msra.mxu0 0.0
    %2572 = vmatprep.subr.mxu0 0.0
    %2573 = vmatpush1.msra.mxu0 0.0
    %2574 = vmatprep.subr.mxu0 0.0
    %2575 = vmatpush1.msra.mxu0 0.0
    %2576 = vmatprep.subr.mxu0 0.0
    %2577 = vmatpush1.msra.mxu0 0.0
    %2578 = vmatprep.subr.mxu0 0.0
    %2579 = vmatpush1.msra.mxu0 0.0
    %2580 = vmatprep.subr.mxu0 0.0
    %2581 = vmatpush1.msra.mxu0 0.0
    %2582 = vmatprep.subr.mxu0 0.0
    %2583 = vmatpush1.msra.mxu0 0.0
    %2584 = vmatprep.subr.mxu0 0.0
    %2585 = vmatpush1.msra.mxu0 0.0
    %2586 = vmatprep.mubr.f32.mxu0 0.0
    %2587 = vmatmul.mubr.f32.gmra.mrb[0].mxu0 %v2518
    %v2588 = vpop.f32.mrb[0].mxu0
    %v2589 = vadd.f32 0.0, %v2588
    %v2590 = vpop.f32.mrb[0].mxu0
    %v2591 = vadd.f32 0.0, %v2590
    %2592 = vdwg.mxu0
    %2593 = vmatprep.subr.mxu0 0.0
    %2594 = vmatpush1.msra.mxu0 %v2300
    %2595 = vmatprep.subr.mxu0 0.0
    %2596 = vmatpush1.msra.mxu0 %v2303
    %2597 = vmatprep.subr.mxu0 0.0
    %2598 = vmatpush1.msra.mxu0 %v2306
    %2599 = vmatprep.subr.mxu0 0.0
    %2600 = vmatpush1.msra.mxu0 %v2309
    %2601 = vmatprep.subr.mxu0 0.0
    %2602 = vmatpush1.msra.mxu0 %v2312
    %2603 = vmatprep.subr.mxu0 0.0
    %2604 = vmatpush1.msra.mxu0 %v2315
    %2605 = vmatprep.subr.mxu0 0.0
    %2606 = vmatpush1.msra.mxu0 %v2318
    %2607 = vmatprep.subr.mxu0 0.0
    %2608 = vmatpush1.msra.mxu0 %v2321
    %2609 = vmatprep.subr.mxu0 0.0
    %2610 = vmatpush1.msra.mxu0 %v2324
    %2611 = vmatprep.subr.mxu0 0.0
    %2612 = vmatpush1.msra.mxu0 %v2327
    %2613 = vmatprep.subr.mxu0 0.0
    %2614 = vmatpush1.msra.mxu0 %v2330
    %2615 = vmatprep.subr.mxu0 0.0
    %2616 = vmatpush1.msra.mxu0 %v2333
    %2617 = vmatprep.subr.mxu0 0.0
    %2618 = vmatpush1.msra.mxu0 %v2336
    %2619 = vmatprep.subr.mxu0 0.0
    %2620 = vmatpush1.msra.mxu0 %v2339
    %2621 = vmatprep.subr.mxu0 0.0
    %2622 = vmatpush1.msra.mxu0 %v2342
    %2623 = vmatprep.subr.mxu0 0.0
    %2624 = vmatpush1.msra.mxu0 %v2345
    %2625 = vmatprep.subr.mxu0 0.0
    %2626 = vmatpush1.msra.mxu0 0.0
    %2627 = vmatprep.subr.mxu0 0.0
    %2628 = vmatpush1.msra.mxu0 0.0
    %2629 = vmatprep.subr.mxu0 0.0
    %2630 = vmatpush1.msra.mxu0 0.0
    %2631 = vmatprep.subr.mxu0 0.0
    %2632 = vmatpush1.msra.mxu0 0.0
    %2633 = vmatprep.subr.mxu0 0.0
    %2634 = vmatpush1.msra.mxu0 0.0
    %2635 = vmatprep.subr.mxu0 0.0
    %2636 = vmatpush1.msra.mxu0 0.0
    %2637 = vmatprep.subr.mxu0 0.0
    %2638 = vmatpush1.msra.mxu0 0.0
    %2639 = vmatprep.subr.mxu0 0.0
    %2640 = vmatpush1.msra.mxu0 0.0
    %2641 = vmatprep.subr.mxu0 0.0
    %2642 = vmatpush1.msra.mxu0 0.0
    %2643 = vmatprep.subr.mxu0 0.0
    %2644 = vmatpush1.msra.mxu0 0.0
    %2645 = vmatprep.subr.mxu0 0.0
    %2646 = vmatpush1.msra.mxu0 0.0
    %2647 = vmatprep.subr.mxu0 0.0
    %2648 = vmatpush1.msra.mxu0 0.0
    %2649 = vmatprep.subr.mxu0 0.0
    %2650 = vmatpush1.msra.mxu0 0.0
    %2651 = vmatprep.subr.mxu0 0.0
    %2652 = vmatpush1.msra.mxu0 0.0
    %2653 = vmatprep.subr.mxu0 0.0
    %2654 = vmatpush1.msra.mxu0 0.0
    %2655 = vmatprep.subr.mxu0 0.0
    %2656 = vmatpush1.msra.mxu0 0.0
    %2657 = vmatprep.mubr.f32.mxu0 0.0
    %2658 = vmatmul.mubr.f32.gmra.mrb[0].mxu0 %v2518
    %v2659 = vpop.f32.mrb[0].mxu0
    %v2660 = vadd.f32 0.0, %v2659
    %v2661 = vpop.f32.mrb[0].mxu0
    %2662 = vdwg.mxu0
    %v2663 = vadd.f32 %v2519, %v2589
    %v2664 = vadd.f32 %v2520, %v2591
    %v2665 = vxor.u32 %v2663, 2147483648
    %v2666 = vxor.u32 %v2664, 2147483648
    %v2667 = vmul.f32 %v2665, 1.442695
    %v2668 = vpow.pop %v2667
    %v2669 = vmul.f32 %v2666, 1.442695
    %v2670 = vpow.pop %v2669
    %v2671 = vadd.f32 %v2668, 1.0
    %v2672 = vadd.f32 %v2670, 1.0
    %v2673 = vrcp.pop %v2671
    %v2674 = vmul.f32 1.0, %v2673
    %v2675 = vrcp.pop %v2672
    %v2676 = vmul.f32 1.0, %v2675
    %v2677 = vadd.f32 %v2660, %v2351
    %v2678 = vmul.f32 %v2674, %v2677
    %v2679 = vadd.f32 %v2521, %v2678
    %v2680 = vtanh.pop %v2679
    %v2681 = vsub.f32 1.0, %v2676
    %v2682 = vmul.f32 %v2681, %v2680
    %v2683 = vmul.f32 %v2676, %v2518
    %v2684 = vadd.f32 %v2682, %v2683
    %v2685 = vadd.f32 %v1893, %v2177
    %v2686 = vadd.f32 %v1895, %v2179
    %v2687 = vadd.f32 %v2004, %v2285
    %2688 = vmatprep.subr.mxu0 %v2299
    %2689 = vmatpush1.msra.mxu0 %v2298
    %2690 = vmatprep.subr.mxu0 %v2302
    %2691 = vmatpush1.msra.mxu0 %v2301
    %2692 = vmatprep.subr.mxu0 %v2305
    %2693 = vmatpush1.msra.mxu0 %v2304
    %2694 = vmatprep.subr.mxu0 %v2308
    %2695 = vmatpush1.msra.mxu0 %v2307
    %2696 = vmatprep.subr.mxu0 %v2311
    %2697 = vmatpush1.msra.mxu0 %v2310
    %2698 = vmatprep.subr.mxu0 %v2314
    %2699 = vmatpush1.msra.mxu0 %v2313
    %2700 = vmatprep.subr.mxu0 %v2317
    %2701 = vmatpush1.msra.mxu0 %v2316
    %2702 = vmatprep.subr.mxu0 %v2320
    %2703 = vmatpush1.msra.mxu0 %v2319
    %2704 = vmatprep.subr.mxu0 %v2323
    %2705 = vmatpush1.msra.mxu0 %v2322
    %2706 = vmatprep.subr.mxu0 %v2326
    %2707 = vmatpush1.msra.mxu0 %v2325
    %2708 = vmatprep.subr.mxu0 %v2329
    %2709 = vmatpush1.msra.mxu0 %v2328
    %2710 = vmatprep.subr.mxu0 %v2332
    %2711 = vmatpush1.msra.mxu0 %v2331
    %2712 = vmatprep.subr.mxu0 %v2335
    %2713 = vmatpush1.msra.mxu0 %v2334
    %2714 = vmatprep.subr.mxu0 %v2338
    %2715 = vmatpush1.msra.mxu0 %v2337
    %2716 = vmatprep.subr.mxu0 %v2341
    %2717 = vmatpush1.msra.mxu0 %v2340
    %2718 = vmatprep.subr.mxu0 %v2344
    %2719 = vmatpush1.msra.mxu0 %v2343
    %2720 = vmatprep.subr.mxu0 0.0
    %2721 = vmatpush1.msra.mxu0 0.0
    %2722 = vmatprep.subr.mxu0 0.0
    %2723 = vmatpush1.msra.mxu0 0.0
    %2724 = vmatprep.subr.mxu0 0.0
    %2725 = vmatpush1.msra.mxu0 0.0
    %2726 = vmatprep.subr.mxu0 0.0
    %2727 = vmatpush1.msra.mxu0 0.0
    %2728 = vmatprep.subr.mxu0 0.0
    %2729 = vmatpush1.msra.mxu0 0.0
    %2730 = vmatprep.subr.mxu0 0.0
    %2731 = vmatpush1.msra.mxu0 0.0
    %2732 = vmatprep.subr.mxu0 0.0
    %2733 = vmatpush1.msra.mxu0 0.0
    %2734 = vmatprep.subr.mxu0 0.0
    %2735 = vmatpush1.msra.mxu0 0.0
    %2736 = vmatprep.subr.mxu0 0.0
    %2737 = vmatpush1.msra.mxu0 0.0
    %2738 = vmatprep.subr.mxu0 0.0
    %2739 = vmatpush1.msra.mxu0 0.0
    %2740 = vmatprep.subr.mxu0 0.0
    %2741 = vmatpush1.msra.mxu0 0.0
    %2742 = vmatprep.subr.mxu0 0.0
    %2743 = vmatpush1.msra.mxu0 0.0
    %2744 = vmatprep.subr.mxu0 0.0
    %2745 = vmatpush1.msra.mxu0 0.0
    %2746 = vmatprep.subr.mxu0 0.0
    %2747 = vmatpush1.msra.mxu0 0.0
    %2748 = vmatprep.subr.mxu0 0.0
    %2749 = vmatpush1.msra.mxu0 0.0
    %2750 = vmatprep.subr.mxu0 0.0
    %2751 = vmatpush1.msra.mxu0 0.0
    %2752 = vmatprep.mubr.f32.mxu0 0.0
    %2753 = vmatmul.mubr.f32.gmra.mrb[0].mxu0 %v2684
    %v2754 = vpop.f32.mrb[0].mxu0
    %v2755 = vadd.f32 0.0, %v2754
    %v2756 = vpop.f32.mrb[0].mxu0
    %v2757 = vadd.f32 0.0, %v2756
    %2758 = vdwg.mxu0
    %2759 = vmatprep.subr.mxu0 0.0
    %2760 = vmatpush1.msra.mxu0 %v2300
    %2761 = vmatprep.subr.mxu0 0.0
    %2762 = vmatpush1.msra.mxu0 %v2303
    %2763 = vmatprep.subr.mxu0 0.0
    %2764 = vmatpush1.msra.mxu0 %v2306
    %2765 = vmatprep.subr.mxu0 0.0
    %2766 = vmatpush1.msra.mxu0 %v2309
    %2767 = vmatprep.subr.mxu0 0.0
    %2768 = vmatpush1.msra.mxu0 %v2312
    %2769 = vmatprep.subr.mxu0 0.0
    %2770 = vmatpush1.msra.mxu0 %v2315
    %2771 = vmatprep.subr.mxu0 0.0
    %2772 = vmatpush1.msra.mxu0 %v2318
    %2773 = vmatprep.subr.mxu0 0.0
    %2774 = vmatpush1.msra.mxu0 %v2321
    %2775 = vmatprep.subr.mxu0 0.0
    %2776 = vmatpush1.msra.mxu0 %v2324
    %2777 = vmatprep.subr.mxu0 0.0
    %2778 = vmatpush1.msra.mxu0 %v2327
    %2779 = vmatprep.subr.mxu0 0.0
    %2780 = vmatpush1.msra.mxu0 %v2330
    %2781 = vmatprep.subr.mxu0 0.0
    %2782 = vmatpush1.msra.mxu0 %v2333
    %2783 = vmatprep.subr.mxu0 0.0
    %2784 = vmatpush1.msra.mxu0 %v2336
    %2785 = vmatprep.subr.mxu0 0.0
    %2786 = vmatpush1.msra.mxu0 %v2339
    %2787 = vmatprep.subr.mxu0 0.0
    %2788 = vmatpush1.msra.mxu0 %v2342
    %2789 = vmatprep.subr.mxu0 0.0
    %2790 = vmatpush1.msra.mxu0 %v2345
    %2791 = vmatprep.subr.mxu0 0.0
    %2792 = vmatpush1.msra.mxu0 0.0
    %2793 = vmatprep.subr.mxu0 0.0
    %2794 = vmatpush1.msra.mxu0 0.0
    %2795 = vmatprep.subr.mxu0 0.0
    %2796 = vmatpush1.msra.mxu0 0.0
    %2797 = vmatprep.subr.mxu0 0.0
    %2798 = vmatpush1.msra.mxu0 0.0
    %2799 = vmatprep.subr.mxu0 0.0
    %2800 = vmatpush1.msra.mxu0 0.0
    %2801 = vmatprep.subr.mxu0 0.0
    %2802 = vmatpush1.msra.mxu0 0.0
    %2803 = vmatprep.subr.mxu0 0.0
    %2804 = vmatpush1.msra.mxu0 0.0
    %2805 = vmatprep.subr.mxu0 0.0
    %2806 = vmatpush1.msra.mxu0 0.0
    %2807 = vmatprep.subr.mxu0 0.0
    %2808 = vmatpush1.msra.mxu0 0.0
    %2809 = vmatprep.subr.mxu0 0.0
    %2810 = vmatpush1.msra.mxu0 0.0
    %2811 = vmatprep.subr.mxu0 0.0
    %2812 = vmatpush1.msra.mxu0 0.0
    %2813 = vmatprep.subr.mxu0 0.0
    %2814 = vmatpush1.msra.mxu0 0.0
    %2815 = vmatprep.subr.mxu0 0.0
    %2816 = vmatpush1.msra.mxu0 0.0
    %2817 = vmatprep.subr.mxu0 0.0
    %2818 = vmatpush1.msra.mxu0 0.0
    %2819 = vmatprep.subr.mxu0 0.0
    %2820 = vmatpush1.msra.mxu0 0.0
    %2821 = vmatprep.subr.mxu0 0.0
    %2822 = vmatpush1.msra.mxu0 0.0
    %2823 = vmatprep.mubr.f32.mxu0 0.0
    %2824 = vmatmul.mubr.f32.gmra.mrb[0].mxu0 %v2684
    %v2825 = vpop.f32.mrb[0].mxu0
    %v2826 = vadd.f32 0.0, %v2825
    %v2827 = vpop.f32.mrb[0].mxu0
    %2828 = vdwg.mxu0
    %v2829 = vadd.f32 %v2685, %v2755
    %v2830 = vadd.f32 %v2686, %v2757
    %v2831 = vxor.u32 %v2829, 2147483648
    %v2832 = vxor.u32 %v2830, 2147483648
    %v2833 = vmul.f32 %v2831, 1.442695
    %v2834 = vpow.pop %v2833
    %v2835 = vmul.f32 %v2832, 1.442695
    %v2836 = vpow.pop %v2835
    %v2837 = vadd.f32 %v2834, 1.0
    %v2838 = vadd.f32 %v2836, 1.0
    %v2839 = vrcp.pop %v2837
    %v2840 = vmul.f32 1.0, %v2839
    %v2841 = vrcp.pop %v2838
    %v2842 = vmul.f32 1.0, %v2841
    %v2843 = vadd.f32 %v2826, %v2351
    %v2844 = vmul.f32 %v2840, %v2843
    %v2845 = vadd.f32 %v2687, %v2844
    %v2846 = vtanh.pop %v2845
    %v2847 = vsub.f32 1.0, %v2842
    %v2848 = vmul.f32 %v2847, %v2846
    %v2849 = vmul.f32 %v2842, %v2684
    %v2850 = vadd.f32 %v2848, %v2849
    %v2851 = vadd.f32 %v1899, %v2171
    %v2852 = vadd.f32 %v1901, %v2173
    %v2853 = vadd.f32 %v2009, %v2280
    %2854 = vmatprep.subr.mxu0 %v2299
    %2855 = vmatpush1.msra.mxu0 %v2298
    %2856 = vmatprep.subr.mxu0 %v2302
    %2857 = vmatpush1.msra.mxu0 %v2301
    %2858 = vmatprep.subr.mxu0 %v2305
    %2859 = vmatpush1.msra.mxu0 %v2304
    %2860 = vmatprep.subr.mxu0 %v2308
    %2861 = vmatpush1.msra.mxu0 %v2307
    %2862 = vmatprep.subr.mxu0 %v2311
    %2863 = vmatpush1.msra.mxu0 %v2310
    %2864 = vmatprep.subr.mxu0 %v2314
    %2865 = vmatpush1.msra.mxu0 %v2313
    %2866 = vmatprep.subr.mxu0 %v2317
    %2867 = vmatpush1.msra.mxu0 %v2316
    %2868 = vmatprep.subr.mxu0 %v2320
    %2869 = vmatpush1.msra.mxu0 %v2319
    %2870 = vmatprep.subr.mxu0 %v2323
    %2871 = vmatpush1.msra.mxu0 %v2322
    %2872 = vmatprep.subr.mxu0 %v2326
    %2873 = vmatpush1.msra.mxu0 %v2325
    %2874 = vmatprep.subr.mxu0 %v2329
    %2875 = vmatpush1.msra.mxu0 %v2328
    %2876 = vmatprep.subr.mxu0 %v2332
    %2877 = vmatpush1.msra.mxu0 %v2331
    %2878 = vmatprep.subr.mxu0 %v2335
    %2879 = vmatpush1.msra.mxu0 %v2334
    %2880 = vmatprep.subr.mxu0 %v2338
    %2881 = vmatpush1.msra.mxu0 %v2337
    %2882 = vmatprep.subr.mxu0 %v2341
    %2883 = vmatpush1.msra.mxu0 %v2340
    %2884 = vmatprep.subr.mxu0 %v2344
    %2885 = vmatpush1.msra.mxu0 %v2343
    %2886 = vmatprep.subr.mxu0 0.0
    %2887 = vmatpush1.msra.mxu0 0.0
    %2888 = vmatprep.subr.mxu0 0.0
    %2889 = vmatpush1.msra.mxu0 0.0
    %2890 = vmatprep.subr.mxu0 0.0
    %2891 = vmatpush1.msra.mxu0 0.0
    %2892 = vmatprep.subr.mxu0 0.0
    %2893 = vmatpush1.msra.mxu0 0.0
    %2894 = vmatprep.subr.mxu0 0.0
    %2895 = vmatpush1.msra.mxu0 0.0
    %2896 = vmatprep.subr.mxu0 0.0
    %2897 = vmatpush1.msra.mxu0 0.0
    %2898 = vmatprep.subr.mxu0 0.0
    %2899 = vmatpush1.msra.mxu0 0.0
    %2900 = vmatprep.subr.mxu0 0.0
    %2901 = vmatpush1.msra.mxu0 0.0
    %2902 = vmatprep.subr.mxu0 0.0
    %2903 = vmatpush1.msra.mxu0 0.0
    %2904 = vmatprep.subr.mxu0 0.0
    %2905 = vmatpush1.msra.mxu0 0.0
    %2906 = vmatprep.subr.mxu0 0.0
    %2907 = vmatpush1.msra.mxu0 0.0
    %2908 = vmatprep.subr.mxu0 0.0
    %2909 = vmatpush1.msra.mxu0 0.0
    %2910 = vmatprep.subr.mxu0 0.0
    %2911 = vmatpush1.msra.mxu0 0.0
    %2912 = vmatprep.subr.mxu0 0.0
    %2913 = vmatpush1.msra.mxu0 0.0
    %2914 = vmatprep.subr.mxu0 0.0
    %2915 = vmatpush1.msra.mxu0 0.0
    %2916 = vmatprep.subr.mxu0 0.0
    %2917 = vmatpush1.msra.mxu0 0.0
    %2918 = vmatprep.mubr.f32.mxu0 0.0
    %2919 = vmatmul.mubr.f32.gmra.mrb[0].mxu0 %v2850
    %v2920 = vpop.f32.mrb[0].mxu0
    %v2921 = vadd.f32 0.0, %v2920
    %v2922 = vpop.f32.mrb[0].mxu0
    %v2923 = vadd.f32 0.0, %v2922
    %2924 = vdwg.mxu0
    %2925 = vmatprep.subr.mxu0 0.0
    %2926 = vmatpush1.msra.mxu0 %v2300
    %2927 = vmatprep.subr.mxu0 0.0
    %2928 = vmatpush1.msra.mxu0 %v2303
    %2929 = vmatprep.subr.mxu0 0.0
    %2930 = vmatpush1.msra.mxu0 %v2306
    %2931 = vmatprep.subr.mxu0 0.0
    %2932 = vmatpush1.msra.mxu0 %v2309
    %2933 = vmatprep.subr.mxu0 0.0
    %2934 = vmatpush1.msra.mxu0 %v2312
    %2935 = vmatprep.subr.mxu0 0.0
    %2936 = vmatpush1.msra.mxu0 %v2315
    %2937 = vmatprep.subr.mxu0 0.0
    %2938 = vmatpush1.msra.mxu0 %v2318
    %2939 = vmatprep.subr.mxu0 0.0
    %2940 = vmatpush1.msra.mxu0 %v2321
    %2941 = vmatprep.subr.mxu0 0.0
    %2942 = vmatpush1.msra.mxu0 %v2324
    %2943 = vmatprep.subr.mxu0 0.0
    %2944 = vmatpush1.msra.mxu0 %v2327
    %2945 = vmatprep.subr.mxu0 0.0
    %2946 = vmatpush1.msra.mxu0 %v2330
    %2947 = vmatprep.subr.mxu0 0.0
    %2948 = vmatpush1.msra.mxu0 %v2333
    %2949 = vmatprep.subr.mxu0 0.0
    %2950 = vmatpush1.msra.mxu0 %v2336
    %2951 = vmatprep.subr.mxu0 0.0
    %2952 = vmatpush1.msra.mxu0 %v2339
    %2953 = vmatprep.subr.mxu0 0.0
    %2954 = vmatpush1.msra.mxu0 %v2342
    %2955 = vmatprep.subr.mxu0 0.0
    %2956 = vmatpush1.msra.mxu0 %v2345
    %2957 = vmatprep.subr.mxu0 0.0
    %2958 = vmatpush1.msra.mxu0 0.0
    %2959 = vmatprep.subr.mxu0 0.0
    %2960 = vmatpush1.msra.mxu0 0.0
    %2961 = vmatprep.subr.mxu0 0.0
    %2962 = vmatpush1.msra.mxu0 0.0
    %2963 = vmatprep.subr.mxu0 0.0
    %2964 = vmatpush1.msra.mxu0 0.0
    %2965 = vmatprep.subr.mxu0 0.0
    %2966 = vmatpush1.msra.mxu0 0.0
    %2967 = vmatprep.subr.mxu0 0.0
    %2968 = vmatpush1.msra.mxu0 0.0
    %2969 = vmatprep.subr.mxu0 0.0
    %2970 = vmatpush1.msra.mxu0 0.0
    %2971 = vmatprep.subr.mxu0 0.0
    %2972 = vmatpush1.msra.mxu0 0.0
    %2973 = vmatprep.subr.mxu0 0.0
    %2974 = vmatpush1.msra.mxu0 0.0
    %2975 = vmatprep.subr.mxu0 0.0
    %2976 = vmatpush1.msra.mxu0 0.0
    %2977 = vmatprep.subr.mxu0 0.0
    %2978 = vmatpush1.msra.mxu0 0.0
    %2979 = vmatprep.subr.mxu0 0.0
    %2980 = vmatpush1.msra.mxu0 0.0
    %2981 = vmatprep.subr.mxu0 0.0
    %2982 = vmatpush1.msra.mxu0 0.0
    %2983 = vmatprep.subr.mxu0 0.0
    %2984 = vmatpush1.msra.mxu0 0.0
    %2985 = vmatprep.subr.mxu0 0.0
    %2986 = vmatpush1.msra.mxu0 0.0
    %2987 = vmatprep.subr.mxu0 0.0
    %2988 = vmatpush1.msra.mxu0 0.0
    %2989 = vmatprep.mubr.f32.mxu0 0.0
    %2990 = vmatmul.mubr.f32.gmra.mrb[0].mxu0 %v2850
    %v2991 = vpop.f32.mrb[0].mxu0
    %v2992 = vadd.f32 0.0, %v2991
    %v2993 = vpop.f32.mrb[0].mxu0
    %2994 = vdwg.mxu0
    %v2995 = vadd.f32 %v2851, %v2921
    %v2996 = vadd.f32 %v2852, %v2923
    %v2997 = vxor.u32 %v2995, 2147483648
    %v2998 = vxor.u32 %v2996, 2147483648
    %v2999 = vmul.f32 %v2997, 1.442695
    %v3000 = vpow.pop %v2999
    %v3001 = vmul.f32 %v2998, 1.442695
    %v3002 = vpow.pop %v3001
    %v3003 = vadd.f32 %v3000, 1.0
    %v3004 = vadd.f32 %v3002, 1.0
    %v3005 = vrcp.pop %v3003
    %v3006 = vmul.f32 1.0, %v3005
    %v3007 = vrcp.pop %v3004
    %v3008 = vmul.f32 1.0, %v3007
    %v3009 = vadd.f32 %v2992, %v2351
    %v3010 = vmul.f32 %v3006, %v3009
    %v3011 = vadd.f32 %v2853, %v3010
    %v3012 = vtanh.pop %v3011
    %v3013 = vsub.f32 1.0, %v3008
    %v3014 = vmul.f32 %v3013, %v3012
    %v3015 = vmul.f32 %v3008, %v2850
    %v3016 = vadd.f32 %v3014, %v3015
    %v3017 = vadd.f32 %v1905, %v2165
    %v3018 = vadd.f32 %v1907, %v2167
    %v3019 = vadd.f32 %v2014, %v2275
    %3020 = vmatprep.subr.mxu0 %v2299
    %3021 = vmatpush1.msra.mxu0 %v2298
    %3022 = vmatprep.subr.mxu0 %v2302
    %3023 = vmatpush1.msra.mxu0 %v2301
    %3024 = vmatprep.subr.mxu0 %v2305
    %3025 = vmatpush1.msra.mxu0 %v2304
    %3026 = vmatprep.subr.mxu0 %v2308
    %3027 = vmatpush1.msra.mxu0 %v2307
    %3028 = vmatprep.subr.mxu0 %v2311
    %3029 = vmatpush1.msra.mxu0 %v2310
    %3030 = vmatprep.subr.mxu0 %v2314
    %3031 = vmatpush1.msra.mxu0 %v2313
    %3032 = vmatprep.subr.mxu0 %v2317
    %3033 = vmatpush1.msra.mxu0 %v2316
    %3034 = vmatprep.subr.mxu0 %v2320
    %3035 = vmatpush1.msra.mxu0 %v2319
    %3036 = vmatprep.subr.mxu0 %v2323
    %3037 = vmatpush1.msra.mxu0 %v2322
    %3038 = vmatprep.subr.mxu0 %v2326
    %3039 = vmatpush1.msra.mxu0 %v2325
    %3040 = vmatprep.subr.mxu0 %v2329
    %3041 = vmatpush1.msra.mxu0 %v2328
    %3042 = vmatprep.subr.mxu0 %v2332
    %3043 = vmatpush1.msra.mxu0 %v2331
    %3044 = vmatprep.subr.mxu0 %v2335
    %3045 = vmatpush1.msra.mxu0 %v2334
    %3046 = vmatprep.subr.mxu0 %v2338
    %3047 = vmatpush1.msra.mxu0 %v2337
    %3048 = vmatprep.subr.mxu0 %v2341
    %3049 = vmatpush1.msra.mxu0 %v2340
    %3050 = vmatprep.subr.mxu0 %v2344
    %3051 = vmatpush1.msra.mxu0 %v2343
    %3052 = vmatprep.subr.mxu0 0.0
    %3053 = vmatpush1.msra.mxu0 0.0
    %3054 = vmatprep.subr.mxu0 0.0
    %3055 = vmatpush1.msra.mxu0 0.0
    %3056 = vmatprep.subr.mxu0 0.0
    %3057 = vmatpush1.msra.mxu0 0.0
    %3058 = vmatprep.subr.mxu0 0.0
    %3059 = vmatpush1.msra.mxu0 0.0
    %3060 = vmatprep.subr.mxu0 0.0
    %3061 = vmatpush1.msra.mxu0 0.0
    %3062 = vmatprep.subr.mxu0 0.0
    %3063 = vmatpush1.msra.mxu0 0.0
    %3064 = vmatprep.subr.mxu0 0.0
    %3065 = vmatpush1.msra.mxu0 0.0
    %3066 = vmatprep.subr.mxu0 0.0
    %3067 = vmatpush1.msra.mxu0 0.0
    %3068 = vmatprep.subr.mxu0 0.0
    %3069 = vmatpush1.msra.mxu0 0.0
    %3070 = vmatprep.subr.mxu0 0.0
    %3071 = vmatpush1.msra.mxu0 0.0
    %3072 = vmatprep.subr.mxu0 0.0
    %3073 = vmatpush1.msra.mxu0 0.0
    %3074 = vmatprep.subr.mxu0 0.0
    %3075 = vmatpush1.msra.mxu0 0.0
    %3076 = vmatprep.subr.mxu0 0.0
    %3077 = vmatpush1.msra.mxu0 0.0
    %3078 = vmatprep.subr.mxu0 0.0
    %3079 = vmatpush1.msra.mxu0 0.0
    %3080 = vmatprep.subr.mxu0 0.0
    %3081 = vmatpush1.msra.mxu0 0.0
    %3082 = vmatprep.subr.mxu0 0.0
    %3083 = vmatpush1.msra.mxu0 0.0
    %3084 = vmatprep.mubr.f32.mxu0 0.0
    %3085 = vmatmul.mubr.f32.gmra.mrb[0].mxu0 %v3016
    %v3086 = vpop.f32.mrb[0].mxu0
    %v3087 = vadd.f32 0.0, %v3086
    %v3088 = vpop.f32.mrb[0].mxu0
    %v3089 = vadd.f32 0.0, %v3088
    %3090 = vdwg.mxu0
    %3091 = vmatprep.subr.mxu0 0.0
    %3092 = vmatpush1.msra.mxu0 %v2300
    %3093 = vmatprep.subr.mxu0 0.0
    %3094 = vmatpush1.msra.mxu0 %v2303
    %3095 = vmatprep.subr.mxu0 0.0
    %3096 = vmatpush1.msra.mxu0 %v2306
    %3097 = vmatprep.subr.mxu0 0.0
    %3098 = vmatpush1.msra.mxu0 %v2309
    %3099 = vmatprep.subr.mxu0 0.0
    %3100 = vmatpush1.msra.mxu0 %v2312
    %3101 = vmatprep.subr.mxu0 0.0
    %3102 = vmatpush1.msra.mxu0 %v2315
    %3103 = vmatprep.subr.mxu0 0.0
    %3104 = vmatpush1.msra.mxu0 %v2318
    %3105 = vmatprep.subr.mxu0 0.0
    %3106 = vmatpush1.msra.mxu0 %v2321
    %3107 = vmatprep.subr.mxu0 0.0
    %3108 = vmatpush1.msra.mxu0 %v2324
    %3109 = vmatprep.subr.mxu0 0.0
    %3110 = vmatpush1.msra.mxu0 %v2327
    %3111 = vmatprep.subr.mxu0 0.0
    %3112 = vmatpush1.msra.mxu0 %v2330
    %3113 = vmatprep.subr.mxu0 0.0
    %3114 = vmatpush1.msra.mxu0 %v2333
    %3115 = vmatprep.subr.mxu0 0.0
    %3116 = vmatpush1.msra.mxu0 %v2336
    %3117 = vmatprep.subr.mxu0 0.0
    %3118 = vmatpush1.msra.mxu0 %v2339
    %3119 = vmatprep.subr.mxu0 0.0
    %3120 = vmatpush1.msra.mxu0 %v2342
    %3121 = vmatprep.subr.mxu0 0.0
    %3122 = vmatpush1.msra.mxu0 %v2345
    %3123 = vmatprep.subr.mxu0 0.0
    %3124 = vmatpush1.msra.mxu0 0.0
    %3125 = vmatprep.subr.mxu0 0.0
    %3126 = vmatpush1.msra.mxu0 0.0
    %3127 = vmatprep.subr.mxu0 0.0
    %3128 = vmatpush1.msra.mxu0 0.0
    %3129 = vmatprep.subr.mxu0 0.0
    %3130 = vmatpush1.msra.mxu0 0.0
    %3131 = vmatprep.subr.mxu0 0.0
    %3132 = vmatpush1.msra.mxu0 0.0
    %3133 = vmatprep.subr.mxu0 0.0
    %3134 = vmatpush1.msra.mxu0 0.0
    %3135 = vmatprep.subr.mxu0 0.0
    %3136 = vmatpush1.msra.mxu0 0.0
    %3137 = vmatprep.subr.mxu0 0.0
    %3138 = vmatpush1.msra.mxu0 0.0
    %3139 = vmatprep.subr.mxu0 0.0
    %3140 = vmatpush1.msra.mxu0 0.0
    %3141 = vmatprep.subr.mxu0 0.0
    %3142 = vmatpush1.msra.mxu0 0.0
    %3143 = vmatprep.subr.mxu0 0.0
    %3144 = vmatpush1.msra.mxu0 0.0
    %3145 = vmatprep.subr.mxu0 0.0
    %3146 = vmatpush1.msra.mxu0 0.0
    %3147 = vmatprep.subr.mxu0 0.0
    %3148 = vmatpush1.msra.mxu0 0.0
    %3149 = vmatprep.subr.mxu0 0.0
    %3150 = vmatpush1.msra.mxu0 0.0
    %3151 = vmatprep.subr.mxu0 0.0
    %3152 = vmatpush1.msra.mxu0 0.0
    %3153 = vmatprep.subr.mxu0 0.0
    %3154 = vmatpush1.msra.mxu0 0.0
    %3155 = vmatprep.mubr.f32.mxu0 0.0
    %3156 = vmatmul.mubr.f32.gmra.mrb[0].mxu0 %v3016
    %v3157 = vpop.f32.mrb[0].mxu0
    %v3158 = vadd.f32 0.0, %v3157
    %v3159 = vpop.f32.mrb[0].mxu0
    %3160 = vdwg.mxu0
    %v3161 = vadd.f32 %v3017, %v3087
    %v3162 = vadd.f32 %v3018, %v3089
    %v3163 = vxor.u32 %v3161, 2147483648
    %v3164 = vxor.u32 %v3162, 2147483648
    %v3165 = vmul.f32 %v3163, 1.442695
    %v3166 = vpow.pop %v3165
    %v3167 = vmul.f32 %v3164, 1.442695
    %v3168 = vpow.pop %v3167
    %v3169 = vadd.f32 %v3166, 1.0
    %v3170 = vadd.f32 %v3168, 1.0
    %v3171 = vrcp.pop %v3169
    %v3172 = vmul.f32 1.0, %v3171
    %v3173 = vrcp.pop %v3170
    %v3174 = vmul.f32 1.0, %v3173
    %v3175 = vadd.f32 %v3158, %v2351
    %v3176 = vmul.f32 %v3172, %v3175
    %v3177 = vadd.f32 %v3019, %v3176
    %v3178 = vtanh.pop %v3177
    %v3179 = vsub.f32 1.0, %v3174
    %v3180 = vmul.f32 %v3179, %v3178
    %v3181 = vmul.f32 %v3174, %v3016
    %v3182 = vadd.f32 %v3180, %v3181
    %v3183 = vadd.f32 %v1911, %v2159
    %v3184 = vadd.f32 %v1913, %v2161
    %v3185 = vadd.f32 %v2019, %v2270
    %3186 = vmatprep.subr.mxu0 %v2299
    %3187 = vmatpush1.msra.mxu0 %v2298
    %3188 = vmatprep.subr.mxu0 %v2302
    %3189 = vmatpush1.msra.mxu0 %v2301
    %3190 = vmatprep.subr.mxu0 %v2305
    %3191 = vmatpush1.msra.mxu0 %v2304
    %3192 = vmatprep.subr.mxu0 %v2308
    %3193 = vmatpush1.msra.mxu0 %v2307
    %3194 = vmatprep.subr.mxu0 %v2311
    %3195 = vmatpush1.msra.mxu0 %v2310
    %3196 = vmatprep.subr.mxu0 %v2314
    %3197 = vmatpush1.msra.mxu0 %v2313
    %3198 = vmatprep.subr.mxu0 %v2317
    %3199 = vmatpush1.msra.mxu0 %v2316
    %3200 = vmatprep.subr.mxu0 %v2320
    %3201 = vmatpush1.msra.mxu0 %v2319
    %3202 = vmatprep.subr.mxu0 %v2323
    %3203 = vmatpush1.msra.mxu0 %v2322
    %3204 = vmatprep.subr.mxu0 %v2326
    %3205 = vmatpush1.msra.mxu0 %v2325
    %3206 = vmatprep.subr.mxu0 %v2329
    %3207 = vmatpush1.msra.mxu0 %v2328
    %3208 = vmatprep.subr.mxu0 %v2332
    %3209 = vmatpush1.msra.mxu0 %v2331
    %3210 = vmatprep.subr.mxu0 %v2335
    %3211 = vmatpush1.msra.mxu0 %v2334
    %3212 = vmatprep.subr.mxu0 %v2338
    %3213 = vmatpush1.msra.mxu0 %v2337
    %3214 = vmatprep.subr.mxu0 %v2341
    %3215 = vmatpush1.msra.mxu0 %v2340
    %3216 = vmatprep.subr.mxu0 %v2344
    %3217 = vmatpush1.msra.mxu0 %v2343
    %3218 = vmatprep.subr.mxu0 0.0
    %3219 = vmatpush1.msra.mxu0 0.0
    %3220 = vmatprep.subr.mxu0 0.0
    %3221 = vmatpush1.msra.mxu0 0.0
    %3222 = vmatprep.subr.mxu0 0.0
    %3223 = vmatpush1.msra.mxu0 0.0
    %3224 = vmatprep.subr.mxu0 0.0
    %3225 = vmatpush1.msra.mxu0 0.0
    %3226 = vmatprep.subr.mxu0 0.0
    %3227 = vmatpush1.msra.mxu0 0.0
    %3228 = vmatprep.subr.mxu0 0.0
    %3229 = vmatpush1.msra.mxu0 0.0
    %3230 = vmatprep.subr.mxu0 0.0
    %3231 = vmatpush1.msra.mxu0 0.0
    %3232 = vmatprep.subr.mxu0 0.0
    %3233 = vmatpush1.msra.mxu0 0.0
    %3234 = vmatprep.subr.mxu0 0.0
    %3235 = vmatpush1.msra.mxu0 0.0
    %3236 = vmatprep.subr.mxu0 0.0
    %3237 = vmatpush1.msra.mxu0 0.0
    %3238 = vmatprep.subr.mxu0 0.0
    %3239 = vmatpush1.msra.mxu0 0.0
    %3240 = vmatprep.subr.mxu0 0.0
    %3241 = vmatpush1.msra.mxu0 0.0
    %3242 = vmatprep.subr.mxu0 0.0
    %3243 = vmatpush1.msra.mxu0 0.0
    %3244 = vmatprep.subr.mxu0 0.0
    %3245 = vmatpush1.msra.mxu0 0.0
    %3246 = vmatprep.subr.mxu0 0.0
    %3247 = vmatpush1.msra.mxu0 0.0
    %3248 = vmatprep.subr.mxu0 0.0
    %3249 = vmatpush1.msra.mxu0 0.0
    %3250 = vmatprep.mubr.f32.mxu0 0.0
    %3251 = vmatmul.mubr.f32.gmra.mrb[0].mxu0 %v3182
    %v3252 = vpop.f32.mrb[0].mxu0
    %v3253 = vadd.f32 0.0, %v3252
    %v3254 = vpop.f32.mrb[0].mxu0
    %v3255 = vadd.f32 0.0, %v3254
    %3256 = vdwg.mxu0
    %3257 = vmatprep.subr.mxu0 0.0
    %3258 = vmatpush1.msra.mxu0 %v2300
    %3259 = vmatprep.subr.mxu0 0.0
    %3260 = vmatpush1.msra.mxu0 %v2303
    %3261 = vmatprep.subr.mxu0 0.0
    %3262 = vmatpush1.msra.mxu0 %v2306
    %3263 = vmatprep.subr.mxu0 0.0
    %3264 = vmatpush1.msra.mxu0 %v2309
    %3265 = vmatprep.subr.mxu0 0.0
    %3266 = vmatpush1.msra.mxu0 %v2312
    %3267 = vmatprep.subr.mxu0 0.0
    %3268 = vmatpush1.msra.mxu0 %v2315
    %3269 = vmatprep.subr.mxu0 0.0
    %3270 = vmatpush1.msra.mxu0 %v2318
    %3271 = vmatprep.subr.mxu0 0.0
    %3272 = vmatpush1.msra.mxu0 %v2321
    %3273 = vmatprep.subr.mxu0 0.0
    %3274 = vmatpush1.msra.mxu0 %v2324
    %3275 = vmatprep.subr.mxu0 0.0
    %3276 = vmatpush1.msra.mxu0 %v2327
    %3277 = vmatprep.subr.mxu0 0.0
    %3278 = vmatpush1.msra.mxu0 %v2330
    %3279 = vmatprep.subr.mxu0 0.0
    %3280 = vmatpush1.msra.mxu0 %v2333
    %3281 = vmatprep.subr.mxu0 0.0
    %3282 = vmatpush1.msra.mxu0 %v2336
    %3283 = vmatprep.subr.mxu0 0.0
    %3284 = vmatpush1.msra.mxu0 %v2339
    %3285 = vmatprep.subr.mxu0 0.0
    %3286 = vmatpush1.msra.mxu0 %v2342
    %3287 = vmatprep.subr.mxu0 0.0
    %3288 = vmatpush1.msra.mxu0 %v2345
    %3289 = vmatprep.subr.mxu0 0.0
    %3290 = vmatpush1.msra.mxu0 0.0
    %3291 = vmatprep.subr.mxu0 0.0
    %3292 = vmatpush1.msra.mxu0 0.0
    %3293 = vmatprep.subr.mxu0 0.0
    %3294 = vmatpush1.msra.mxu0 0.0
    %3295 = vmatprep.subr.mxu0 0.0
    %3296 = vmatpush1.msra.mxu0 0.0
    %3297 = vmatprep.subr.mxu0 0.0
    %3298 = vmatpush1.msra.mxu0 0.0
    %3299 = vmatprep.subr.mxu0 0.0
    %3300 = vmatpush1.msra.mxu0 0.0
    %3301 = vmatprep.subr.mxu0 0.0
    %3302 = vmatpush1.msra.mxu0 0.0
    %3303 = vmatprep.subr.mxu0 0.0
    %3304 = vmatpush1.msra.mxu0 0.0
    %3305 = vmatprep.subr.mxu0 0.0
    %3306 = vmatpush1.msra.mxu0 0.0
    %3307 = vmatprep.subr.mxu0 0.0
    %3308 = vmatpush1.msra.mxu0 0.0
    %3309 = vmatprep.subr.mxu0 0.0
    %3310 = vmatpush1.msra.mxu0 0.0
    %3311 = vmatprep.subr.mxu0 0.0
    %3312 = vmatpush1.msra.mxu0 0.0
    %3313 = vmatprep.subr.mxu0 0.0
    %3314 = vmatpush1.msra.mxu0 0.0
    %3315 = vmatprep.subr.mxu0 0.0
    %3316 = vmatpush1.msra.mxu0 0.0
    %3317 = vmatprep.subr.mxu0 0.0
    %3318 = vmatpush1.msra.mxu0 0.0
    %3319 = vmatprep.subr.mxu0 0.0
    %3320 = vmatpush1.msra.mxu0 0.0
    %3321 = vmatprep.mubr.f32.mxu0 0.0
    %3322 = vmatmul.mubr.f32.gmra.mrb[0].mxu0 %v3182
    %v3323 = vpop.f32.mrb[0].mxu0
    %v3324 = vadd.f32 0.0, %v3323
    %v3325 = vpop.f32.mrb[0].mxu0
    %3326 = vdwg.mxu0
    %v3327 = vadd.f32 %v3183, %v3253
    %v3328 = vadd.f32 %v3184, %v3255
    %v3329 = vxor.u32 %v3327, 2147483648
    %v3330 = vxor.u32 %v3328, 2147483648
    %v3331 = vmul.f32 %v3329, 1.442695
    %v3332 = vpow.pop %v3331
    %v3333 = vmul.f32 %v3330, 1.442695
    %v3334 = vpow.pop %v3333
    %v3335 = vadd.f32 %v3332, 1.0
    %v3336 = vadd.f32 %v3334, 1.0
    %v3337 = vrcp.pop %v3335
    %v3338 = vmul.f32 1.0, %v3337
    %v3339 = vrcp.pop %v3336
    %v3340 = vmul.f32 1.0, %v3339
    %v3341 = vadd.f32 %v3324, %v2351
    %v3342 = vmul.f32 %v3338, %v3341
    %v3343 = vadd.f32 %v3185, %v3342
    %v3344 = vtanh.pop %v3343
    %v3345 = vsub.f32 1.0, %v3340
    %v3346 = vmul.f32 %v3345, %v3344
    %v3347 = vmul.f32 %v3340, %v3182
    %v3348 = vadd.f32 %v3346, %v3347
    %v3349 = vadd.f32 %v1917, %v2153
    %v3350 = vadd.f32 %v1919, %v2155
    %v3351 = vadd.f32 %v2024, %v2265
    %3352 = vmatprep.subr.mxu0 %v2299
    %3353 = vmatpush1.msra.mxu0 %v2298
    %3354 = vmatprep.subr.mxu0 %v2302
    %3355 = vmatpush1.msra.mxu0 %v2301
    %3356 = vmatprep.subr.mxu0 %v2305
    %3357 = vmatpush1.msra.mxu0 %v2304
    %3358 = vmatprep.subr.mxu0 %v2308
    %3359 = vmatpush1.msra.mxu0 %v2307
    %3360 = vmatprep.subr.mxu0 %v2311
    %3361 = vmatpush1.msra.mxu0 %v2310
    %3362 = vmatprep.subr.mxu0 %v2314
    %3363 = vmatpush1.msra.mxu0 %v2313
    %3364 = vmatprep.subr.mxu0 %v2317
    %3365 = vmatpush1.msra.mxu0 %v2316
    %3366 = vmatprep.subr.mxu0 %v2320
    %3367 = vmatpush1.msra.mxu0 %v2319
    %3368 = vmatprep.subr.mxu0 %v2323
    %3369 = vmatpush1.msra.mxu0 %v2322
    %3370 = vmatprep.subr.mxu0 %v2326
    %3371 = vmatpush1.msra.mxu0 %v2325
    %3372 = vmatprep.subr.mxu0 %v2329
    %3373 = vmatpush1.msra.mxu0 %v2328
    %3374 = vmatprep.subr.mxu0 %v2332
    %3375 = vmatpush1.msra.mxu0 %v2331
    %3376 = vmatprep.subr.mxu0 %v2335
    %3377 = vmatpush1.msra.mxu0 %v2334
    %3378 = vmatprep.subr.mxu0 %v2338
    %3379 = vmatpush1.msra.mxu0 %v2337
    %3380 = vmatprep.subr.mxu0 %v2341
    %3381 = vmatpush1.msra.mxu0 %v2340
    %3382 = vmatprep.subr.mxu0 %v2344
    %3383 = vmatpush1.msra.mxu0 %v2343
    %3384 = vmatprep.subr.mxu0 0.0
    %3385 = vmatpush1.msra.mxu0 0.0
    %3386 = vmatprep.subr.mxu0 0.0
    %3387 = vmatpush1.msra.mxu0 0.0
    %3388 = vmatprep.subr.mxu0 0.0
    %3389 = vmatpush1.msra.mxu0 0.0
    %3390 = vmatprep.subr.mxu0 0.0
    %3391 = vmatpush1.msra.mxu0 0.0
    %3392 = vmatprep.subr.mxu0 0.0
    %3393 = vmatpush1.msra.mxu0 0.0
    %3394 = vmatprep.subr.mxu0 0.0
    %3395 = vmatpush1.msra.mxu0 0.0
    %3396 = vmatprep.subr.mxu0 0.0
    %3397 = vmatpush1.msra.mxu0 0.0
    %3398 = vmatprep.subr.mxu0 0.0
    %3399 = vmatpush1.msra.mxu0 0.0
    %3400 = vmatprep.subr.mxu0 0.0
    %3401 = vmatpush1.msra.mxu0 0.0
    %3402 = vmatprep.subr.mxu0 0.0
    %3403 = vmatpush1.msra.mxu0 0.0
    %3404 = vmatprep.subr.mxu0 0.0
    %3405 = vmatpush1.msra.mxu0 0.0
    %3406 = vmatprep.subr.mxu0 0.0
    %3407 = vmatpush1.msra.mxu0 0.0
    %3408 = vmatprep.subr.mxu0 0.0
    %3409 = vmatpush1.msra.mxu0 0.0
    %3410 = vmatprep.subr.mxu0 0.0
    %3411 = vmatpush1.msra.mxu0 0.0
    %3412 = vmatprep.subr.mxu0 0.0
    %3413 = vmatpush1.msra.mxu0 0.0
    %3414 = vmatprep.subr.mxu0 0.0
    %3415 = vmatpush1.msra.mxu0 0.0
    %3416 = vmatprep.mubr.f32.mxu0 0.0
    %3417 = vmatmul.mubr.f32.gmra.mrb[0].mxu0 %v3348
    %v3418 = vpop.f32.mrb[0].mxu0
    %v3419 = vadd.f32 0.0, %v3418
    %v3420 = vpop.f32.mrb[0].mxu0
    %v3421 = vadd.f32 0.0, %v3420
    %3422 = vdwg.mxu0
    %3423 = vmatprep.subr.mxu0 0.0
    %3424 = vmatpush1.msra.mxu0 %v2300
    %3425 = vmatprep.subr.mxu0 0.0
    %3426 = vmatpush1.msra.mxu0 %v2303
    %3427 = vmatprep.subr.mxu0 0.0
    %3428 = vmatpush1.msra.mxu0 %v2306
    %3429 = vmatprep.subr.mxu0 0.0
    %3430 = vmatpush1.msra.mxu0 %v2309
    %3431 = vmatprep.subr.mxu0 0.0
    %3432 = vmatpush1.msra.mxu0 %v2312
    %3433 = vmatprep.subr.mxu0 0.0
    %3434 = vmatpush1.msra.mxu0 %v2315
    %3435 = vmatprep.subr.mxu0 0.0
    %3436 = vmatpush1.msra.mxu0 %v2318
    %3437 = vmatprep.subr.mxu0 0.0
    %3438 = vmatpush1.msra.mxu0 %v2321
    %3439 = vmatprep.subr.mxu0 0.0
    %3440 = vmatpush1.msra.mxu0 %v2324
    %3441 = vmatprep.subr.mxu0 0.0
    %3442 = vmatpush1.msra.mxu0 %v2327
    %3443 = vmatprep.subr.mxu0 0.0
    %3444 = vmatpush1.msra.mxu0 %v2330
    %3445 = vmatprep.subr.mxu0 0.0
    %3446 = vmatpush1.msra.mxu0 %v2333
    %3447 = vmatprep.subr.mxu0 0.0
    %3448 = vmatpush1.msra.mxu0 %v2336
    %3449 = vmatprep.subr.mxu0 0.0
    %3450 = vmatpush1.msra.mxu0 %v2339
    %3451 = vmatprep.subr.mxu0 0.0
    %3452 = vmatpush1.msra.mxu0 %v2342
    %3453 = vmatprep.subr.mxu0 0.0
    %3454 = vmatpush1.msra.mxu0 %v2345
    %3455 = vmatprep.subr.mxu0 0.0
    %3456 = vmatpush1.msra.mxu0 0.0
    %3457 = vmatprep.subr.mxu0 0.0
    %3458 = vmatpush1.msra.mxu0 0.0
    %3459 = vmatprep.subr.mxu0 0.0
    %3460 = vmatpush1.msra.mxu0 0.0
    %3461 = vmatprep.subr.mxu0 0.0
    %3462 = vmatpush1.msra.mxu0 0.0
    %3463 = vmatprep.subr.mxu0 0.0
    %3464 = vmatpush1.msra.mxu0 0.0
    %3465 = vmatprep.subr.mxu0 0.0
    %3466 = vmatpush1.msra.mxu0 0.0
    %3467 = vmatprep.subr.mxu0 0.0
    %3468 = vmatpush1.msra.mxu0 0.0
    %3469 = vmatprep.subr.mxu0 0.0
    %3470 = vmatpush1.msra.mxu0 0.0
    %3471 = vmatprep.subr.mxu0 0.0
    %3472 = vmatpush1.msra.mxu0 0.0
    %3473 = vmatprep.subr.mxu0 0.0
    %3474 = vmatpush1.msra.mxu0 0.0
    %3475 = vmatprep.subr.mxu0 0.0
    %3476 = vmatpush1.msra.mxu0 0.0
    %3477 = vmatprep.subr.mxu0 0.0
    %3478 = vmatpush1.msra.mxu0 0.0
    %3479 = vmatprep.subr.mxu0 0.0
    %3480 = vmatpush1.msra.mxu0 0.0
    %3481 = vmatprep.subr.mxu0 0.0
    %3482 = vmatpush1.msra.mxu0 0.0
    %3483 = vmatprep.subr.mxu0 0.0
    %3484 = vmatpush1.msra.mxu0 0.0
    %3485 = vmatprep.subr.mxu0 0.0
    %3486 = vmatpush1.msra.mxu0 0.0
    %3487 = vmatprep.mubr.f32.mxu0 0.0
    %3488 = vmatmul.mubr.f32.gmra.mrb[0].mxu0 %v3348
    %v3489 = vpop.f32.mrb[0].mxu0
    %v3490 = vadd.f32 0.0, %v3489
    %v3491 = vpop.f32.mrb[0].mxu0
    %3492 = vdwg.mxu0
    %v3493 = vadd.f32 %v3349, %v3419
    %v3494 = vadd.f32 %v3350, %v3421
    %v3495 = vxor.u32 %v3493, 2147483648
    %v3496 = vxor.u32 %v3494, 2147483648
    %v3497 = vmul.f32 %v3495, 1.442695
    %v3498 = vpow.pop %v3497
    %v3499 = vmul.f32 %v3496, 1.442695
    %v3500 = vpow.pop %v3499
    %v3501 = vadd.f32 %v3498, 1.0
    %v3502 = vadd.f32 %v3500, 1.0
    %v3503 = vrcp.pop %v3501
    %v3504 = vmul.f32 1.0, %v3503
    %v3505 = vrcp.pop %v3502
    %v3506 = vmul.f32 1.0, %v3505
    %v3507 = vadd.f32 %v3490, %v2351
    %v3508 = vmul.f32 %v3504, %v3507
    %v3509 = vadd.f32 %v3351, %v3508
    %v3510 = vtanh.pop %v3509
    %v3511 = vsub.f32 1.0, %v3506
    %v3512 = vmul.f32 %v3511, %v3510
    %v3513 = vmul.f32 %v3506, %v3348
    %v3514 = vadd.f32 %v3512, %v3513
    %v3515 = vadd.f32 %v1923, %v2147
    %v3516 = vadd.f32 %v1925, %v2149
    %v3517 = vadd.f32 %v2029, %v2260
    %3518 = vmatprep.subr.mxu0 %v2299
    %3519 = vmatpush1.msra.mxu0 %v2298
    %3520 = vmatprep.subr.mxu0 %v2302
    %3521 = vmatpush1.msra.mxu0 %v2301
    %3522 = vmatprep.subr.mxu0 %v2305
    %3523 = vmatpush1.msra.mxu0 %v2304
    %3524 = vmatprep.subr.mxu0 %v2308
    %3525 = vmatpush1.msra.mxu0 %v2307
    %3526 = vmatprep.subr.mxu0 %v2311
    %3527 = vmatpush1.msra.mxu0 %v2310
    %3528 = vmatprep.subr.mxu0 %v2314
    %3529 = vmatpush1.msra.mxu0 %v2313
    %3530 = vmatprep.subr.mxu0 %v2317
    %3531 = vmatpush1.msra.mxu0 %v2316
    %3532 = vmatprep.subr.mxu0 %v2320
    %3533 = vmatpush1.msra.mxu0 %v2319
    %3534 = vmatprep.subr.mxu0 %v2323
    %3535 = vmatpush1.msra.mxu0 %v2322
    %3536 = vmatprep.subr.mxu0 %v2326
    %3537 = vmatpush1.msra.mxu0 %v2325
    %3538 = vmatprep.subr.mxu0 %v2329
    %3539 = vmatpush1.msra.mxu0 %v2328
    %3540 = vmatprep.subr.mxu0 %v2332
    %3541 = vmatpush1.msra.mxu0 %v2331
    %3542 = vmatprep.subr.mxu0 %v2335
    %3543 = vmatpush1.msra.mxu0 %v2334
    %3544 = vmatprep.subr.mxu0 %v2338
    %3545 = vmatpush1.msra.mxu0 %v2337
    %3546 = vmatprep.subr.mxu0 %v2341
    %3547 = vmatpush1.msra.mxu0 %v2340
    %3548 = vmatprep.subr.mxu0 %v2344
    %3549 = vmatpush1.msra.mxu0 %v2343
    %3550 = vmatprep.subr.mxu0 0.0
    %3551 = vmatpush1.msra.mxu0 0.0
    %3552 = vmatprep.subr.mxu0 0.0
    %3553 = vmatpush1.msra.mxu0 0.0
    %3554 = vmatprep.subr.mxu0 0.0
    %3555 = vmatpush1.msra.mxu0 0.0
    %3556 = vmatprep.subr.mxu0 0.0
    %3557 = vmatpush1.msra.mxu0 0.0
    %3558 = vmatprep.subr.mxu0 0.0
    %3559 = vmatpush1.msra.mxu0 0.0
    %3560 = vmatprep.subr.mxu0 0.0
    %3561 = vmatpush1.msra.mxu0 0.0
    %3562 = vmatprep.subr.mxu0 0.0
    %3563 = vmatpush1.msra.mxu0 0.0
    %3564 = vmatprep.subr.mxu0 0.0
    %3565 = vmatpush1.msra.mxu0 0.0
    %3566 = vmatprep.subr.mxu0 0.0
    %3567 = vmatpush1.msra.mxu0 0.0
    %3568 = vmatprep.subr.mxu0 0.0
    %3569 = vmatpush1.msra.mxu0 0.0
    %3570 = vmatprep.subr.mxu0 0.0
    %3571 = vmatpush1.msra.mxu0 0.0
    %3572 = vmatprep.subr.mxu0 0.0
    %3573 = vmatpush1.msra.mxu0 0.0
    %3574 = vmatprep.subr.mxu0 0.0
    %3575 = vmatpush1.msra.mxu0 0.0
    %3576 = vmatprep.subr.mxu0 0.0
    %3577 = vmatpush1.msra.mxu0 0.0
    %3578 = vmatprep.subr.mxu0 0.0
    %3579 = vmatpush1.msra.mxu0 0.0
    %3580 = vmatprep.subr.mxu0 0.0
    %3581 = vmatpush1.msra.mxu0 0.0
    %3582 = vmatprep.mubr.f32.mxu0 0.0
    %3583 = vmatmul.mubr.f32.gmra.mrb[0].mxu0 %v3514
    %v3584 = vpop.f32.mrb[0].mxu0
    %v3585 = vadd.f32 0.0, %v3584
    %v3586 = vpop.f32.mrb[0].mxu0
    %v3587 = vadd.f32 0.0, %v3586
    %3588 = vdwg.mxu0
    %3589 = vmatprep.subr.mxu0 0.0
    %3590 = vmatpush1.msra.mxu0 %v2300
    %3591 = vmatprep.subr.mxu0 0.0
    %3592 = vmatpush1.msra.mxu0 %v2303
    %3593 = vmatprep.subr.mxu0 0.0
    %3594 = vmatpush1.msra.mxu0 %v2306
    %3595 = vmatprep.subr.mxu0 0.0
    %3596 = vmatpush1.msra.mxu0 %v2309
    %3597 = vmatprep.subr.mxu0 0.0
    %3598 = vmatpush1.msra.mxu0 %v2312
    %3599 = vmatprep.subr.mxu0 0.0
    %3600 = vmatpush1.msra.mxu0 %v2315
    %3601 = vmatprep.subr.mxu0 0.0
    %3602 = vmatpush1.msra.mxu0 %v2318
    %3603 = vmatprep.subr.mxu0 0.0
    %3604 = vmatpush1.msra.mxu0 %v2321
    %3605 = vmatprep.subr.mxu0 0.0
    %3606 = vmatpush1.msra.mxu0 %v2324
    %3607 = vmatprep.subr.mxu0 0.0
    %3608 = vmatpush1.msra.mxu0 %v2327
    %3609 = vmatprep.subr.mxu0 0.0
    %3610 = vmatpush1.msra.mxu0 %v2330
    %3611 = vmatprep.subr.mxu0 0.0
    %3612 = vmatpush1.msra.mxu0 %v2333
    %3613 = vmatprep.subr.mxu0 0.0
    %3614 = vmatpush1.msra.mxu0 %v2336
    %3615 = vmatprep.subr.mxu0 0.0
    %3616 = vmatpush1.msra.mxu0 %v2339
    %3617 = vmatprep.subr.mxu0 0.0
    %3618 = vmatpush1.msra.mxu0 %v2342
    %3619 = vmatprep.subr.mxu0 0.0
    %3620 = vmatpush1.msra.mxu0 %v2345
    %3621 = vmatprep.subr.mxu0 0.0
    %3622 = vmatpush1.msra.mxu0 0.0
    %3623 = vmatprep.subr.mxu0 0.0
    %3624 = vmatpush1.msra.mxu0 0.0
    %3625 = vmatprep.subr.mxu0 0.0
    %3626 = vmatpush1.msra.mxu0 0.0
    %3627 = vmatprep.subr.mxu0 0.0
    %3628 = vmatpush1.msra.mxu0 0.0
    %3629 = vmatprep.subr.mxu0 0.0
    %3630 = vmatpush1.msra.mxu0 0.0
    %3631 = vmatprep.subr.mxu0 0.0
    %3632 = vmatpush1.msra.mxu0 0.0
    %3633 = vmatprep.subr.mxu0 0.0
    %3634 = vmatpush1.msra.mxu0 0.0
    %3635 = vmatprep.subr.mxu0 0.0
    %3636 = vmatpush1.msra.mxu0 0.0
    %3637 = vmatprep.subr.mxu0 0.0
    %3638 = vmatpush1.msra.mxu0 0.0
    %3639 = vmatprep.subr.mxu0 0.0
    %3640 = vmatpush1.msra.mxu0 0.0
    %3641 = vmatprep.subr.mxu0 0.0
    %3642 = vmatpush1.msra.mxu0 0.0
    %3643 = vmatprep.subr.mxu0 0.0
    %3644 = vmatpush1.msra.mxu0 0.0
    %3645 = vmatprep.subr.mxu0 0.0
    %3646 = vmatpush1.msra.mxu0 0.0
    %3647 = vmatprep.subr.mxu0 0.0
    %3648 = vmatpush1.msra.mxu0 0.0
    %3649 = vmatprep.subr.mxu0 0.0
    %3650 = vmatpush1.msra.mxu0 0.0
    %3651 = vmatprep.subr.mxu0 0.0
    %3652 = vmatpush1.msra.mxu0 0.0
    %3653 = vmatprep.mubr.f32.mxu0 0.0
    %3654 = vmatmul.mubr.f32.gmra.mrb[0].mxu0 %v3514
    %v3655 = vpop.f32.mrb[0].mxu0
    %v3656 = vadd.f32 0.0, %v3655
    %v3657 = vpop.f32.mrb[0].mxu0
    %3658 = vdwg.mxu0
    %v3659 = vadd.f32 %v3515, %v3585
    %v3660 = vadd.f32 %v3516, %v3587
    %v3661 = vxor.u32 %v3659, 2147483648
    %v3662 = vxor.u32 %v3660, 2147483648
    %v3663 = vmul.f32 %v3661, 1.442695
    %v3664 = vpow.pop %v3663
    %v3665 = vmul.f32 %v3662, 1.442695
    %v3666 = vpow.pop %v3665
    %v3667 = vadd.f32 %v3664, 1.0
    %v3668 = vadd.f32 %v3666, 1.0
    %v3669 = vrcp.pop %v3667
    %v3670 = vmul.f32 1.0, %v3669
    %v3671 = vrcp.pop %v3668
    %v3672 = vmul.f32 1.0, %v3671
    %v3673 = vadd.f32 %v3656, %v2351
    %v3674 = vmul.f32 %v3670, %v3673
    %v3675 = vadd.f32 %v3517, %v3674
    %v3676 = vtanh.pop %v3675
    %v3677 = vsub.f32 1.0, %v3672
    %v3678 = vmul.f32 %v3677, %v3676
    %v3679 = vmul.f32 %v3672, %v3514
    %v3680 = vadd.f32 %v3678, %v3679
    %v3681 = vld [vmem:[%s10] sm:$0xff]
    %v3682 = vld [vmem:[%s10 + $0x8] sm:$0xff]
    %v3683 = vld [vmem:[%s10 + $0x10] sm:$0xff]
    %v3684 = vld [vmem:[%s10 + $0x18] sm:$0xff]
    %v3685 = vld [vmem:[%s10 + $0x20] sm:$0xff]
    %v3686 = vld [vmem:[%s10 + $0x28] sm:$0xff]
    %v3687 = vld [vmem:[%s10 + $0x30] sm:$0xff]
    %v3688 = vld [vmem:[%s10 + $0x38] sm:$0xff]
    %v3689 = vld [vmem:[%s10 + $0x40] sm:$0xff]
    %v3690 = vld [vmem:[%s10 + $0x48] sm:$0xff]
    %v3691 = vld [vmem:[%s10 + $0x50] sm:$0xff]
    %v3692 = vld [vmem:[%s10 + $0x58] sm:$0xff]
    %v3693 = vld [vmem:[%s10 + $0x60] sm:$0xff]
    %v3694 = vld [vmem:[%s10 + $0x68] sm:$0xff]
    %v3695 = vld [vmem:[%s10 + $0x70] sm:$0xff]
    %v3696 = vld [vmem:[%s10 + $0x78] sm:$0xff]
    %v3697 = vld [vmem:[%s11] sm:$0x1]
    %v3699 = vlaneseq
    %v3700 = vshrl.u32 %v3699, 7
    %v3701 = vsub.s32 0, %v3700
    %v3702 = vrot.slane %v3697, %v3701
    %3704 = vmatprep.subr.mxu0 0.0
    %3705 = vmatpush1.msra.mxu0 %v3681
    %3706 = vmatprep.subr.mxu0 0.0
    %3707 = vmatpush1.msra.mxu0 %v3682
    %3708 = vmatprep.subr.mxu0 0.0
    %3709 = vmatpush1.msra.mxu0 %v3683
    %3710 = vmatprep.subr.mxu0 0.0
    %3711 = vmatpush1.msra.mxu0 %v3684
    %3712 = vmatprep.subr.mxu0 0.0
    %3713 = vmatpush1.msra.mxu0 %v3685
    %3714 = vmatprep.subr.mxu0 0.0
    %3715 = vmatpush1.msra.mxu0 %v3686
    %3716 = vmatprep.subr.mxu0 0.0
    %3717 = vmatpush1.msra.mxu0 %v3687
    %3718 = vmatprep.subr.mxu0 0.0
    %3719 = vmatpush1.msra.mxu0 %v3688
    %3720 = vmatprep.subr.mxu0 0.0
    %3721 = vmatpush1.msra.mxu0 %v3689
    %3722 = vmatprep.subr.mxu0 0.0
    %3723 = vmatpush1.msra.mxu0 %v3690
    %3724 = vmatprep.subr.mxu0 0.0
    %3725 = vmatpush1.msra.mxu0 %v3691
    %3726 = vmatprep.subr.mxu0 0.0
    %3727 = vmatpush1.msra.mxu0 %v3692
    %3728 = vmatprep.subr.mxu0 0.0
    %3729 = vmatpush1.msra.mxu0 %v3693
    %3730 = vmatprep.subr.mxu0 0.0
    %3731 = vmatpush1.msra.mxu0 %v3694
    %3732 = vmatprep.subr.mxu0 0.0
    %3733 = vmatpush1.msra.mxu0 %v3695
    %3734 = vmatprep.subr.mxu0 0.0
    %3735 = vmatpush1.msra.mxu0 %v3696
    %3736 = vmatprep.subr.mxu0 0.0
    %3737 = vmatpush1.msra.mxu0 0.0
    %3738 = vmatprep.subr.mxu0 0.0
    %3739 = vmatpush1.msra.mxu0 0.0
    %3740 = vmatprep.subr.mxu0 0.0
    %3741 = vmatpush1.msra.mxu0 0.0
    %3742 = vmatprep.subr.mxu0 0.0
    %3743 = vmatpush1.msra.mxu0 0.0
    %3744 = vmatprep.subr.mxu0 0.0
    %3745 = vmatpush1.msra.mxu0 0.0
    %3746 = vmatprep.subr.mxu0 0.0
    %3747 = vmatpush1.msra.mxu0 0.0
    %3748 = vmatprep.subr.mxu0 0.0
    %3749 = vmatpush1.msra.mxu0 0.0
    %3750 = vmatprep.subr.mxu0 0.0
    %3751 = vmatpush1.msra.mxu0 0.0
    %3752 = vmatprep.subr.mxu0 0.0
    %3753 = vmatpush1.msra.mxu0 0.0
    %3754 = vmatprep.subr.mxu0 0.0
    %3755 = vmatpush1.msra.mxu0 0.0
    %3756 = vmatprep.subr.mxu0 0.0
    %3757 = vmatpush1.msra.mxu0 0.0
    %3758 = vmatprep.subr.mxu0 0.0
    %3759 = vmatpush1.msra.mxu0 0.0
    %3760 = vmatprep.subr.mxu0 0.0
    %3761 = vmatpush1.msra.mxu0 0.0
    %3762 = vmatprep.subr.mxu0 0.0
    %3763 = vmatpush1.msra.mxu0 0.0
    %3764 = vmatprep.subr.mxu0 0.0
    %3765 = vmatpush1.msra.mxu0 0.0
    %3766 = vmatprep.subr.mxu0 0.0
    %3767 = vmatpush1.msra.mxu0 0.0
    %3768 = vmatprep.mubr.f32.mxu0 0.0
    %3769 = vmatmul.mubr.f32.gmra.mrb[0].mxu0 %v3680
    %v3770 = vpop.f32.mrb[0].mxu0
    %v3771 = vadd.f32 %v3702, %v3770
    %v3772 = vpop.f32.mrb[0].mxu0
    %3773 = vdwg.mxu0
    %vm3774 = vcmask 15360
    %3775 = vst.msk [vmem:[%s12] sm:$0xff] %vm3774, %v3771
    // Predicated region
    $region66: #{tpu_custom_call.1} parent=1 // pred_check
      _
    $region67: #{tpu_custom_call.1} parent=1 // pred_check_branch
      %3777 = sbr.rel (0) target = $region69
    $region68: #{tpu_custom_call.1} parent=1 // pred_region
      _
    $region69: #{tpu_custom_call.1} parent=1 // pred_fallthru
      _
    // Predicated region
    $region70: #{tpu_custom_call.1} parent=1 // pred_check
      _
    $region71: #{tpu_custom_call.1} parent=1 // pred_check_branch
      %3779 = sbr.rel (0) target = $region73
    $region72: #{tpu_custom_call.1} parent=1 // pred_region
      _
    $region73: #{tpu_custom_call.1} parent=1 // pred_fallthru
      _
    %3780 = vsyncpa [#allocation4], 1
    %3781 = vsyncpa [#allocation6], 1
    %3782 = vsyncpa [#allocation9], 1

</llo_original>
